<compile_context>
chip_gen: v7x
topology: tpu7x:2x2x1
jax: 0.10.0
libtpu: 0.0.40
codegen_flags: <defaults>
</compile_context>

<pallas_src>
import functools

import jax
import jax.numpy as jnp
from jax.experimental import pallas as pl
from jax.experimental.pallas import tpu as pltpu

LANE = 128


def _round_up(v, m):
    return (v + m - 1) // m * m


def _pad_axis(a, axis, new_size):
    if a.shape[axis] == new_size:
        return a
    pad = [(0, 0)] * a.ndim
    pad[axis] = (0, new_size - a.shape[axis])
    return jnp.pad(a, pad)


# ------------------------------ Pallas kernel ------------------------------ #

def _vit_layer_kernel(patches_ref, pos_ref, pw_ref, pb_ref,
                      ln1g_ref, ln1b_ref, wqkv_ref, bqkv_ref, wo_ref, bo_ref,
                      ln2g_ref, ln2b_ref, w1_ref, b1_ref, w2_ref, b2_ref,
                      tok_ref, attn_ref, tok_acc,
                      *, num_heads, head_dim_p, embed_dim_real,
                      tokens_per_image, batch_per_chunk):
    """One grid step = one transformer layer applied to one batch chunk.

    grid = (num_chunks ["parallel"], num_layers ["arbitrary"]).  Per-layer weights stream
    through VMEM (double-buffered by Pallas); the residual token block stays in a f32 VMEM
    scratch across the layer axis; outputs are written only at the last layer (their blocks
    are VMEM-resident across that axis, so HBM writeback happens once).
    """
    l = pl.program_id(1)
    n_layers = pl.num_programs(1)

    N = tokens_per_image
    Bc = batch_per_chunk
    M = Bc * N
    dh = head_dim_p                       # per-head width, already padded to >= 128
    A_p = num_heads * dh                  # padded attention width
    E_p = pw_ref.shape[-1]                # padded residual width
    inv_e = 1.0 / float(embed_dim_real)   # LayerNorm stats use the REAL width

    def mm(a, b):
        # bf16 MXU matmul, f32 accumulation.
        return jax.lax.dot_general(
            a.astype(jnp.bfloat16), b.astype(jnp.bfloat16),
            (((1,), (0,)), ((), ())), preferred_element_type=jnp.float32)

    def bmm(a, b, ca, cb):
        # batch-over-leading-dim bf16 matmul, f32 accumulation.
        return jax.lax.dot_general(
            a.astype(jnp.bfloat16), b.astype(jnp.bfloat16),
            (((ca,), (cb,)), ((0,), (0,))), preferred_element_type=jnp.float32)

    def layernorm(x, g, b):
        # x has zeros in lane-padded columns -> sums over the padded width are exact;
        # E[x^2]-mu^2 form avoids masking; zero-padded gamma/beta keep padded cols at 0.
        s1 = jnp.sum(x, axis=-1, keepdims=True)
        s2 = jnp.sum(x * x, axis=-1, keepdims=True)
        mu = s1 * inv_e
        var = s2 * inv_e - mu * mu
        return (x - mu) * jax.lax.rsqrt(var + 1e-5) * g.astype(jnp.float32) \
            + b.astype(jnp.float32)

    # ----- layer 0: patch embedding + positional embedding -----
    @pl.when(l == 0)
    def _():
        emb = mm(patches_ref[...], pw_ref[...]) + pb_ref[...]                  # (M, E_p)
        emb = emb.reshape(Bc, N, E_p) + pos_ref[...].astype(jnp.float32)
        tok_acc[...] = emb.reshape(M, E_p)

    tok = tok_acc[...]                                                          # (M, E_p) f32

    # ----- multi-head self-attention (pre-LN); 1/sqrt(dh) folded into Q weights -----
    h = layernorm(tok, ln1g_ref[0], ln1b_ref[0])
    qkv = mm(h, wqkv_ref[0]) + bqkv_ref[0]                                      # (M, 3*A_p)
    qkv_b = qkv.reshape(Bc, N, 3 * A_p)
    wo_l = wo_ref[0]                                                            # (A_p, E_p)

    o_proj = None
    attn_keys = None
    for hd in range(num_heads):
        c0 = hd * dh                                  # 128-aligned slice -> no relayout
        qh = qkv_b[:, :, c0:c0 + dh]
        kh = qkv_b[:, :, A_p + c0:A_p + c0 + dh]
        vh = qkv_b[:, :, 2 * A_p + c0:2 * A_p + c0 + dh]
        s = bmm(qh, kh, 2, 2)                                                   # (Bc, N, N)
        m = jnp.max(s, axis=-1, keepdims=True)
        e = jnp.exp(s - m)
        # TODO(synk): approx reciprocal (EUP slot) has ~1e-3 rel err vs an exact divide.
        p = e * pl.reciprocal(jnp.sum(e, axis=-1, keepdims=True), approx=True)
        ctx = bmm(p, vh, 2, 1).reshape(M, dh)                                   # (M, dh)
        # Accumulate the output projection per head -> no lane concat of head outputs.
        contrib = mm(ctx, wo_l[c0:c0 + dh, :])                                  # (M, E_p)
        o_proj = contrib if o_proj is None else o_proj + contrib
        # Per-key attention mass; only consumed on the last layer (cheap O(N^2) adds).
        pk = jnp.sum(p, axis=1)                                                 # (Bc, N)
        attn_keys = pk if attn_keys is None else attn_keys + pk

    tok = tok + o_proj + bo_ref[0]

    # ----- MLP (pre-LN) -----
    h2 = layernorm(tok, ln2g_ref[0], ln2b_ref[0])
    h1 = mm(h2, w1_ref[0]) + b1_ref[0]                                          # (M, Hd_p)
    # TODO(synk): tanh-approx GELU; PyTorch nn.GELU default is the exact erf form.
    c = jnp.float32(0.7978845608028654)
    g = 0.5 * h1 * (1.0 + jnp.tanh(c * (h1 + 0.044715 * h1 * h1 * h1)))
    tok = tok + mm(g, w2_ref[0]) + b2_ref[0]

    tok_acc[...] = tok

    # ----- last layer: write outputs (lane-dense bf16 token block + reduced attn map) -----
    @pl.when(l == n_layers - 1)
    def _():
        tok_ref[...] = tok.astype(tok_ref.dtype)
        attn_ref[...] = ((attn_keys * (1.0 / (num_heads * N)))[:, None, :]
                         .astype(attn_ref.dtype))


# ------------------------------ Param handling ------------------------------ #

def init_params(key, C, H, W, ph, pw, E, L, num_heads):
    """Canonical (unpadded, f32) parameters, analogous to a PyTorch state dict."""
    assert E % num_heads == 0
    N = (H // ph) * (W // pw)
    Kp = C * ph * pw
    keys = jax.random.split(key, 6)

    def nrm(k, shape):
        return 0.02 * jax.random.normal(k, shape, dtype=jnp.float32)

    return {
        "patch_w": nrm(keys[0], (Kp, E)),        # rows = (C, ph, pw)-flattened patch
        "patch_b": jnp.zeros((1, E), jnp.float32),
        "pos": nrm(keys[1], (1, N, E)),
        "ln1_g": jnp.ones((L, 1, E), jnp.float32),
        "ln1_b": jnp.zeros((L, 1, E), jnp.float32),
        "wqkv": nrm(keys[2], (L, E, 3 * E)),
        "bqkv": jnp.zeros((L, 1, 3 * E), jnp.float32),
        "wo": nrm(keys[3], (L, E, E)),
        "bo": jnp.zeros((L, 1, E), jnp.float32),
        "ln2_g": jnp.ones((L, 1, E), jnp.float32),
        "ln2_b": jnp.zeros((L, 1, E), jnp.float32),
        "w1": nrm(keys[4], (L, E, 4 * E)),
        "b1": jnp.zeros((L, 1, 4 * E), jnp.float32),
        "w2": nrm(keys[5], (L, 4 * E, E)),
        "b2": jnp.zeros((L, 1, E), jnp.float32),
    }


def prepare_params(params, *, num_heads):
    """One-time prep: zero-pad all lane dims to multiples of 128 (per-head for QKV / WO so
    head slices are 128-aligned), cast MXU weights to bf16, and fold 1/sqrt(head_dim) into
    the Q projection.  Padding never changes results: padded weight rows/cols and biases
    are zero and LayerNorm uses the real width in-kernel."""
    Kp, E = params["patch_w"].shape
    L = params["wqkv"].shape[0]
    N = params["pos"].shape[1]
    dh = E // num_heads
    Hd = params["w1"].shape[2]

    dh_p = _round_up(dh, LANE)
    A_p = num_heads * dh_p
    E_p = _round_up(E, LANE)
    Hd_p = _round_up(Hd, LANE)
    Kp_p = _round_up(Kp, LANE)
    scale = 1.0 / float(dh) ** 0.5
    bf16 = jnp.bfloat16

    def pad_qkv_w(w, do_scale):            # (L, E, E) -> (L, E_p, A_p), per-head padded cols
        if do_scale:
            w = w * scale
        w = w.reshape(L, E, num_heads, dh)
        w = _pad_axis(w, 3, dh_p).reshape(L, E, A_p)
        return _pad_axis(w, 1, E_p)

    def pad_qkv_b(b, do_scale):            # (L, 1, E) -> (L, 1, A_p)
        if do_scale:
            b = b * scale
        b = b.reshape(L, 1, num_heads, dh)
        return _pad_axis(b, 3, dh_p).reshape(L, 1, A_p)

    q_w, k_w, v_w = jnp.split(params["wqkv"], 3, axis=2)
    q_b, k_b, v_b = jnp.split(params["bqkv"], 3, axis=2)
    wqkv = jnp.concatenate(
        [pad_qkv_w(q_w, True), pad_qkv_w(k_w, False), pad_qkv_w(v_w, False)], axis=2)
    bqkv = jnp.concatenate(
        [pad_qkv_b(q_b, True), pad_qkv_b(k_b, False), pad_qkv_b(v_b, False)], axis=2)

    wo = params["wo"].reshape(L, num_heads, dh, E)      # rows are per-head attention dims
    wo = _pad_axis(wo, 2, dh_p).reshape(L, A_p, E)
    wo = _pad_axis(wo, 2, E_p)

    def pad_last(a, n):
        return _pad_axis(a, a.ndim - 1, n)

    return {
        "patch_w": _pad_axis(pad_last(params["patch_w"], E_p), 0, Kp_p).astype(bf16),
        "patch_b": pad_last(params["patch_b"], E_p),
        "pos": pad_last(params["pos"].reshape(N, E), E_p),
        "ln1_g": pad_last(params["ln1_g"], E_p),
        "ln1_b": pad_last(params["ln1_b"], E_p),
        "wqkv": wqkv.astype(bf16),
        "bqkv": bqkv,
        "wo": wo.astype(bf16),
        "bo": pad_last(params["bo"], E_p),
        "ln2_g": pad_last(params["ln2_g"], E_p),
        "ln2_b": pad_last(params["ln2_b"], E_p),
        "w1": _pad_axis(pad_last(params["w1"], Hd_p), 1, E_p).astype(bf16),
        "b1": pad_last(params["b1"], Hd_p),
        "w2": _pad_axis(pad_last(params["w2"], E_p), 1, Hd_p).astype(bf16),
        "b2": pad_last(params["b2"], E_p),
    }


# ------------------------------ Pallas wrapper ------------------------------ #

def _const_spec(shape):
    n = len(shape)
    return pl.BlockSpec(tuple(shape), lambda c, l, n=n: (0,) * n)


def _layer_spec(shape):
    # (L, a, b) weights: stream one layer per step of the "arbitrary" grid axis.
    n = len(shape)
    return pl.BlockSpec((1,) + tuple(shape[1:]), lambda c, l, n=n: (l,) + (0,) * (n - 1))


def _chunk_spec(block_shape):
    n = len(block_shape)
    return pl.BlockSpec(tuple(block_shape), lambda c, l, n=n: (c,) + (0,) * (n - 1))


def _upsample(t, ph, pw):
    # Nearest-neighbour patch upsample via broadcast + reshape (no gather-like repeat).
    B, K, Hp, Wp = t.shape
    t = jnp.broadcast_to(t[:, :, :, None, :, None], (B, K, Hp, ph, Wp, pw))
    return t.reshape(B, K, Hp * ph, Wp * pw)


def vit_feature_extractor(x, prep, *, patch_height, patch_width, embed_dim,
                          num_heads, num_chunks=1):
    B, C, H, W = x.shape
    ph, pw = patch_height, patch_width
    Hp, Wp = H // ph, W // pw
    N = Hp * Wp
    Kp = C * ph * pw
    Kp_p, E_p = prep["patch_w"].shape
    A_p = prep["wo"].shape[1]
    L = prep["wqkv"].shape[0]
    assert B % num_chunks == 0            # num_chunks=2 keeps both v7x TensorCores busy
    Bc = B // num_chunks
    Mc = Bc * N

    # Patch extraction + zero-pad of the patch dim to a full lane (layout plumbing, XLA).
    patches = (x.reshape(B, C, Hp, ph, Wp, pw)
                 .transpose(0, 2, 4, 1, 3, 5)
                 .reshape(B * N, Kp))
    patches = _pad_axis(patches, 1, Kp_p).astype(jnp.float32)

    kern = functools.partial(
        _vit_layer_kernel,
        num_heads=num_heads,
        head_dim_p=A_p // num_heads,
        embed_dim_real=embed_dim,
        tokens_per_image=N,
        batch_per_chunk=Bc)

    layer_names = ("ln1_g", "ln1_b", "wqkv", "bqkv", "wo", "bo",
                   "ln2_g", "ln2_b", "w1", "b1", "w2", "b2")
    layer_args = tuple(prep[k] for k in layer_names)

    tok, attn_mean = pl.pallas_call(
        kern,
        out_shape=(jax.ShapeDtypeStruct((B * N, E_p), jnp.bfloat16),
                   jax.ShapeDtypeStruct((B, 1, N), jnp.float32)),
        grid=(num_chunks, L),
        in_specs=([_chunk_spec((Mc, Kp_p)),
                   _const_spec(prep["pos"].shape),
                   _const_spec(prep["patch_w"].shape),
                   _const_spec(prep["patch_b"].shape)]
                  + [_layer_spec(w.shape) for w in layer_args]),
        out_specs=(_chunk_spec((Mc, E_p)), _chunk_spec((Bc, 1, N))),
        scratch_shapes=[pltpu.VMEM((Mc, E_p), jnp.float32)],     # resident residual stream
        compiler_params=pltpu.CompilerParams(
            dimension_semantics=("parallel", "arbitrary"),
            vmem_limit_bytes=64 * 1024 * 1024),
    )(patches, prep["pos"], prep["patch_w"], prep["patch_b"], *layer_args)

    # Attention map (already reduced in-kernel) -> spatial, nearest-neighbour upsample.
    attn_map = _upsample(attn_mean.reshape(B, 1, Hp, Wp), ph, pw)           # (B, 1, H, W)

    # Scale input by the attention map — tiny mem-bound elementwise op, left to XLA so it
    # fuses with the surrounding upsample/concat (no extra kernel launch or HBM round trip).
    scaled = x * attn_map.astype(x.dtype)

    # Token features -> spatial map, upsample, concat (layout plumbing in XLA).
    feat = tok[:, :embed_dim].reshape(B, N, embed_dim).transpose(0, 2, 1)
    feat = feat.reshape(B, embed_dim, Hp, Wp)
    feat = _upsample(feat, ph, pw).astype(x.dtype)                          # (B, E, H, W)
    output = jnp.concatenate([scaled, feat], axis=1)                        # (B, C+E, H, W)
    return output, attn_map


# ---------------------------------- main ------------------------------------ #

if __name__ == "__main__":
    key = jax.random.PRNGKey(0)
    B, C, H, W = 2, 4, 16, 16
    ph = pw = 4
    E, L, heads = 32, 2, 2

    kx, kp = jax.random.split(key)
    x = jax.random.normal(kx, (B, C, H, W), dtype=jnp.float32)
    params = init_params(kp, C, H, W, ph, pw, E, L, heads)
    prep = prepare_params(params, num_heads=heads)    # one-time pad / bf16-cast / scale-fold

    fwd = jax.jit(functools.partial(
        vit_feature_extractor, patch_height=ph, patch_width=pw,
        embed_dim=E, num_heads=heads, num_chunks=1))
    output, attn_map = fwd(x, prep)
    jax.block_until_ready((output, attn_map))

    assert output.shape == (B, C + E, H, W), output.shape
    assert attn_map.shape == (B, 1, H, W), attn_map.shape
    assert bool(jnp.all(jnp.isfinite(output))) and bool(jnp.all(jnp.isfinite(attn_map)))
    print("KERNEL_OK")
</pallas_src>

<mosaic_0001>
module attributes {stable_mosaic.version = 11 : i64} {
  func.func @_vit_layer_kernel(%arg0: i32, %arg1: i32, %arg2: memref<32x128xf32, #tpu.memory_space<vmem>>, %arg3: memref<16x128xf32, #tpu.memory_space<vmem>>, %arg4: memref<128x128xbf16, #tpu.memory_space<vmem>>, %arg5: memref<1x128xf32, #tpu.memory_space<vmem>>, %arg6: memref<1x1x128xf32, #tpu.memory_space<vmem>>, %arg7: memref<1x1x128xf32, #tpu.memory_space<vmem>>, %arg8: memref<1x128x768xbf16, #tpu.memory_space<vmem>>, %arg9: memref<1x1x768xf32, #tpu.memory_space<vmem>>, %arg10: memref<1x256x128xbf16, #tpu.memory_space<vmem>>, %arg11: memref<1x1x128xf32, #tpu.memory_space<vmem>>, %arg12: memref<1x1x128xf32, #tpu.memory_space<vmem>>, %arg13: memref<1x1x128xf32, #tpu.memory_space<vmem>>, %arg14: memref<1x128x128xbf16, #tpu.memory_space<vmem>>, %arg15: memref<1x1x128xf32, #tpu.memory_space<vmem>>, %arg16: memref<1x128x128xbf16, #tpu.memory_space<vmem>>, %arg17: memref<1x1x128xf32, #tpu.memory_space<vmem>>, %arg18: memref<32x128xbf16, #tpu.memory_space<vmem>>, %arg19: memref<2x1x16xf32, #tpu.memory_space<vmem>>, %arg20: memref<32x128xf32, #tpu.memory_space<vmem>>) attributes {dimension_semantics = [#tpu.dimension_semantics<parallel>, #tpu.dimension_semantics<arbitrary>], iteration_bounds = array<i64: 1, 2>, scalar_prefetch = 0 : i64, scratch_operands = 1 : i64, tpu.core_type = #tpu.core_type<tc>, window_params = [{transform_indices = @transform_0, window_bounds = array<i64: 32, 128>}, {pipeline_mode = #tpu.pipeline_mode<synchronous>, transform_indices = @transform_1, window_bounds = array<i64: 16, 128>}, {pipeline_mode = #tpu.pipeline_mode<synchronous>, transform_indices = @transform_2, window_bounds = array<i64: 128, 128>}, {pipeline_mode = #tpu.pipeline_mode<synchronous>, transform_indices = @transform_3, window_bounds = array<i64: 1, 128>}, {transform_indices = @transform_4, window_bounds = array<i64: 1, 1, 128>}, {transform_indices = @transform_5, window_bounds = array<i64: 1, 1, 128>}, {transform_indices = @transform_6, window_bounds = array<i64: 1, 128, 768>}, {transform_indices = @transform_7, window_bounds = array<i64: 1, 1, 768>}, {transform_indices = @transform_8, window_bounds = array<i64: 1, 256, 128>}, {transform_indices = @transform_9, window_bounds = array<i64: 1, 1, 128>}, {transform_indices = @transform_10, window_bounds = array<i64: 1, 1, 128>}, {transform_indices = @transform_11, window_bounds = array<i64: 1, 1, 128>}, {transform_indices = @transform_12, window_bounds = array<i64: 1, 128, 128>}, {transform_indices = @transform_13, window_bounds = array<i64: 1, 1, 128>}, {transform_indices = @transform_14, window_bounds = array<i64: 1, 128, 128>}, {transform_indices = @transform_15, window_bounds = array<i64: 1, 1, 128>}, {transform_indices = @transform_16, window_bounds = array<i64: 32, 128>}, {transform_indices = @transform_17, window_bounds = array<i64: 2, 1, 16>}]} {
    %c0_i32 = arith.constant 0 : i32
    %0 = arith.cmpi eq, %arg1, %c0_i32 : i32
    %1 = arith.extui %0 : i1 to i32
    %c0_i32_0 = arith.constant 0 : i32
    %2 = arith.cmpi ne, %1, %c0_i32_0 : i32
    scf.if %2 {
      %c0_69 = arith.constant 0 : index
      %c0_70 = arith.constant 0 : index
      %156 = vector.load %arg2[%c0_69, %c0_70] : memref<32x128xf32, #tpu.memory_space<vmem>>, vector<32x128xf32>
      %c0_71 = arith.constant 0 : index
      %c0_72 = arith.constant 0 : index
      %157 = vector.load %arg4[%c0_71, %c0_72] : memref<128x128xbf16, #tpu.memory_space<vmem>>, vector<128x128xbf16>
      %158 = arith.truncf %156 : vector<32x128xf32> to vector<32x128xbf16>
      %cst_73 = arith.constant dense<0.000000e+00> : vector<32x128xf32>
      %159 = tpu.matmul %158, %157, %cst_73 {dimension_numbers = #tpu.dot_dimension_numbers<[1], [0], [0], [1], [0, 0, 1, 1], [], []>} : vector<32x128xbf16>, vector<128x128xbf16>, vector<32x128xf32> -> vector<32x128xf32>
      %c0_74 = arith.constant 0 : index
      %c0_75 = arith.constant 0 : index
      %160 = vector.load %arg5[%c0_74, %c0_75] : memref<1x128xf32, #tpu.memory_space<vmem>>, vector<1x128xf32>
      %161 = vector.broadcast %160 : vector<1x128xf32> to vector<32x128xf32>
      %162 = arith.addf %159, %161 : vector<32x128xf32>
      %163 = vector.shape_cast %162 : vector<32x128xf32> to vector<2x16x128xf32>
      %c0_76 = arith.constant 0 : index
      %c0_77 = arith.constant 0 : index
      %164 = vector.load %arg3[%c0_76, %c0_77] : memref<16x128xf32, #tpu.memory_space<vmem>>, vector<16x128xf32>
      %165 = vector.shape_cast %164 : vector<16x128xf32> to vector<1x16x128xf32>
      %166 = vector.broadcast %165 : vector<1x16x128xf32> to vector<2x16x128xf32>
      %167 = arith.addf %163, %166 : vector<2x16x128xf32>
      %168 = vector.shape_cast %167 : vector<2x16x128xf32> to vector<32x128xf32>
      %c0_78 = arith.constant 0 : index
      %c0_79 = arith.constant 0 : index
      %169 = vector.load %arg20[%c0_78, %c0_79] : memref<32x128xf32, #tpu.memory_space<vmem>>, vector<32x128xf32>
      tpu.vector_store %arg20[%c0_78, %c0_79], %168 {strides = array<i32>} : memref<32x128xf32, #tpu.memory_space<vmem>>, vector<32x128xf32>,
    } else {
    }
    %c0 = arith.constant 0 : index
    %c0_1 = arith.constant 0 : index
    %3 = vector.load %arg20[%c0, %c0_1] : memref<32x128xf32, #tpu.memory_space<vmem>>, vector<32x128xf32>
    %c0_2 = arith.constant 0 : index
    %c0_3 = arith.constant 0 : index
    %c0_4 = arith.constant 0 : index
    %4 = vector.load %arg6[%c0_2, %c0_3, %c0_4] : memref<1x1x128xf32, #tpu.memory_space<vmem>>, vector<1x1x128xf32>
    %5 = vector.shape_cast %4 : vector<1x1x128xf32> to vector<1x128xf32>
    %c0_5 = arith.constant 0 : index
    %c0_6 = arith.constant 0 : index
    %c0_7 = arith.constant 0 : index
    %6 = vector.load %arg7[%c0_5, %c0_6, %c0_7] : memref<1x1x128xf32, #tpu.memory_space<vmem>>, vector<1x1x128xf32>
    %7 = vector.shape_cast %6 : vector<1x1x128xf32> to vector<1x128xf32>
    %cst = arith.constant dense<0.000000e+00> : vector<32xf32>
    %8 = vector.multi_reduction <add>, %3, %cst [1] : vector<32x128xf32> to vector<32xf32>
    %9 = vector.shape_cast %8 : vector<32xf32> to vector<32x1xf32>
    %10 = arith.mulf %3, %3 : vector<32x128xf32>
    %cst_8 = arith.constant dense<0.000000e+00> : vector<32xf32>
    %11 = vector.multi_reduction <add>, %10, %cst_8 [1] : vector<32x128xf32> to vector<32xf32>
    %12 = vector.shape_cast %11 : vector<32xf32> to vector<32x1xf32>
    %cst_9 = arith.constant 3.125000e-02 : f32
    %13 = vector.broadcast %cst_9 : f32 to vector<32x1xf32>
    %14 = arith.mulf %9, %13 : vector<32x1xf32>
    %cst_10 = arith.constant 3.125000e-02 : f32
    %15 = vector.broadcast %cst_10 : f32 to vector<32x1xf32>
    %16 = arith.mulf %12, %15 : vector<32x1xf32>
    %17 = arith.mulf %14, %14 : vector<32x1xf32>
    %18 = arith.subf %16, %17 : vector<32x1xf32>
    %19 = vector.broadcast %14 : vector<32x1xf32> to vector<32x128xf32>
    %20 = arith.subf %3, %19 : vector<32x128xf32>
    %cst_11 = arith.constant 9.99999974E-6 : f32
    %21 = vector.broadcast %cst_11 : f32 to vector<32x1xf32>
    %22 = arith.addf %18, %21 : vector<32x1xf32>
    %23 = math.rsqrt %22 : vector<32x1xf32>
    %24 = vector.broadcast %23 : vector<32x1xf32> to vector<32x128xf32>
    %25 = arith.mulf %20, %24 : vector<32x128xf32>
    %26 = vector.broadcast %5 : vector<1x128xf32> to vector<32x128xf32>
    %27 = arith.mulf %25, %26 : vector<32x128xf32>
    %28 = vector.broadcast %7 : vector<1x128xf32> to vector<32x128xf32>
    %29 = arith.addf %27, %28 : vector<32x128xf32>
    %c0_12 = arith.constant 0 : index
    %c0_13 = arith.constant 0 : index
    %c0_14 = arith.constant 0 : index
    %30 = vector.load %arg8[%c0_12, %c0_13, %c0_14] : memref<1x128x768xbf16, #tpu.memory_space<vmem>>, vector<1x128x768xbf16>
    %31 = vector.shape_cast %30 : vector<1x128x768xbf16> to vector<128x768xbf16>
    %32 = arith.truncf %29 : vector<32x128xf32> to vector<32x128xbf16>
    %cst_15 = arith.constant dense<0.000000e+00> : vector<32x768xf32>
    %33 = tpu.matmul %32, %31, %cst_15 {dimension_numbers = #tpu.dot_dimension_numbers<[1], [0], [0], [1], [0, 0, 1, 1], [], []>} : vector<32x128xbf16>, vector<128x768xbf16>, vector<32x768xf32> -> vector<32x768xf32>
    %c0_16 = arith.constant 0 : index
    %c0_17 = arith.constant 0 : index
    %c0_18 = arith.constant 0 : index
    %34 = vector.load %arg9[%c0_16, %c0_17, %c0_18] : memref<1x1x768xf32, #tpu.memory_space<vmem>>, vector<1x1x768xf32>
    %35 = vector.shape_cast %34 : vector<1x1x768xf32> to vector<1x768xf32>
    %36 = vector.broadcast %35 : vector<1x768xf32> to vector<32x768xf32>
    %37 = arith.addf %33, %36 : vector<32x768xf32>
    %38 = vector.shape_cast %37 : vector<32x768xf32> to vector<2x16x768xf32>
    %c0_19 = arith.constant 0 : index
    %c0_20 = arith.constant 0 : index
    %c0_21 = arith.constant 0 : index
    %39 = vector.load %arg10[%c0_19, %c0_20, %c0_21] : memref<1x256x128xbf16, #tpu.memory_space<vmem>>, vector<1x256x128xbf16>
    %40 = vector.shape_cast %39 : vector<1x256x128xbf16> to vector<256x128xbf16>
    %41 = vector.extract_strided_slice %38 {offsets = [0, 0, 0], sizes = [2, 16, 128], strides = [1, 1, 1]} : vector<2x16x768xf32> to vector<2x16x128xf32>
    %42 = vector.extract_strided_slice %38 {offsets = [0, 0, 256], sizes = [2, 16, 128], strides = [1, 1, 1]} : vector<2x16x768xf32> to vector<2x16x128xf32>
    %43 = vector.extract_strided_slice %38 {offsets = [0, 0, 512], sizes = [2, 16, 128], strides = [1, 1, 1]} : vector<2x16x768xf32> to vector<2x16x128xf32>
    %44 = arith.truncf %41 : vector<2x16x128xf32> to vector<2x16x128xbf16>
    %45 = arith.truncf %42 : vector<2x16x128xf32> to vector<2x16x128xbf16>
    %cst_22 = arith.constant dense<0.000000e+00> : vector<2x16x16xf32>
    %46 = tpu.matmul %44, %45, %cst_22 {dimension_numbers = #tpu.dot_dimension_numbers<[2], [2], [1], [1], [0, 0, 0, 1, 1, 1], [0], [0]>} : vector<2x16x128xbf16>, vector<2x16x128xbf16>, vector<2x16x16xf32> -> vector<2x16x16xf32>
    %cst_23 = arith.constant dense<0xFF800000> : vector<2x16xf32>
    %47 = vector.multi_reduction <maximumf>, %46, %cst_23 [2] : vector<2x16x16xf32> to vector<2x16xf32>
    %48 = vector.shape_cast %47 : vector<2x16xf32> to vector<2x16x1xf32>
    %49 = vector.broadcast %48 : vector<2x16x1xf32> to vector<2x16x16xf32>
    %50 = arith.subf %46, %49 : vector<2x16x16xf32>
    %51 = math.exp %50 : vector<2x16x16xf32>
    %cst_24 = arith.constant dense<0.000000e+00> : vector<2x16xf32>
    %52 = vector.multi_reduction <add>, %51, %cst_24 [2] : vector<2x16x16xf32> to vector<2x16xf32>
    %53 = vector.shape_cast %52 : vector<2x16xf32> to vector<2x16x1xf32>
    %54 = tpu.reciprocal %53 {approx = true} : vector<2x16x1xf32> -> vector<2x16x1xf32>
    %55 = vector.broadcast %54 : vector<2x16x1xf32> to vector<2x16x16xf32>
    %56 = arith.mulf %51, %55 : vector<2x16x16xf32>
    %57 = arith.truncf %56 : vector<2x16x16xf32> to vector<2x16x16xbf16>
    %58 = arith.truncf %43 : vector<2x16x128xf32> to vector<2x16x128xbf16>
    %cst_25 = arith.constant dense<0.000000e+00> : vector<2x16x128xf32>
    %59 = tpu.matmul %57, %58, %cst_25 {dimension_numbers = #tpu.dot_dimension_numbers<[2], [1], [1], [2], [0, 0, 0, 1, 1, 2], [0], [0]>} : vector<2x16x16xbf16>, vector<2x16x128xbf16>, vector<2x16x128xf32> -> vector<2x16x128xf32>
    %60 = vector.shape_cast %59 : vector<2x16x128xf32> to vector<32x128xf32>
    %61 = vector.extract_strided_slice %40 {offsets = [0, 0], sizes = [128, 128], strides = [1, 1]} : vector<256x128xbf16> to vector<128x128xbf16>
    %62 = arith.truncf %60 : vector<32x128xf32> to vector<32x128xbf16>
    %cst_26 = arith.constant dense<0.000000e+00> : vector<32x128xf32>
    %63 = tpu.matmul %62, %61, %cst_26 {dimension_numbers = #tpu.dot_dimension_numbers<[1], [0], [0], [1], [0, 0, 1, 1], [], []>} : vector<32x128xbf16>, vector<128x128xbf16>, vector<32x128xf32> -> vector<32x128xf32>
    %cst_27 = arith.constant dense<0.000000e+00> : vector<2x16xf32>
    %64 = vector.multi_reduction <add>, %56, %cst_27 [1] : vector<2x16x16xf32> to vector<2x16xf32>
    %65 = vector.extract_strided_slice %38 {offsets = [0, 0, 128], sizes = [2, 16, 128], strides = [1, 1, 1]} : vector<2x16x768xf32> to vector<2x16x128xf32>
    %66 = vector.extract_strided_slice %38 {offsets = [0, 0, 384], sizes = [2, 16, 128], strides = [1, 1, 1]} : vector<2x16x768xf32> to vector<2x16x128xf32>
    %67 = vector.extract_strided_slice %38 {offsets = [0, 0, 640], sizes = [2, 16, 128], strides = [1, 1, 1]} : vector<2x16x768xf32> to vector<2x16x128xf32>
    %68 = arith.truncf %65 : vector<2x16x128xf32> to vector<2x16x128xbf16>
    %69 = arith.truncf %66 : vector<2x16x128xf32> to vector<2x16x128xbf16>
    %cst_28 = arith.constant dense<0.000000e+00> : vector<2x16x16xf32>
    %70 = tpu.matmul %68, %69, %cst_28 {dimension_numbers = #tpu.dot_dimension_numbers<[2], [2], [1], [1], [0, 0, 0, 1, 1, 1], [0], [0]>} : vector<2x16x128xbf16>, vector<2x16x128xbf16>, vector<2x16x16xf32> -> vector<2x16x16xf32>
    %cst_29 = arith.constant dense<0xFF800000> : vector<2x16xf32>
    %71 = vector.multi_reduction <maximumf>, %70, %cst_29 [2] : vector<2x16x16xf32> to vector<2x16xf32>
    %72 = vector.shape_cast %71 : vector<2x16xf32> to vector<2x16x1xf32>
    %73 = vector.broadcast %72 : vector<2x16x1xf32> to vector<2x16x16xf32>
    %74 = arith.subf %70, %73 : vector<2x16x16xf32>
    %75 = math.exp %74 : vector<2x16x16xf32>
    %cst_30 = arith.constant dense<0.000000e+00> : vector<2x16xf32>
    %76 = vector.multi_reduction <add>, %75, %cst_30 [2] : vector<2x16x16xf32> to vector<2x16xf32>
    %77 = vector.shape_cast %76 : vector<2x16xf32> to vector<2x16x1xf32>
    %78 = tpu.reciprocal %77 {approx = true} : vector<2x16x1xf32> -> vector<2x16x1xf32>
    %79 = vector.broadcast %78 : vector<2x16x1xf32> to vector<2x16x16xf32>
    %80 = arith.mulf %75, %79 : vector<2x16x16xf32>
    %81 = arith.truncf %80 : vector<2x16x16xf32> to vector<2x16x16xbf16>
    %82 = arith.truncf %67 : vector<2x16x128xf32> to vector<2x16x128xbf16>
    %cst_31 = arith.constant dense<0.000000e+00> : vector<2x16x128xf32>
    %83 = tpu.matmul %81, %82, %cst_31 {dimension_numbers = #tpu.dot_dimension_numbers<[2], [1], [1], [2], [0, 0, 0, 1, 1, 2], [0], [0]>} : vector<2x16x16xbf16>, vector<2x16x128xbf16>, vector<2x16x128xf32> -> vector<2x16x128xf32>
    %84 = vector.shape_cast %83 : vector<2x16x128xf32> to vector<32x128xf32>
    %85 = vector.extract_strided_slice %40 {offsets = [128, 0], sizes = [128, 128], strides = [1, 1]} : vector<256x128xbf16> to vector<128x128xbf16>
    %86 = arith.truncf %84 : vector<32x128xf32> to vector<32x128xbf16>
    %cst_32 = arith.constant dense<0.000000e+00> : vector<32x128xf32>
    %87 = tpu.matmul %86, %85, %cst_32 {dimension_numbers = #tpu.dot_dimension_numbers<[1], [0], [0], [1], [0, 0, 1, 1], [], []>} : vector<32x128xbf16>, vector<128x128xbf16>, vector<32x128xf32> -> vector<32x128xf32>
    %88 = arith.addf %63, %87 : vector<32x128xf32>
    %cst_33 = arith.constant dense<0.000000e+00> : vector<2x16xf32>
    %89 = vector.multi_reduction <add>, %80, %cst_33 [1] : vector<2x16x16xf32> to vector<2x16xf32>
    %90 = arith.addf %64, %89 : vector<2x16xf32>
    %91 = arith.addf %3, %88 : vector<32x128xf32>
    %c0_34 = arith.constant 0 : index
    %c0_35 = arith.constant 0 : index
    %c0_36 = arith.constant 0 : index
    %92 = vector.load %arg11[%c0_34, %c0_35, %c0_36] : memref<1x1x128xf32, #tpu.memory_space<vmem>>, vector<1x1x128xf32>
    %93 = vector.shape_cast %92 : vector<1x1x128xf32> to vector<1x128xf32>
    %94 = vector.broadcast %93 : vector<1x128xf32> to vector<32x128xf32>
    %95 = arith.addf %91, %94 : vector<32x128xf32>
    %c0_37 = arith.constant 0 : index
    %c0_38 = arith.constant 0 : index
    %c0_39 = arith.constant 0 : index
    %96 = vector.load %arg12[%c0_37, %c0_38, %c0_39] : memref<1x1x128xf32, #tpu.memory_space<vmem>>, vector<1x1x128xf32>
    %97 = vector.shape_cast %96 : vector<1x1x128xf32> to vector<1x128xf32>
    %c0_40 = arith.constant 0 : index
    %c0_41 = arith.constant 0 : index
    %c0_42 = arith.constant 0 : index
    %98 = vector.load %arg13[%c0_40, %c0_41, %c0_42] : memref<1x1x128xf32, #tpu.memory_space<vmem>>, vector<1x1x128xf32>
    %99 = vector.shape_cast %98 : vector<1x1x128xf32> to vector<1x128xf32>
    %cst_43 = arith.constant dense<0.000000e+00> : vector<32xf32>
    %100 = vector.multi_reduction <add>, %95, %cst_43 [1] : vector<32x128xf32> to vector<32xf32>
    %101 = vector.shape_cast %100 : vector<32xf32> to vector<32x1xf32>
    %102 = arith.mulf %95, %95 : vector<32x128xf32>
    %cst_44 = arith.constant dense<0.000000e+00> : vector<32xf32>
    %103 = vector.multi_reduction <add>, %102, %cst_44 [1] : vector<32x128xf32> to vector<32xf32>
    %104 = vector.shape_cast %103 : vector<32xf32> to vector<32x1xf32>
    %cst_45 = arith.constant 3.125000e-02 : f32
    %105 = vector.broadcast %cst_45 : f32 to vector<32x1xf32>
    %106 = arith.mulf %101, %105 : vector<32x1xf32>
    %cst_46 = arith.constant 3.125000e-02 : f32
    %107 = vector.broadcast %cst_46 : f32 to vector<32x1xf32>
    %108 = arith.mulf %104, %107 : vector<32x1xf32>
    %109 = arith.mulf %106, %106 : vector<32x1xf32>
    %110 = arith.subf %108, %109 : vector<32x1xf32>
    %111 = vector.broadcast %106 : vector<32x1xf32> to vector<32x128xf32>
    %112 = arith.subf %95, %111 : vector<32x128xf32>
    %cst_47 = arith.constant 9.99999974E-6 : f32
    %113 = vector.broadcast %cst_47 : f32 to vector<32x1xf32>
    %114 = arith.addf %110, %113 : vector<32x1xf32>
    %115 = math.rsqrt %114 : vector<32x1xf32>
    %116 = vector.broadcast %115 : vector<32x1xf32> to vector<32x128xf32>
    %117 = arith.mulf %112, %116 : vector<32x128xf32>
    %118 = vector.broadcast %97 : vector<1x128xf32> to vector<32x128xf32>
    %119 = arith.mulf %117, %118 : vector<32x128xf32>
    %120 = vector.broadcast %99 : vector<1x128xf32> to vector<32x128xf32>
    %121 = arith.addf %119, %120 : vector<32x128xf32>
    %c0_48 = arith.constant 0 : index
    %c0_49 = arith.constant 0 : index
    %c0_50 = arith.constant 0 : index
    %122 = vector.load %arg14[%c0_48, %c0_49, %c0_50] : memref<1x128x128xbf16, #tpu.memory_space<vmem>>, vector<1x128x128xbf16>
    %123 = vector.shape_cast %122 : vector<1x128x128xbf16> to vector<128x128xbf16>
    %124 = arith.truncf %121 : vector<32x128xf32> to vector<32x128xbf16>
    %cst_51 = arith.constant dense<0.000000e+00> : vector<32x128xf32>
    %125 = tpu.matmul %124, %123, %cst_51 {dimension_numbers = #tpu.dot_dimension_numbers<[1], [0], [0], [1], [0, 0, 1, 1], [], []>} : vector<32x128xbf16>, vector<128x128xbf16>, vector<32x128xf32> -> vector<32x128xf32>
    %c0_52 = arith.constant 0 : index
    %c0_53 = arith.constant 0 : index
    %c0_54 = arith.constant 0 : index
    %126 = vector.load %arg15[%c0_52, %c0_53, %c0_54] : memref<1x1x128xf32, #tpu.memory_space<vmem>>, vector<1x1x128xf32>
    %127 = vector.shape_cast %126 : vector<1x1x128xf32> to vector<1x128xf32>
    %128 = vector.broadcast %127 : vector<1x128xf32> to vector<32x128xf32>
    %129 = arith.addf %125, %128 : vector<32x128xf32>
    %cst_55 = arith.constant 5.000000e-01 : f32
    %130 = vector.broadcast %cst_55 : f32 to vector<32x128xf32>
    %131 = arith.mulf %130, %129 : vector<32x128xf32>
    %cst_56 = arith.constant 4.471500e-02 : f32
    %132 = vector.broadcast %cst_56 : f32 to vector<32x128xf32>
    %133 = arith.mulf %132, %129 : vector<32x128xf32>
    %134 = arith.mulf %133, %129 : vector<32x128xf32>
    %135 = arith.mulf %134, %129 : vector<32x128xf32>
    %136 = arith.addf %129, %135 : vector<32x128xf32>
    %cst_57 = arith.constant 0.797884583 : f32
    %137 = vector.broadcast %cst_57 : f32 to vector<32x128xf32>
    %138 = arith.mulf %137, %136 : vector<32x128xf32>
    %139 = math.tanh %138 : vector<32x128xf32>
    %cst_58 = arith.constant 1.000000e+00 : f32
    %140 = vector.broadcast %cst_58 : f32 to vector<32x128xf32>
    %141 = arith.addf %140, %139 : vector<32x128xf32>
    %142 = arith.mulf %131, %141 : vector<32x128xf32>
    %c0_59 = arith.constant 0 : index
    %c0_60 = arith.constant 0 : index
    %c0_61 = arith.constant 0 : index
    %143 = vector.load %arg16[%c0_59, %c0_60, %c0_61] : memref<1x128x128xbf16, #tpu.memory_space<vmem>>, vector<1x128x128xbf16>
    %144 = vector.shape_cast %143 : vector<1x128x128xbf16> to vector<128x128xbf16>
    %145 = arith.truncf %142 : vector<32x128xf32> to vector<32x128xbf16>
    %cst_62 = arith.constant dense<0.000000e+00> : vector<32x128xf32>
    %146 = tpu.matmul %145, %144, %cst_62 {dimension_numbers = #tpu.dot_dimension_numbers<[1], [0], [0], [1], [0, 0, 1, 1], [], []>} : vector<32x128xbf16>, vector<128x128xbf16>, vector<32x128xf32> -> vector<32x128xf32>
    %147 = arith.addf %95, %146 : vector<32x128xf32>
    %c0_63 = arith.constant 0 : index
    %c0_64 = arith.constant 0 : index
    %c0_65 = arith.constant 0 : index
    %148 = vector.load %arg17[%c0_63, %c0_64, %c0_65] : memref<1x1x128xf32, #tpu.memory_space<vmem>>, vector<1x1x128xf32>
    %149 = vector.shape_cast %148 : vector<1x1x128xf32> to vector<1x128xf32>
    %150 = vector.broadcast %149 : vector<1x128xf32> to vector<32x128xf32>
    %151 = arith.addf %147, %150 : vector<32x128xf32>
    %c0_66 = arith.constant 0 : index
    %c0_67 = arith.constant 0 : index
    %152 = vector.load %arg20[%c0_66, %c0_67] : memref<32x128xf32, #tpu.memory_space<vmem>>, vector<32x128xf32>
    tpu.vector_store %arg20[%c0_66, %c0_67], %151 {strides = array<i32>} : memref<32x128xf32, #tpu.memory_space<vmem>>, vector<32x128xf32>,
    %c1_i32 = arith.constant 1 : i32
    %153 = arith.cmpi eq, %arg1, %c1_i32 : i32
    %154 = arith.extui %153 : i1 to i32
    %c0_i32_68 = arith.constant 0 : i32
    %155 = arith.cmpi ne, %154, %c0_i32_68 : i32
    scf.if %155 {
      %156 = arith.truncf %151 : vector<32x128xf32> to vector<32x128xbf16>
      %c0_69 = arith.constant 0 : index
      %c0_70 = arith.constant 0 : index
      %157 = vector.load %arg18[%c0_69, %c0_70] : memref<32x128xbf16, #tpu.memory_space<vmem>>, vector<32x128xbf16>
      tpu.vector_store %arg18[%c0_69, %c0_70], %156 {strides = array<i32>} : memref<32x128xbf16, #tpu.memory_space<vmem>>, vector<32x128xbf16>,
      %cst_71 = arith.constant 3.125000e-02 : f32
      %158 = vector.broadcast %cst_71 : f32 to vector<2x16xf32>
      %159 = arith.mulf %90, %158 : vector<2x16xf32>
      %160 = vector.shape_cast %159 : vector<2x16xf32> to vector<2x1x16xf32>
      %c0_72 = arith.constant 0 : index
      %c0_73 = arith.constant 0 : index
      %c0_74 = arith.constant 0 : index
      %161 = vector.load %arg19[%c0_72, %c0_73, %c0_74] : memref<2x1x16xf32, #tpu.memory_space<vmem>>, vector<2x1x16xf32>
      tpu.vector_store %arg19[%c0_72, %c0_73, %c0_74], %160 {strides = array<i32>} : memref<2x1x16xf32, #tpu.memory_space<vmem>>, vector<2x1x16xf32>,
    } else {
    }
    return
  }
  func.func @transform_0(%arg0: i32, %arg1: i32) -> (i32, i32) {
    %c0_i32 = arith.constant 0 : i32
    %c0_i32_0 = arith.constant 0 : i32
    return %arg0, %c0_i32 : i32, i32
  }
  func.func @transform_1(%arg0: i32, %arg1: i32) -> (i32, i32) {
    %c0_i32 = arith.constant 0 : i32
    %c0_i32_0 = arith.constant 0 : i32
    %c0_i32_1 = arith.constant 0 : i32
    return %c0_i32, %c0_i32_0 : i32, i32
  }
  func.func @transform_2(%arg0: i32, %arg1: i32) -> (i32, i32) {
    %c0_i32 = arith.constant 0 : i32
    %c0_i32_0 = arith.constant 0 : i32
    %c0_i32_1 = arith.constant 0 : i32
    return %c0_i32, %c0_i32_0 : i32, i32
  }
  func.func @transform_3(%arg0: i32, %arg1: i32) -> (i32, i32) {
    %c0_i32 = arith.constant 0 : i32
    %c0_i32_0 = arith.constant 0 : i32
    %c0_i32_1 = arith.constant 0 : i32
    return %c0_i32, %c0_i32_0 : i32, i32
  }
  func.func @transform_4(%arg0: i32, %arg1: i32) -> (i32, i32, i32) {
    %c0_i32 = arith.constant 0 : i32
    %c0_i32_0 = arith.constant 0 : i32
    %c0_i32_1 = arith.constant 0 : i32
    return %arg1, %c0_i32, %c0_i32_0 : i32, i32, i32
  }
  func.func @transform_5(%arg0: i32, %arg1: i32) -> (i32, i32, i32) {
    %c0_i32 = arith.constant 0 : i32
    %c0_i32_0 = arith.constant 0 : i32
    %c0_i32_1 = arith.constant 0 : i32
    return %arg1, %c0_i32, %c0_i32_0 : i32, i32, i32
  }
  func.func @transform_6(%arg0: i32, %arg1: i32) -> (i32, i32, i32) {
    %c0_i32 = arith.constant 0 : i32
    %c0_i32_0 = arith.constant 0 : i32
    %c0_i32_1 = arith.constant 0 : i32
    return %arg1, %c0_i32, %c0_i32_0 : i32, i32, i32
  }
  func.func @transform_7(%arg0: i32, %arg1: i32) -> (i32, i32, i32) {
    %c0_i32 = arith.constant 0 : i32
    %c0_i32_0 = arith.constant 0 : i32
    %c0_i32_1 = arith.constant 0 : i32
    return %arg1, %c0_i32, %c0_i32_0 : i32, i32, i32
  }
  func.func @transform_8(%arg0: i32, %arg1: i32) -> (i32, i32, i32) {
    %c0_i32 = arith.constant 0 : i32
    %c0_i32_0 = arith.constant 0 : i32
    %c0_i32_1 = arith.constant 0 : i32
    return %arg1, %c0_i32, %c0_i32_0 : i32, i32, i32
  }
  func.func @transform_9(%arg0: i32, %arg1: i32) -> (i32, i32, i32) {
    %c0_i32 = arith.constant 0 : i32
    %c0_i32_0 = arith.constant 0 : i32
    %c0_i32_1 = arith.constant 0 : i32
    return %arg1, %c0_i32, %c0_i32_0 : i32, i32, i32
  }
  func.func @transform_10(%arg0: i32, %arg1: i32) -> (i32, i32, i32) {
    %c0_i32 = arith.constant 0 : i32
    %c0_i32_0 = arith.constant 0 : i32
    %c0_i32_1 = arith.constant 0 : i32
    return %arg1, %c0_i32, %c0_i32_0 : i32, i32, i32
  }
  func.func @transform_11(%arg0: i32, %arg1: i32) -> (i32, i32, i32) {
    %c0_i32 = arith.constant 0 : i32
    %c0_i32_0 = arith.constant 0 : i32
    %c0_i32_1 = arith.constant 0 : i32
    return %arg1, %c0_i32, %c0_i32_0 : i32, i32, i32
  }
  func.func @transform_12(%arg0: i32, %arg1: i32) -> (i32, i32, i32) {
    %c0_i32 = arith.constant 0 : i32
    %c0_i32_0 = arith.constant 0 : i32
    %c0_i32_1 = arith.constant 0 : i32
    return %arg1, %c0_i32, %c0_i32_0 : i32, i32, i32
  }
  func.func @transform_13(%arg0: i32, %arg1: i32) -> (i32, i32, i32) {
    %c0_i32 = arith.constant 0 : i32
    %c0_i32_0 = arith.constant 0 : i32
    %c0_i32_1 = arith.constant 0 : i32
    return %arg1, %c0_i32, %c0_i32_0 : i32, i32, i32
  }
  func.func @transform_14(%arg0: i32, %arg1: i32) -> (i32, i32, i32) {
    %c0_i32 = arith.constant 0 : i32
    %c0_i32_0 = arith.constant 0 : i32
    %c0_i32_1 = arith.constant 0 : i32
    return %arg1, %c0_i32, %c0_i32_0 : i32, i32, i32
  }
  func.func @transform_15(%arg0: i32, %arg1: i32) -> (i32, i32, i32) {
    %c0_i32 = arith.constant 0 : i32
    %c0_i32_0 = arith.constant 0 : i32
    %c0_i32_1 = arith.constant 0 : i32
    return %arg1, %c0_i32, %c0_i32_0 : i32, i32, i32
  }
  func.func @transform_16(%arg0: i32, %arg1: i32) -> (i32, i32) {
    %c0_i32 = arith.constant 0 : i32
    %c0_i32_0 = arith.constant 0 : i32
    return %arg0, %c0_i32 : i32, i32
  }
  func.func @transform_17(%arg0: i32, %arg1: i32) -> (i32, i32, i32) {
    %c0_i32 = arith.constant 0 : i32
    %c0_i32_0 = arith.constant 0 : i32
    %c0_i32_1 = arith.constant 0 : i32
    return %arg0, %c0_i32, %c0_i32_0 : i32, i32, i32
  }
}

</mosaic_0001>

<llo_original>
// kernel: vit_feature_extractor.1
$region0: #{vit_feature_extractor.1}
  #allocation0 [shape = 'u32[]', space=smem, size = 0x4, offset = 0x4, fixed_abs, tag = 'smem constant byte address 0x4 - core index']
  #allocation1 [shape = 'u32[144,128]{1,0:T(1,128)}', space=vmem, size = 0x12000, scoped, tag = 'internal scratch']
  #allocation2 [shape = 'f32[32,128]{1,0:T(8,128)}', space=vmem, size = 0x4000, scoped, tag = 'scratch operand']
  %s0 = inlined_call_operand.hbm [shape: f32[32,128], index: 0, kind: input, shape index: {}]
  %s1 = inlined_call_operand.hbm [shape: f32[16,128], index: 1, kind: input, shape index: {}]
  %s2 = inlined_call_operand.hbm [shape: bf16[128,128], index: 2, kind: input, shape index: {}]
  %s3 = inlined_call_operand.hbm [shape: f32[1,128], index: 3, kind: input, shape index: {}]
  %s4 = inlined_call_operand.hbm [shape: f32[2,1,128], index: 4, kind: input, shape index: {}]
  %s5 = inlined_call_operand.hbm [shape: f32[2,1,128], index: 5, kind: input, shape index: {}]
  %s6 = inlined_call_operand.hbm [shape: bf16[2,128,768], index: 6, kind: input, shape index: {}]
  %s7 = inlined_call_operand.hbm [shape: f32[2,1,768], index: 7, kind: input, shape index: {}]
  %s8 = inlined_call_operand.hbm [shape: bf16[2,256,128], index: 8, kind: input, shape index: {}]
  %s9 = inlined_call_operand.hbm [shape: f32[2,1,128], index: 9, kind: input, shape index: {}]
  %s10 = inlined_call_operand.hbm [shape: f32[2,1,128], index: 10, kind: input, shape index: {}]
  %s11 = inlined_call_operand.hbm [shape: f32[2,1,128], index: 11, kind: input, shape index: {}]
  %s12 = inlined_call_operand.hbm [shape: bf16[2,128,128], index: 12, kind: input, shape index: {}]
  %s13 = inlined_call_operand.hbm [shape: f32[2,1,128], index: 13, kind: input, shape index: {}]
  %s14 = inlined_call_operand.hbm [shape: bf16[2,128,128], index: 14, kind: input, shape index: {}]
  %s15 = inlined_call_operand.hbm [shape: f32[2,1,128], index: 15, kind: input, shape index: {}]
  %s16 = inlined_call_operand.hbm [shape: bf16[32,128], index: 16, kind: output, shape index: {0}]
  %s17 = inlined_call_operand.hbm [shape: f32[2,1,16], index: 17, kind: output, shape index: {1}]
  %18 = xla_tuple %s16, %s17
  %s19 = sld [smem:[#allocation0]]
  $region177: #{vit_feature_extractor.1} parent=0
    _
  %s21 = ssub.s32 1, %s19
  %s22 = scalar_select 0, %s21, %s19
  $region1: #{vit_feature_extractor.1} parent=0
    #allocation3 [shape = 'u8[16384]{0}', space=vmem, size = 0x4000, scoped, tag = 'input window, operand 0, single buffered']
    #allocation4 [shape = 's32[2]{0}', space=sflag, size = 0x8, scoped, tag = 'scoped memory for vit_feature_extractor.1']
    #allocation5 [shape = 's32[2]{0}', space=sflag, size = 0x8, scoped, tag = 'scoped memory for vit_feature_extractor.1']
    #allocation6 [shape = 'u8[8192]{0}', space=vmem, size = 0x2000, scoped, tag = 'input window, operand 1, single buffered']
    #allocation7 [shape = 's32[1]{0}', space=sflag, size = 0x4, scoped, tag = 'scoped memory for vit_feature_extractor.1']
    #allocation8 [shape = 'u8[32768]{0}', space=vmem, size = 0x8000, scoped, tag = 'input window, operand 2, single buffered']
    #allocation9 [shape = 'u8[512]{0}', space=vmem, size = 0x400, scoped, tag = 'input window, operand 3, single buffered']
    #allocation10 [shape = 's32[1]{0}', space=sflag, size = 0x4, scoped, tag = 'scoped memory for vit_feature_extractor.1']
    #allocation11 [shape = 'u8[1024]{0}', space=vmem, size = 0x400, scoped, tag = 'input window, operand 4']
    #allocation12 [shape = 'u8[1024]{0}', space=vmem, size = 0x400, scoped, tag = 'input window, operand 5']
    #allocation13 [shape = 'u8[393216]{0}', space=vmem, size = 0x60000, scoped, tag = 'input window, operand 6']
    #allocation14 [shape = 'u8[6144]{0}', space=vmem, size = 0x1800, scoped, tag = 'input window, operand 7']
    #allocation15 [shape = 'u8[131072]{0}', space=vmem, size = 0x20000, scoped, tag = 'input window, operand 8']
    #allocation16 [shape = 'u8[1024]{0}', space=vmem, size = 0x400, scoped, tag = 'input window, operand 9']
    #allocation17 [shape = 'u8[1024]{0}', space=vmem, size = 0x400, scoped, tag = 'input window, operand 10']
    #allocation18 [shape = 'u8[1024]{0}', space=vmem, size = 0x400, scoped, tag = 'input window, operand 11']
    #allocation19 [shape = 'u8[65536]{0}', space=vmem, size = 0x10000, scoped, tag = 'input window, operand 12']
    #allocation20 [shape = 'u8[1024]{0}', space=vmem, size = 0x400, scoped, tag = 'input window, operand 13']
    #allocation21 [shape = 'u8[65536]{0}', space=vmem, size = 0x10000, scoped, tag = 'input window, operand 14']
    #allocation22 [shape = 'u8[1024]{0}', space=vmem, size = 0x400, scoped, tag = 'input window, operand 15']
    #allocation23 [shape = 'u8[8192]{0}', space=vmem, size = 0x2000, scoped, tag = 'output window, operand 0, single buffered']
    #allocation24 [shape = 'u8[1024]{0}', space=vmem, size = 0x400, scoped, tag = 'output window, operand 1, single buffered']
    #allocation25 [shape = 's32[1]{0}', space=sflag, size = 0x4, scoped, tag = 'scoped memory for vit_feature_extractor.1']
    %23 = vsyncpa [#allocation4], 0
    %24 = vsyncpa [#allocation7], 0
    %25 = vsyncpa [#allocation10], 0
    %26 = vsyncpa [#allocation5], 0
    %27 = vsyncpa [#allocation25], 0
    loop: start=0, step=1, limit=4
    $region2: #{vit_feature_extractor.1} parent=1 // loop_pre_header
      _
    $region3: #{vit_feature_extractor.1} parent=1 // loop_header
      %s29 = sphi 0, %s33
      %p30 = scmp.ge.s32.totalorder %s29, 4
      %s36 = sphi 0, %s48
      %s37 = sphi 0, %s44
      %s38 = sphi 0, %s36
      %s39 = sphi 0, %s37
      %s40 = sphi 0, %s38
      %s41 = sphi 0, %s39
      %s51 = sphi 0, %s53
      %s54 = sphi 0, %s51
      %s55 = sphi 0, %s54
      %s71 = sphi 0, %s55
      %s75 = sphi 0, %s75
      %s77 = sphi 0, %s75
      %s78 = sphi 0, %s77
      %s92 = sphi 0, %s78
      %s96 = sphi 0, %s96
      %s98 = sphi 0, %s96
      %s99 = sphi 0, %s98
      %s113 = sphi 0, %s99
      %s117 = sphi 0, %s117
      %s119 = sphi 0, %s117
      %s120 = sphi 0, %s119
      %s134 = sphi 0, %s120
      %s140 = sphi 0, %s142
      %s143 = sphi 0, %s140
      %s144 = sphi 0, %s143
      %s160 = sphi 0, %s144
      %s166 = sphi 0, %s168
      %s169 = sphi 0, %s166
      %s170 = sphi 0, %s169
      %s186 = sphi 0, %s170
      %s192 = sphi 0, %s194
      %s195 = sphi 0, %s192
      %s196 = sphi 0, %s195
      %s212 = sphi 0, %s196
      %s218 = sphi 0, %s220
      %s221 = sphi 0, %s218
      %s222 = sphi 0, %s221
      %s238 = sphi 0, %s222
      %s244 = sphi 0, %s246
      %s247 = sphi 0, %s244
      %s248 = sphi 0, %s247
      %s264 = sphi 0, %s248
      %s270 = sphi 0, %s272
      %s273 = sphi 0, %s270
      %s274 = sphi 0, %s273
      %s290 = sphi 0, %s274
      %s296 = sphi 0, %s298
      %s299 = sphi 0, %s296
      %s300 = sphi 0, %s299
      %s316 = sphi 0, %s300
      %s322 = sphi 0, %s324
      %s325 = sphi 0, %s322
      %s326 = sphi 0, %s325
      %s342 = sphi 0, %s326
      %s348 = sphi 0, %s350
      %s351 = sphi 0, %s348
      %s352 = sphi 0, %s351
      %s368 = sphi 0, %s352
      %s374 = sphi 0, %s376
      %s377 = sphi 0, %s374
      %s378 = sphi 0, %s377
      %s394 = sphi 0, %s378
      %s400 = sphi 0, %s402
      %s403 = sphi 0, %s400
      %s404 = sphi 0, %s403
      %s420 = sphi 0, %s404
      %s426 = sphi 0, %s428
      %s429 = sphi 0, %s426
      %s430 = sphi 0, %s429
      %s446 = sphi 0, %s430
      %s452 = sphi 0, %s454
      %s455 = sphi 0, %s452
      %s456 = sphi 0, %s455
      %s472 = sphi 0, %s456
      %s478 = sphi 0, %s480
      %s481 = sphi 0, %s478
      %s482 = sphi 0, %s481
      %s498 = sphi 0, %s482
    $region4: #{vit_feature_extractor.1} parent=1 // loop_header_branch
      %32 = sbr.rel (%p30) target = $region8
    $region5: #{vit_feature_extractor.1} parent=1 // loop_body
      %s34 = ssub.s32 %s29, 1
      %s35 = ssub.s32 %s29, 2
      %s42 = sadd.s32 1, %s37
      %p43 = scmp.ge.s32.totalorder %s42, 2
      %s44 = scalar_select %p43, 0, %s42
      %s45 = sadd.s32 1, %s36
      %s46 = scalar_select %p43, %s45, %s36
      %p47 = scmp.ge.s32.totalorder %s46, 1
      %s48 = scalar_select %p47, 0, %s46
      %s49 = ssub.s32 %s36, %s48
      %p50 = scmp.eq.s32.totalorder %s49, 0
      %s52 = sadd.s32 %s51, 1
      %s53 = scalar_select %p50, %s51, %s52
      %p56 = pneg %p50
      %p57 = scmp.eq.s32.totalorder %s29, 1
      %p58 = por %p56, %p57
      %p59 = scmp.ne.s32.totalorder %s51, %s54
      %p60 = scmp.eq.s32.totalorder %s29, 0
      %p61 = por %p59, %p60
      %p62 = scmp.ne.s32.totalorder %s51, %s54
      %p63 = scmp.eq.s32.totalorder %s34, 1
      %p64 = por %p62, %p63
      %p65 = scmp.ne.s32.totalorder %s54, %s55
      %p66 = scmp.eq.s32.totalorder %s34, 0
      %p67 = por %p65, %p66
      %p68 = scmp.ne.s32.totalorder %s54, %s55
      %p69 = scmp.eq.s32.totalorder %s35, 1
      %p70 = por %p68, %p69
      %p72 = scmp.ne.s32.totalorder %s55, %s71
      %p73 = scmp.eq.s32.totalorder %s35, 0
      %p74 = por %p72, %p73
      %s76 = sadd.s32 %s75, 1
      %p79 = scmp.eq.s32.totalorder %s29, 1
      %p80 = scmp.ne.s32.totalorder %s75, %s77
      %p81 = scmp.eq.s32.totalorder %s29, 0
      %p82 = por %p80, %p81
      %p83 = scmp.ne.s32.totalorder %s75, %s77
      %p84 = scmp.eq.s32.totalorder %s34, 1
      %p85 = por %p83, %p84
      %p86 = scmp.ne.s32.totalorder %s77, %s78
      %p87 = scmp.eq.s32.totalorder %s34, 0
      %p88 = por %p86, %p87
      %p89 = scmp.ne.s32.totalorder %s77, %s78
      %p90 = scmp.eq.s32.totalorder %s35, 1
      %p91 = por %p89, %p90
      %p93 = scmp.ne.s32.totalorder %s78, %s92
      %p94 = scmp.eq.s32.totalorder %s35, 0
      %p95 = por %p93, %p94
      %s97 = sadd.s32 %s96, 1
      %p100 = scmp.eq.s32.totalorder %s29, 1
      %p101 = scmp.ne.s32.totalorder %s96, %s98
      %p102 = scmp.eq.s32.totalorder %s29, 0
      %p103 = por %p101, %p102
      %p104 = scmp.ne.s32.totalorder %s96, %s98
      %p105 = scmp.eq.s32.totalorder %s34, 1
      %p106 = por %p104, %p105
      %p107 = scmp.ne.s32.totalorder %s98, %s99
      %p108 = scmp.eq.s32.totalorder %s34, 0
      %p109 = por %p107, %p108
      %p110 = scmp.ne.s32.totalorder %s98, %s99
      %p111 = scmp.eq.s32.totalorder %s35, 1
      %p112 = por %p110, %p111
      %p114 = scmp.ne.s32.totalorder %s99, %s113
      %p115 = scmp.eq.s32.totalorder %s35, 0
      %p116 = por %p114, %p115
      %s118 = sadd.s32 %s117, 1
      %p121 = scmp.eq.s32.totalorder %s29, 1
      %p122 = scmp.ne.s32.totalorder %s117, %s119
      %p123 = scmp.eq.s32.totalorder %s29, 0
      %p124 = por %p122, %p123
      %p125 = scmp.ne.s32.totalorder %s117, %s119
      %p126 = scmp.eq.s32.totalorder %s34, 1
      %p127 = por %p125, %p126
      %p128 = scmp.ne.s32.totalorder %s119, %s120
      %p129 = scmp.eq.s32.totalorder %s34, 0
      %p130 = por %p128, %p129
      %p131 = scmp.ne.s32.totalorder %s119, %s120
      %p132 = scmp.eq.s32.totalorder %s35, 1
      %p133 = por %p131, %p132
      %p135 = scmp.ne.s32.totalorder %s120, %s134
      %p136 = scmp.eq.s32.totalorder %s35, 0
      %p137 = por %p135, %p136
      %s138 = ssub.s32 %s37, %s44
      %p139 = scmp.eq.s32.totalorder %s138, 0
      %s141 = sadd.s32 %s140, 1
      %s142 = scalar_select %p139, %s140, %s141
      %p145 = pneg %p139
      %p146 = scmp.eq.s32.totalorder %s29, 1
      %p147 = por %p145, %p146
      %p148 = scmp.ne.s32.totalorder %s140, %s143
      %p149 = scmp.eq.s32.totalorder %s29, 0
      %p150 = por %p148, %p149
      %p151 = scmp.ne.s32.totalorder %s140, %s143
      %p152 = scmp.eq.s32.totalorder %s34, 1
      %p153 = por %p151, %p152
      %p154 = scmp.ne.s32.totalorder %s143, %s144
      %p155 = scmp.eq.s32.totalorder %s34, 0
      %p156 = por %p154, %p155
      %p157 = scmp.ne.s32.totalorder %s143, %s144
      %p158 = scmp.eq.s32.totalorder %s35, 1
      %p159 = por %p157, %p158
      %p161 = scmp.ne.s32.totalorder %s144, %s160
      %p162 = scmp.eq.s32.totalorder %s35, 0
      %p163 = por %p161, %p162
      %s164 = ssub.s32 %s37, %s44
      %p165 = scmp.eq.s32.totalorder %s164, 0
      %s167 = sadd.s32 %s166, 1
      %s168 = scalar_select %p165, %s166, %s167
      %p171 = pneg %p165
      %p172 = scmp.eq.s32.totalorder %s29, 1
      %p173 = por %p171, %p172
      %p174 = scmp.ne.s32.totalorder %s166, %s169
      %p175 = scmp.eq.s32.totalorder %s29, 0
      %p176 = por %p174, %p175
      %p177 = scmp.ne.s32.totalorder %s166, %s169
      %p178 = scmp.eq.s32.totalorder %s34, 1
      %p179 = por %p177, %p178
      %p180 = scmp.ne.s32.totalorder %s169, %s170
      %p181 = scmp.eq.s32.totalorder %s34, 0
      %p182 = por %p180, %p181
      %p183 = scmp.ne.s32.totalorder %s169, %s170
      %p184 = scmp.eq.s32.totalorder %s35, 1
      %p185 = por %p183, %p184
      %p187 = scmp.ne.s32.totalorder %s170, %s186
      %p188 = scmp.eq.s32.totalorder %s35, 0
      %p189 = por %p187, %p188
      %s190 = ssub.s32 %s37, %s44
      %p191 = scmp.eq.s32.totalorder %s190, 0
      %s193 = sadd.s32 %s192, 1
      %s194 = scalar_select %p191, %s192, %s193
      %p197 = pneg %p191
      %p198 = scmp.eq.s32.totalorder %s29, 1
      %p199 = por %p197, %p198
      %p200 = scmp.ne.s32.totalorder %s192, %s195
      %p201 = scmp.eq.s32.totalorder %s29, 0
      %p202 = por %p200, %p201
      %p203 = scmp.ne.s32.totalorder %s192, %s195
      %p204 = scmp.eq.s32.totalorder %s34, 1
      %p205 = por %p203, %p204
      %p206 = scmp.ne.s32.totalorder %s195, %s196
      %p207 = scmp.eq.s32.totalorder %s34, 0
      %p208 = por %p206, %p207
      %p209 = scmp.ne.s32.totalorder %s195, %s196
      %p210 = scmp.eq.s32.totalorder %s35, 1
      %p211 = por %p209, %p210
      %p213 = scmp.ne.s32.totalorder %s196, %s212
      %p214 = scmp.eq.s32.totalorder %s35, 0
      %p215 = por %p213, %p214
      %s216 = ssub.s32 %s37, %s44
      %p217 = scmp.eq.s32.totalorder %s216, 0
      %s219 = sadd.s32 %s218, 1
      %s220 = scalar_select %p217, %s218, %s219
      %p223 = pneg %p217
      %p224 = scmp.eq.s32.totalorder %s29, 1
      %p225 = por %p223, %p224
      %p226 = scmp.ne.s32.totalorder %s218, %s221
      %p227 = scmp.eq.s32.totalorder %s29, 0
      %p228 = por %p226, %p227
      %p229 = scmp.ne.s32.totalorder %s218, %s221
      %p230 = scmp.eq.s32.totalorder %s34, 1
      %p231 = por %p229, %p230
      %p232 = scmp.ne.s32.totalorder %s221, %s222
      %p233 = scmp.eq.s32.totalorder %s34, 0
      %p234 = por %p232, %p233
      %p235 = scmp.ne.s32.totalorder %s221, %s222
      %p236 = scmp.eq.s32.totalorder %s35, 1
      %p237 = por %p235, %p236
      %p239 = scmp.ne.s32.totalorder %s222, %s238
      %p240 = scmp.eq.s32.totalorder %s35, 0
      %p241 = por %p239, %p240
      %s242 = ssub.s32 %s37, %s44
      %p243 = scmp.eq.s32.totalorder %s242, 0
      %s245 = sadd.s32 %s244, 1
      %s246 = scalar_select %p243, %s244, %s245
      %p249 = pneg %p243
      %p250 = scmp.eq.s32.totalorder %s29, 1
      %p251 = por %p249, %p250
      %p252 = scmp.ne.s32.totalorder %s244, %s247
      %p253 = scmp.eq.s32.totalorder %s29, 0
      %p254 = por %p252, %p253
      %p255 = scmp.ne.s32.totalorder %s244, %s247
      %p256 = scmp.eq.s32.totalorder %s34, 1
      %p257 = por %p255, %p256
      %p258 = scmp.ne.s32.totalorder %s247, %s248
      %p259 = scmp.eq.s32.totalorder %s34, 0
      %p260 = por %p258, %p259
      %p261 = scmp.ne.s32.totalorder %s247, %s248
      %p262 = scmp.eq.s32.totalorder %s35, 1
      %p263 = por %p261, %p262
      %p265 = scmp.ne.s32.totalorder %s248, %s264
      %p266 = scmp.eq.s32.totalorder %s35, 0
      %p267 = por %p265, %p266
      %s268 = ssub.s32 %s37, %s44
      %p269 = scmp.eq.s32.totalorder %s268, 0
      %s271 = sadd.s32 %s270, 1
      %s272 = scalar_select %p269, %s270, %s271
      %p275 = pneg %p269
      %p276 = scmp.eq.s32.totalorder %s29, 1
      %p277 = por %p275, %p276
      %p278 = scmp.ne.s32.totalorder %s270, %s273
      %p279 = scmp.eq.s32.totalorder %s29, 0
      %p280 = por %p278, %p279
      %p281 = scmp.ne.s32.totalorder %s270, %s273
      %p282 = scmp.eq.s32.totalorder %s34, 1
      %p283 = por %p281, %p282
      %p284 = scmp.ne.s32.totalorder %s273, %s274
      %p285 = scmp.eq.s32.totalorder %s34, 0
      %p286 = por %p284, %p285
      %p287 = scmp.ne.s32.totalorder %s273, %s274
      %p288 = scmp.eq.s32.totalorder %s35, 1
      %p289 = por %p287, %p288
      %p291 = scmp.ne.s32.totalorder %s274, %s290
      %p292 = scmp.eq.s32.totalorder %s35, 0
      %p293 = por %p291, %p292
      %s294 = ssub.s32 %s37, %s44
      %p295 = scmp.eq.s32.totalorder %s294, 0
      %s297 = sadd.s32 %s296, 1
      %s298 = scalar_select %p295, %s296, %s297
      %p301 = pneg %p295
      %p302 = scmp.eq.s32.totalorder %s29, 1
      %p303 = por %p301, %p302
      %p304 = scmp.ne.s32.totalorder %s296, %s299
      %p305 = scmp.eq.s32.totalorder %s29, 0
      %p306 = por %p304, %p305
      %p307 = scmp.ne.s32.totalorder %s296, %s299
      %p308 = scmp.eq.s32.totalorder %s34, 1
      %p309 = por %p307, %p308
      %p310 = scmp.ne.s32.totalorder %s299, %s300
      %p311 = scmp.eq.s32.totalorder %s34, 0
      %p312 = por %p310, %p311
      %p313 = scmp.ne.s32.totalorder %s299, %s300
      %p314 = scmp.eq.s32.totalorder %s35, 1
      %p315 = por %p313, %p314
      %p317 = scmp.ne.s32.totalorder %s300, %s316
      %p318 = scmp.eq.s32.totalorder %s35, 0
      %p319 = por %p317, %p318
      %s320 = ssub.s32 %s37, %s44
      %p321 = scmp.eq.s32.totalorder %s320, 0
      %s323 = sadd.s32 %s322, 1
      %s324 = scalar_select %p321, %s322, %s323
      %p327 = pneg %p321
      %p328 = scmp.eq.s32.totalorder %s29, 1
      %p329 = por %p327, %p328
      %p330 = scmp.ne.s32.totalorder %s322, %s325
      %p331 = scmp.eq.s32.totalorder %s29, 0
      %p332 = por %p330, %p331
      %p333 = scmp.ne.s32.totalorder %s322, %s325
      %p334 = scmp.eq.s32.totalorder %s34, 1
      %p335 = por %p333, %p334
      %p336 = scmp.ne.s32.totalorder %s325, %s326
      %p337 = scmp.eq.s32.totalorder %s34, 0
      %p338 = por %p336, %p337
      %p339 = scmp.ne.s32.totalorder %s325, %s326
      %p340 = scmp.eq.s32.totalorder %s35, 1
      %p341 = por %p339, %p340
      %p343 = scmp.ne.s32.totalorder %s326, %s342
      %p344 = scmp.eq.s32.totalorder %s35, 0
      %p345 = por %p343, %p344
      %s346 = ssub.s32 %s37, %s44
      %p347 = scmp.eq.s32.totalorder %s346, 0
      %s349 = sadd.s32 %s348, 1
      %s350 = scalar_select %p347, %s348, %s349
      %p353 = pneg %p347
      %p354 = scmp.eq.s32.totalorder %s29, 1
      %p355 = por %p353, %p354
      %p356 = scmp.ne.s32.totalorder %s348, %s351
      %p357 = scmp.eq.s32.totalorder %s29, 0
      %p358 = por %p356, %p357
      %p359 = scmp.ne.s32.totalorder %s348, %s351
      %p360 = scmp.eq.s32.totalorder %s34, 1
      %p361 = por %p359, %p360
      %p362 = scmp.ne.s32.totalorder %s351, %s352
      %p363 = scmp.eq.s32.totalorder %s34, 0
      %p364 = por %p362, %p363
      %p365 = scmp.ne.s32.totalorder %s351, %s352
      %p366 = scmp.eq.s32.totalorder %s35, 1
      %p367 = por %p365, %p366
      %p369 = scmp.ne.s32.totalorder %s352, %s368
      %p370 = scmp.eq.s32.totalorder %s35, 0
      %p371 = por %p369, %p370
      %s372 = ssub.s32 %s37, %s44
      %p373 = scmp.eq.s32.totalorder %s372, 0
      %s375 = sadd.s32 %s374, 1
      %s376 = scalar_select %p373, %s374, %s375
      %p379 = pneg %p373
      %p380 = scmp.eq.s32.totalorder %s29, 1
      %p381 = por %p379, %p380
      %p382 = scmp.ne.s32.totalorder %s374, %s377
      %p383 = scmp.eq.s32.totalorder %s29, 0
      %p384 = por %p382, %p383
      %p385 = scmp.ne.s32.totalorder %s374, %s377
      %p386 = scmp.eq.s32.totalorder %s34, 1
      %p387 = por %p385, %p386
      %p388 = scmp.ne.s32.totalorder %s377, %s378
      %p389 = scmp.eq.s32.totalorder %s34, 0
      %p390 = por %p388, %p389
      %p391 = scmp.ne.s32.totalorder %s377, %s378
      %p392 = scmp.eq.s32.totalorder %s35, 1
      %p393 = por %p391, %p392
      %p395 = scmp.ne.s32.totalorder %s378, %s394
      %p396 = scmp.eq.s32.totalorder %s35, 0
      %p397 = por %p395, %p396
      %s398 = ssub.s32 %s37, %s44
      %p399 = scmp.eq.s32.totalorder %s398, 0
      %s401 = sadd.s32 %s400, 1
      %s402 = scalar_select %p399, %s400, %s401
      %p405 = pneg %p399
      %p406 = scmp.eq.s32.totalorder %s29, 1
      %p407 = por %p405, %p406
      %p408 = scmp.ne.s32.totalorder %s400, %s403
      %p409 = scmp.eq.s32.totalorder %s29, 0
      %p410 = por %p408, %p409
      %p411 = scmp.ne.s32.totalorder %s400, %s403
      %p412 = scmp.eq.s32.totalorder %s34, 1
      %p413 = por %p411, %p412
      %p414 = scmp.ne.s32.totalorder %s403, %s404
      %p415 = scmp.eq.s32.totalorder %s34, 0
      %p416 = por %p414, %p415
      %p417 = scmp.ne.s32.totalorder %s403, %s404
      %p418 = scmp.eq.s32.totalorder %s35, 1
      %p419 = por %p417, %p418
      %p421 = scmp.ne.s32.totalorder %s404, %s420
      %p422 = scmp.eq.s32.totalorder %s35, 0
      %p423 = por %p421, %p422
      %s424 = ssub.s32 %s37, %s44
      %p425 = scmp.eq.s32.totalorder %s424, 0
      %s427 = sadd.s32 %s426, 1
      %s428 = scalar_select %p425, %s426, %s427
      %p431 = pneg %p425
      %p432 = scmp.eq.s32.totalorder %s29, 1
      %p433 = por %p431, %p432
      %p434 = scmp.ne.s32.totalorder %s426, %s429
      %p435 = scmp.eq.s32.totalorder %s29, 0
      %p436 = por %p434, %p435
      %p437 = scmp.ne.s32.totalorder %s426, %s429
      %p438 = scmp.eq.s32.totalorder %s34, 1
      %p439 = por %p437, %p438
      %p440 = scmp.ne.s32.totalorder %s429, %s430
      %p441 = scmp.eq.s32.totalorder %s34, 0
      %p442 = por %p440, %p441
      %p443 = scmp.ne.s32.totalorder %s429, %s430
      %p444 = scmp.eq.s32.totalorder %s35, 1
      %p445 = por %p443, %p444
      %p447 = scmp.ne.s32.totalorder %s430, %s446
      %p448 = scmp.eq.s32.totalorder %s35, 0
      %p449 = por %p447, %p448
      %s450 = ssub.s32 %s36, %s48
      %p451 = scmp.eq.s32.totalorder %s450, 0
      %s453 = sadd.s32 %s452, 1
      %s454 = scalar_select %p451, %s452, %s453
      %p457 = pneg %p451
      %p458 = scmp.eq.s32.totalorder %s29, 1
      %p459 = por %p457, %p458
      %p460 = scmp.ne.s32.totalorder %s452, %s455
      %p461 = scmp.eq.s32.totalorder %s29, 0
      %p462 = por %p460, %p461
      %p463 = scmp.ne.s32.totalorder %s452, %s455
      %p464 = scmp.eq.s32.totalorder %s34, 1
      %p465 = por %p463, %p464
      %p466 = scmp.ne.s32.totalorder %s455, %s456
      %p467 = scmp.eq.s32.totalorder %s34, 0
      %p468 = por %p466, %p467
      %p469 = scmp.ne.s32.totalorder %s455, %s456
      %p470 = scmp.eq.s32.totalorder %s35, 1
      %p471 = por %p469, %p470
      %p473 = scmp.ne.s32.totalorder %s456, %s472
      %p474 = scmp.eq.s32.totalorder %s35, 0
      %p475 = por %p473, %p474
      %s476 = ssub.s32 %s36, %s48
      %p477 = scmp.eq.s32.totalorder %s476, 0
      %s479 = sadd.s32 %s478, 1
      %s480 = scalar_select %p477, %s478, %s479
      %p483 = pneg %p477
      %p484 = scmp.eq.s32.totalorder %s29, 1
      %p485 = por %p483, %p484
      %p486 = scmp.ne.s32.totalorder %s478, %s481
      %p487 = scmp.eq.s32.totalorder %s29, 0
      %p488 = por %p486, %p487
      %p489 = scmp.ne.s32.totalorder %s478, %s481
      %p490 = scmp.eq.s32.totalorder %s34, 1
      %p491 = por %p489, %p490
      %p492 = scmp.ne.s32.totalorder %s481, %s482
      %p493 = scmp.eq.s32.totalorder %s34, 0
      %p494 = por %p492, %p493
      %p495 = scmp.ne.s32.totalorder %s481, %s482
      %p496 = scmp.eq.s32.totalorder %s35, 1
      %p497 = por %p495, %p496
      %p499 = scmp.ne.s32.totalorder %s482, %s498
      %p500 = scmp.eq.s32.totalorder %s35, 0
      %p501 = por %p499, %p500
      %p502 = scmp.le.s32.totalorder 1, %s29
      %p503 = scmp.lt.s32.totalorder %s29, 3
      %p504 = pnand %p502, %p503
      %p505 = pneg %p504
      // Predicated region
      $region9: #{vit_feature_extractor.1} parent=5 // pred_check
        _
      $region10: #{vit_feature_extractor.1} parent=5 // pred_check_branch
        %507 = sbr.rel (%p504) target = $region12
      $region11: #{vit_feature_extractor.1} parent=5 // pred_region
        %s508 = ssub.s32 %s29, 1
        // Predicated region
        $region13: #{vit_feature_extractor.1} parent=11 // pred_check
          %p509 = pneg %p67
        $region14: #{vit_feature_extractor.1} parent=11 // pred_check_branch
          %511 = sbr.rel (%p509) target = $region16
        $region15: #{vit_feature_extractor.1} parent=11 // pred_region
          %s512 = smul.u32 4, %s38
          %s514 = ssub.s32 512, 512
          %515 = vsyncadd [#allocation4], %s514
          %s516 = smul.addr %s512, 128
          %s517 = scalar_lea.hbm %s0, %s516
          %s518 = sshll.u32 [#allocation3], 4
          %s519 = int_to_ptr.vmem [resolvable:$true] %s518
          %524 = dma.hbm_to_vmem [thread:$0]  %s517, 512, %s519, [#allocation4], 128, 128, 8
        $region16: #{vit_feature_extractor.1} parent=11 // pred_fallthru
          _
        // Predicated region
        $region17: #{vit_feature_extractor.1} parent=11 // pred_check
          %p525 = pneg %p88
        $region18: #{vit_feature_extractor.1} parent=11 // pred_check_branch
          %527 = sbr.rel (%p525) target = $region20
        $region19: #{vit_feature_extractor.1} parent=11 // pred_region
          %s529 = ssub.s32 256, 256
          %530 = vsyncadd [#allocation7], %s529
          %s531 = sshll.u32 [#allocation6], 4
          %s532 = int_to_ptr.vmem [resolvable:$true] %s531
          %537 = dma.hbm_to_vmem [thread:$0]  %s1, 256, %s532, [#allocation7], 128, 128, 8
        $region20: #{vit_feature_extractor.1} parent=11 // pred_fallthru
          _
        // Predicated region
        $region21: #{vit_feature_extractor.1} parent=11 // pred_check
          %p538 = pneg %p109
        $region22: #{vit_feature_extractor.1} parent=11 // pred_check_branch
          %540 = sbr.rel (%p538) target = $region24
        $region23: #{vit_feature_extractor.1} parent=11 // pred_region
          %s542 = ssub.s32 1024, 1024
          %543 = vsyncadd [#allocation7], %s542
          %s544 = sshll.u32 [#allocation8], 4
          %s545 = int_to_ptr.vmem [resolvable:$true] %s544
          %550 = dma.hbm_to_vmem [thread:$0]  %s2, 1024, %s545, [#allocation7], 64, 64, 4
        $region24: #{vit_feature_extractor.1} parent=11 // pred_fallthru
          _
        // Predicated region
        $region25: #{vit_feature_extractor.1} parent=11 // pred_check
          %p551 = pneg %p130
        $region26: #{vit_feature_extractor.1} parent=11 // pred_check_branch
          %553 = sbr.rel (%p551) target = $region28
        $region27: #{vit_feature_extractor.1} parent=11 // pred_region
          %s555 = ssub.s32 16, 16
          %556 = vsyncadd [#allocation10], %s555
          %s558 = sshll.u32 [#allocation9], 4
          %s559 = int_to_ptr.vmem [resolvable:$true] %s558
          %561 = dma.hbm_to_vmem [thread:$0]  %s3, 16, %s559, [#allocation10]
        $region28: #{vit_feature_extractor.1} parent=11 // pred_fallthru
          _
      $region12: #{vit_feature_extractor.1} parent=5 // pred_fallthru
        _
      %p562 = scmp.lt.s32.totalorder %s29, 2
      // Predicated region
      $region29: #{vit_feature_extractor.1} parent=5 // pred_check
        %p563 = pneg %p562
      $region30: #{vit_feature_extractor.1} parent=5 // pred_check_branch
        %565 = sbr.rel (%p563) target = $region32
      $region31: #{vit_feature_extractor.1} parent=5 // pred_region
        // Predicated region
        $region33: #{vit_feature_extractor.1} parent=31 // pred_check
          %p566 = pneg %p150
        $region34: #{vit_feature_extractor.1} parent=31 // pred_check_branch
          %568 = sbr.rel (%p566) target = $region36
        $region35: #{vit_feature_extractor.1} parent=31 // pred_region
          %s569 = sand.u32 %s29, 1
          %s570 = scalar_lea.sflag [#allocation4], %s569
          %s571 = sand.u32 %s140, 1
          %s572 = scalar_lea.vmem [#allocation11], %s571
          %s574 = ssub.s32 16, 16
          %575 = vsyncadd %s570, %s574
          %s576 = smul.addr %s37, 16
          %s577 = scalar_lea.hbm %s4, %s576
          %s579 = sshll.u32 %s572, 4
          %s580 = int_to_ptr.vmem [resolvable:$true] %s579
          %582 = dma.hbm_to_vmem [thread:$0]  %s577, 16, %s580, %s570
        $region36: #{vit_feature_extractor.1} parent=31 // pred_fallthru
          _
        // Predicated region
        $region37: #{vit_feature_extractor.1} parent=31 // pred_check
          %p583 = pneg %p176
        $region38: #{vit_feature_extractor.1} parent=31 // pred_check_branch
          %585 = sbr.rel (%p583) target = $region40
        $region39: #{vit_feature_extractor.1} parent=31 // pred_region
          %s586 = sand.u32 %s29, 1
          %s587 = scalar_lea.sflag [#allocation4], %s586
          %s588 = sand.u32 %s166, 1
          %s589 = scalar_lea.vmem [#allocation12], %s588
          %s591 = ssub.s32 16, 16
          %592 = vsyncadd %s587, %s591
          %s593 = smul.addr %s37, 16
          %s594 = scalar_lea.hbm %s5, %s593
          %s596 = sshll.u32 %s589, 4
          %s597 = int_to_ptr.vmem [resolvable:$true] %s596
          %599 = dma.hbm_to_vmem [thread:$0]  %s594, 16, %s597, %s587
        $region40: #{vit_feature_extractor.1} parent=31 // pred_fallthru
          _
        // Predicated region
        $region41: #{vit_feature_extractor.1} parent=31 // pred_check
          %p600 = pneg %p202
        $region42: #{vit_feature_extractor.1} parent=31 // pred_check_branch
          %602 = sbr.rel (%p600) target = $region44
        $region43: #{vit_feature_extractor.1} parent=31 // pred_region
          %s603 = sand.u32 %s29, 1
          %s604 = scalar_lea.sflag [#allocation4], %s603
          %s605 = sand.u32 %s192, 1
          %s606 = smul.addr %s605, 384
          %s607 = scalar_lea.vmem [#allocation13], %s606
          %s609 = ssub.s32 6144, 6144
          %610 = vsyncadd %s604, %s609
          %s611 = smul.addr %s37, 96
          %s612 = smul.addr %s611, 64
          %s613 = scalar_lea.hbm %s6, %s612
          %s614 = sshll.u32 %s607, 4
          %s615 = int_to_ptr.vmem [resolvable:$true] %s614
          %620 = dma.hbm_to_vmem [thread:$0]  %s613, 6144, %s615, %s604, 384, 384, 24
        $region44: #{vit_feature_extractor.1} parent=31 // pred_fallthru
          _
        // Predicated region
        $region45: #{vit_feature_extractor.1} parent=31 // pred_check
          %p621 = pneg %p228
        $region46: #{vit_feature_extractor.1} parent=31 // pred_check_branch
          %623 = sbr.rel (%p621) target = $region48
        $region47: #{vit_feature_extractor.1} parent=31 // pred_region
          %s624 = sand.u32 %s29, 1
          %s625 = scalar_lea.sflag [#allocation4], %s624
          %s626 = sand.u32 %s218, 1
          %s627 = smul.addr %s626, 6
          %s628 = scalar_lea.vmem [#allocation14], %s627
          %s630 = ssub.s32 96, 96
          %631 = vsyncadd %s625, %s630
          %s632 = smul.addr %s37, 6
          %s633 = smul.addr %s632, 16
          %s634 = scalar_lea.hbm %s7, %s633
          %s636 = sshll.u32 %s628, 4
          %s637 = int_to_ptr.vmem [resolvable:$true] %s636
          %639 = dma.hbm_to_vmem [thread:$0]  %s634, 96, %s637, %s625
        $region48: #{vit_feature_extractor.1} parent=31 // pred_fallthru
          _
        // Predicated region
        $region49: #{vit_feature_extractor.1} parent=31 // pred_check
          %p640 = pneg %p254
        $region50: #{vit_feature_extractor.1} parent=31 // pred_check_branch
          %642 = sbr.rel (%p640) target = $region52
        $region51: #{vit_feature_extractor.1} parent=31 // pred_region
          %s643 = sand.u32 %s29, 1
          %s644 = scalar_lea.sflag [#allocation4], %s643
          %s645 = sand.u32 %s244, 1
          %s646 = smul.addr %s645, 128
          %s647 = scalar_lea.vmem [#allocation15], %s646
          %s649 = ssub.s32 2048, 2048
          %650 = vsyncadd %s644, %s649
          %s651 = smul.addr %s37, 32
          %s652 = smul.addr %s651, 64
          %s653 = scalar_lea.hbm %s8, %s652
          %s654 = sshll.u32 %s647, 4
          %s655 = int_to_ptr.vmem [resolvable:$true] %s654
          %660 = dma.hbm_to_vmem [thread:$0]  %s653, 2048, %s655, %s644, 64, 64, 4
        $region52: #{vit_feature_extractor.1} parent=31 // pred_fallthru
          _
        // Predicated region
        $region53: #{vit_feature_extractor.1} parent=31 // pred_check
          %p661 = pneg %p280
        $region54: #{vit_feature_extractor.1} parent=31 // pred_check_branch
          %663 = sbr.rel (%p661) target = $region56
        $region55: #{vit_feature_extractor.1} parent=31 // pred_region
          %s664 = sand.u32 %s29, 1
          %s665 = scalar_lea.sflag [#allocation4], %s664
          %s666 = sand.u32 %s270, 1
          %s667 = scalar_lea.vmem [#allocation16], %s666
          %s669 = ssub.s32 16, 16
          %670 = vsyncadd %s665, %s669
          %s671 = smul.addr %s37, 16
          %s672 = scalar_lea.hbm %s9, %s671
          %s674 = sshll.u32 %s667, 4
          %s675 = int_to_ptr.vmem [resolvable:$true] %s674
          %677 = dma.hbm_to_vmem [thread:$0]  %s672, 16, %s675, %s665
        $region56: #{vit_feature_extractor.1} parent=31 // pred_fallthru
          _
        // Predicated region
        $region57: #{vit_feature_extractor.1} parent=31 // pred_check
          %p678 = pneg %p306
        $region58: #{vit_feature_extractor.1} parent=31 // pred_check_branch
          %680 = sbr.rel (%p678) target = $region60
        $region59: #{vit_feature_extractor.1} parent=31 // pred_region
          %s681 = sand.u32 %s29, 1
          %s682 = scalar_lea.sflag [#allocation4], %s681
          %s683 = sand.u32 %s296, 1
          %s684 = scalar_lea.vmem [#allocation17], %s683
          %s686 = ssub.s32 16, 16
          %687 = vsyncadd %s682, %s686
          %s688 = smul.addr %s37, 16
          %s689 = scalar_lea.hbm %s10, %s688
          %s691 = sshll.u32 %s684, 4
          %s692 = int_to_ptr.vmem [resolvable:$true] %s691
          %694 = dma.hbm_to_vmem [thread:$0]  %s689, 16, %s692, %s682
        $region60: #{vit_feature_extractor.1} parent=31 // pred_fallthru
          _
        // Predicated region
        $region61: #{vit_feature_extractor.1} parent=31 // pred_check
          %p695 = pneg %p332
        $region62: #{vit_feature_extractor.1} parent=31 // pred_check_branch
          %697 = sbr.rel (%p695) target = $region64
        $region63: #{vit_feature_extractor.1} parent=31 // pred_region
          %s698 = sand.u32 %s29, 1
          %s699 = scalar_lea.sflag [#allocation4], %s698
          %s700 = sand.u32 %s322, 1
          %s701 = scalar_lea.vmem [#allocation18], %s700
          %s703 = ssub.s32 16, 16
          %704 = vsyncadd %s699, %s703
          %s705 = smul.addr %s37, 16
          %s706 = scalar_lea.hbm %s11, %s705
          %s708 = sshll.u32 %s701, 4
          %s709 = int_to_ptr.vmem [resolvable:$true] %s708
          %711 = dma.hbm_to_vmem [thread:$0]  %s706, 16, %s709, %s699
        $region64: #{vit_feature_extractor.1} parent=31 // pred_fallthru
          _
        // Predicated region
        $region65: #{vit_feature_extractor.1} parent=31 // pred_check
          %p712 = pneg %p358
        $region66: #{vit_feature_extractor.1} parent=31 // pred_check_branch
          %714 = sbr.rel (%p712) target = $region68
        $region67: #{vit_feature_extractor.1} parent=31 // pred_region
          %s715 = sand.u32 %s29, 1
          %s716 = scalar_lea.sflag [#allocation4], %s715
          %s717 = sand.u32 %s348, 1
          %s718 = smul.addr %s717, 64
          %s719 = scalar_lea.vmem [#allocation19], %s718
          %s721 = ssub.s32 1024, 1024
          %722 = vsyncadd %s716, %s721
          %s723 = smul.addr %s37, 16
          %s724 = smul.addr %s723, 64
          %s725 = scalar_lea.hbm %s12, %s724
          %s726 = sshll.u32 %s719, 4
          %s727 = int_to_ptr.vmem [resolvable:$true] %s726
          %732 = dma.hbm_to_vmem [thread:$0]  %s725, 1024, %s727, %s716, 64, 64, 4
        $region68: #{vit_feature_extractor.1} parent=31 // pred_fallthru
          _
        // Predicated region
        $region69: #{vit_feature_extractor.1} parent=31 // pred_check
          %p733 = pneg %p384
        $region70: #{vit_feature_extractor.1} parent=31 // pred_check_branch
          %735 = sbr.rel (%p733) target = $region72
        $region71: #{vit_feature_extractor.1} parent=31 // pred_region
          %s736 = sand.u32 %s29, 1
          %s737 = scalar_lea.sflag [#allocation4], %s736
          %s738 = sand.u32 %s374, 1
          %s739 = scalar_lea.vmem [#allocation20], %s738
          %s741 = ssub.s32 16, 16
          %742 = vsyncadd %s737, %s741
          %s743 = smul.addr %s37, 16
          %s744 = scalar_lea.hbm %s13, %s743
          %s746 = sshll.u32 %s739, 4
          %s747 = int_to_ptr.vmem [resolvable:$true] %s746
          %749 = dma.hbm_to_vmem [thread:$0]  %s744, 16, %s747, %s737
        $region72: #{vit_feature_extractor.1} parent=31 // pred_fallthru
          _
        // Predicated region
        $region73: #{vit_feature_extractor.1} parent=31 // pred_check
          %p750 = pneg %p410
        $region74: #{vit_feature_extractor.1} parent=31 // pred_check_branch
          %752 = sbr.rel (%p750) target = $region76
        $region75: #{vit_feature_extractor.1} parent=31 // pred_region
          %s753 = sand.u32 %s29, 1
          %s754 = scalar_lea.sflag [#allocation4], %s753
          %s755 = sand.u32 %s400, 1
          %s756 = smul.addr %s755, 64
          %s757 = scalar_lea.vmem [#allocation21], %s756
          %s759 = ssub.s32 1024, 1024
          %760 = vsyncadd %s754, %s759
          %s761 = smul.addr %s37, 16
          %s762 = smul.addr %s761, 64
          %s763 = scalar_lea.hbm %s14, %s762
          %s764 = sshll.u32 %s757, 4
          %s765 = int_to_ptr.vmem [resolvable:$true] %s764
          %770 = dma.hbm_to_vmem [thread:$0]  %s763, 1024, %s765, %s754, 64, 64, 4
        $region76: #{vit_feature_extractor.1} parent=31 // pred_fallthru
          _
        // Predicated region
        $region77: #{vit_feature_extractor.1} parent=31 // pred_check
          %p771 = pneg %p436
        $region78: #{vit_feature_extractor.1} parent=31 // pred_check_branch
          %773 = sbr.rel (%p771) target = $region80
        $region79: #{vit_feature_extractor.1} parent=31 // pred_region
          %s774 = sand.u32 %s29, 1
          %s775 = scalar_lea.sflag [#allocation4], %s774
          %s776 = sand.u32 %s426, 1
          %s777 = scalar_lea.vmem [#allocation22], %s776
          %s779 = ssub.s32 16, 16
          %780 = vsyncadd %s775, %s779
          %s781 = smul.addr %s37, 16
          %s782 = scalar_lea.hbm %s15, %s781
          %s784 = sshll.u32 %s777, 4
          %s785 = int_to_ptr.vmem [resolvable:$true] %s784
          %787 = dma.hbm_to_vmem [thread:$0]  %s782, 16, %s785, %s775
        $region80: #{vit_feature_extractor.1} parent=31 // pred_fallthru
          _
      $region32: #{vit_feature_extractor.1} parent=5 // pred_fallthru
        _
      %p788 = scmp.le.s32.totalorder 1, %s29
      %p789 = scmp.lt.s32.totalorder %s29, 3
      %p790 = pnand %p788, %p789
      %p791 = pneg %p790
      // Predicated region
      $region81: #{vit_feature_extractor.1} parent=5 // pred_check
        _
      $region82: #{vit_feature_extractor.1} parent=5 // pred_check_branch
        %793 = sbr.rel (%p790) target = $region84
      $region83: #{vit_feature_extractor.1} parent=5 // pred_region
        %s794 = ssub.s32 %s29, 1
        // Predicated region
        $region85: #{vit_feature_extractor.1} parent=83 // pred_check
          %p795 = pneg %p67
        $region86: #{vit_feature_extractor.1} parent=83 // pred_check_branch
          %797 = sbr.rel (%p795) target = $region88
        $region87: #{vit_feature_extractor.1} parent=83 // pred_region
          %798 = dma.done [#allocation4], 512
        $region88: #{vit_feature_extractor.1} parent=83 // pred_fallthru
          _
        // Predicated region
        $region89: #{vit_feature_extractor.1} parent=83 // pred_check
          %p799 = pneg %p88
        $region90: #{vit_feature_extractor.1} parent=83 // pred_check_branch
          %801 = sbr.rel (%p799) target = $region92
        $region91: #{vit_feature_extractor.1} parent=83 // pred_region
          %802 = dma.done [#allocation7], 256
        $region92: #{vit_feature_extractor.1} parent=83 // pred_fallthru
          _
        // Predicated region
        $region93: #{vit_feature_extractor.1} parent=83 // pred_check
          %p803 = pneg %p109
        $region94: #{vit_feature_extractor.1} parent=83 // pred_check_branch
          %805 = sbr.rel (%p803) target = $region96
        $region95: #{vit_feature_extractor.1} parent=83 // pred_region
          %806 = dma.done [#allocation7], 1024
        $region96: #{vit_feature_extractor.1} parent=83 // pred_fallthru
          _
        // Predicated region
        $region97: #{vit_feature_extractor.1} parent=83 // pred_check
          %p807 = pneg %p130
        $region98: #{vit_feature_extractor.1} parent=83 // pred_check_branch
          %809 = sbr.rel (%p807) target = $region100
        $region99: #{vit_feature_extractor.1} parent=83 // pred_region
          %810 = dma.done [#allocation10], 16
        $region100: #{vit_feature_extractor.1} parent=83 // pred_fallthru
          _
        %s811 = sand.u32 %s34, 1
        %s812 = scalar_lea.sflag [#allocation4], %s811
        %s813 = sand.u32 %s143, 1
        %s814 = scalar_lea.vmem [#allocation11], %s813
        // Predicated region
        $region101: #{vit_feature_extractor.1} parent=83 // pred_check
          %p815 = pneg %p156
        $region102: #{vit_feature_extractor.1} parent=83 // pred_check_branch
          %817 = sbr.rel (%p815) target = $region104
        $region103: #{vit_feature_extractor.1} parent=83 // pred_region
          %818 = dma.done %s812, 16
        $region104: #{vit_feature_extractor.1} parent=83 // pred_fallthru
          _
        %s819 = sand.u32 %s34, 1
        %s820 = scalar_lea.sflag [#allocation4], %s819
        %s821 = sand.u32 %s169, 1
        %s822 = scalar_lea.vmem [#allocation12], %s821
        // Predicated region
        $region105: #{vit_feature_extractor.1} parent=83 // pred_check
          %p823 = pneg %p182
        $region106: #{vit_feature_extractor.1} parent=83 // pred_check_branch
          %825 = sbr.rel (%p823) target = $region108
        $region107: #{vit_feature_extractor.1} parent=83 // pred_region
          %826 = dma.done %s820, 16
        $region108: #{vit_feature_extractor.1} parent=83 // pred_fallthru
          _
        %s827 = sand.u32 %s34, 1
        %s828 = scalar_lea.sflag [#allocation4], %s827
        %s829 = sand.u32 %s195, 1
        %s830 = smul.addr %s829, 384
        %s831 = scalar_lea.vmem [#allocation13], %s830
        // Predicated region
        $region109: #{vit_feature_extractor.1} parent=83 // pred_check
          %p832 = pneg %p208
        $region110: #{vit_feature_extractor.1} parent=83 // pred_check_branch
          %834 = sbr.rel (%p832) target = $region112
        $region111: #{vit_feature_extractor.1} parent=83 // pred_region
          %835 = dma.done %s828, 6144
        $region112: #{vit_feature_extractor.1} parent=83 // pred_fallthru
          _
        %s836 = sand.u32 %s34, 1
        %s837 = scalar_lea.sflag [#allocation4], %s836
        %s838 = sand.u32 %s221, 1
        %s839 = smul.addr %s838, 6
        %s840 = scalar_lea.vmem [#allocation14], %s839
        // Predicated region
        $region113: #{vit_feature_extractor.1} parent=83 // pred_check
          %p841 = pneg %p234
        $region114: #{vit_feature_extractor.1} parent=83 // pred_check_branch
          %843 = sbr.rel (%p841) target = $region116
        $region115: #{vit_feature_extractor.1} parent=83 // pred_region
          %844 = dma.done %s837, 96
        $region116: #{vit_feature_extractor.1} parent=83 // pred_fallthru
          _
        %s845 = sand.u32 %s34, 1
        %s846 = scalar_lea.sflag [#allocation4], %s845
        %s847 = sand.u32 %s247, 1
        %s848 = smul.addr %s847, 128
        %s849 = scalar_lea.vmem [#allocation15], %s848
        // Predicated region
        $region117: #{vit_feature_extractor.1} parent=83 // pred_check
          %p850 = pneg %p260
        $region118: #{vit_feature_extractor.1} parent=83 // pred_check_branch
          %852 = sbr.rel (%p850) target = $region120
        $region119: #{vit_feature_extractor.1} parent=83 // pred_region
          %853 = dma.done %s846, 2048
        $region120: #{vit_feature_extractor.1} parent=83 // pred_fallthru
          _
        %s854 = sand.u32 %s34, 1
        %s855 = scalar_lea.sflag [#allocation4], %s854
        %s856 = sand.u32 %s273, 1
        %s857 = scalar_lea.vmem [#allocation16], %s856
        // Predicated region
        $region121: #{vit_feature_extractor.1} parent=83 // pred_check
          %p858 = pneg %p286
        $region122: #{vit_feature_extractor.1} parent=83 // pred_check_branch
          %860 = sbr.rel (%p858) target = $region124
        $region123: #{vit_feature_extractor.1} parent=83 // pred_region
          %861 = dma.done %s855, 16
        $region124: #{vit_feature_extractor.1} parent=83 // pred_fallthru
          _
        %s862 = sand.u32 %s34, 1
        %s863 = scalar_lea.sflag [#allocation4], %s862
        %s864 = sand.u32 %s299, 1
        %s865 = scalar_lea.vmem [#allocation17], %s864
        // Predicated region
        $region125: #{vit_feature_extractor.1} parent=83 // pred_check
          %p866 = pneg %p312
        $region126: #{vit_feature_extractor.1} parent=83 // pred_check_branch
          %868 = sbr.rel (%p866) target = $region128
        $region127: #{vit_feature_extractor.1} parent=83 // pred_region
          %869 = dma.done %s863, 16
        $region128: #{vit_feature_extractor.1} parent=83 // pred_fallthru
          _
        %s870 = sand.u32 %s34, 1
        %s871 = scalar_lea.sflag [#allocation4], %s870
        %s872 = sand.u32 %s325, 1
        %s873 = scalar_lea.vmem [#allocation18], %s872
        // Predicated region
        $region129: #{vit_feature_extractor.1} parent=83 // pred_check
          %p874 = pneg %p338
        $region130: #{vit_feature_extractor.1} parent=83 // pred_check_branch
          %876 = sbr.rel (%p874) target = $region132
        $region131: #{vit_feature_extractor.1} parent=83 // pred_region
          %877 = dma.done %s871, 16
        $region132: #{vit_feature_extractor.1} parent=83 // pred_fallthru
          _
        %s878 = sand.u32 %s34, 1
        %s879 = scalar_lea.sflag [#allocation4], %s878
        %s880 = sand.u32 %s351, 1
        %s881 = smul.addr %s880, 64
        %s882 = scalar_lea.vmem [#allocation19], %s881
        // Predicated region
        $region133: #{vit_feature_extractor.1} parent=83 // pred_check
          %p883 = pneg %p364
        $region134: #{vit_feature_extractor.1} parent=83 // pred_check_branch
          %885 = sbr.rel (%p883) target = $region136
        $region135: #{vit_feature_extractor.1} parent=83 // pred_region
          %886 = dma.done %s879, 1024
        $region136: #{vit_feature_extractor.1} parent=83 // pred_fallthru
          _
        %s887 = sand.u32 %s34, 1
        %s888 = scalar_lea.sflag [#allocation4], %s887
        %s889 = sand.u32 %s377, 1
        %s890 = scalar_lea.vmem [#allocation20], %s889
        // Predicated region
        $region137: #{vit_feature_extractor.1} parent=83 // pred_check
          %p891 = pneg %p390
        $region138: #{vit_feature_extractor.1} parent=83 // pred_check_branch
          %893 = sbr.rel (%p891) target = $region140
        $region139: #{vit_feature_extractor.1} parent=83 // pred_region
          %894 = dma.done %s888, 16
        $region140: #{vit_feature_extractor.1} parent=83 // pred_fallthru
          _
        %s895 = sand.u32 %s34, 1
        %s896 = scalar_lea.sflag [#allocation4], %s895
        %s897 = sand.u32 %s403, 1
        %s898 = smul.addr %s897, 64
        %s899 = scalar_lea.vmem [#allocation21], %s898
        // Predicated region
        $region141: #{vit_feature_extractor.1} parent=83 // pred_check
          %p900 = pneg %p416
        $region142: #{vit_feature_extractor.1} parent=83 // pred_check_branch
          %902 = sbr.rel (%p900) target = $region144
        $region143: #{vit_feature_extractor.1} parent=83 // pred_region
          %903 = dma.done %s896, 1024
        $region144: #{vit_feature_extractor.1} parent=83 // pred_fallthru
          _
        %s904 = sand.u32 %s34, 1
        %s905 = scalar_lea.sflag [#allocation4], %s904
        %s906 = sand.u32 %s429, 1
        %s907 = scalar_lea.vmem [#allocation22], %s906
        // Predicated region
        $region145: #{vit_feature_extractor.1} parent=83 // pred_check
          %p908 = pneg %p442
        $region146: #{vit_feature_extractor.1} parent=83 // pred_check_branch
          %910 = sbr.rel (%p908) target = $region148
        $region147: #{vit_feature_extractor.1} parent=83 // pred_region
          %911 = dma.done %s905, 16
        $region148: #{vit_feature_extractor.1} parent=83 // pred_fallthru
          _
        %p912 = pneg %p67
        %p913 = pneg %p64
        %p914 = pneg %p88
        %p915 = pneg %p85
        %p916 = pneg %p109
        %p917 = pneg %p106
        %p918 = pneg %p130
        %p919 = pneg %p127
        %s920 = sand.u32 %s34, 1
        %s921 = scalar_lea.sflag [#allocation4], %s920
        %s922 = sand.u32 %s143, 1
        %s923 = scalar_lea.vmem [#allocation11], %s922
        %p924 = pneg %p156
        %p925 = pneg %p153
        %s926 = sand.u32 %s34, 1
        %s927 = scalar_lea.sflag [#allocation4], %s926
        %s928 = sand.u32 %s169, 1
        %s929 = scalar_lea.vmem [#allocation12], %s928
        %p930 = pneg %p182
        %p931 = pneg %p179
        %s932 = sand.u32 %s34, 1
        %s933 = scalar_lea.sflag [#allocation4], %s932
        %s934 = sand.u32 %s195, 1
        %s935 = smul.addr %s934, 384
        %s936 = scalar_lea.vmem [#allocation13], %s935
        %p937 = pneg %p208
        %p938 = pneg %p205
        %s939 = sand.u32 %s34, 1
        %s940 = scalar_lea.sflag [#allocation4], %s939
        %s941 = sand.u32 %s221, 1
        %s942 = smul.addr %s941, 6
        %s943 = scalar_lea.vmem [#allocation14], %s942
        %p944 = pneg %p234
        %p945 = pneg %p231
        %s946 = sand.u32 %s34, 1
        %s947 = scalar_lea.sflag [#allocation4], %s946
        %s948 = sand.u32 %s247, 1
        %s949 = smul.addr %s948, 128
        %s950 = scalar_lea.vmem [#allocation15], %s949
        %p951 = pneg %p260
        %p952 = pneg %p257
        %s953 = sand.u32 %s34, 1
        %s954 = scalar_lea.sflag [#allocation4], %s953
        %s955 = sand.u32 %s273, 1
        %s956 = scalar_lea.vmem [#allocation16], %s955
        %p957 = pneg %p286
        %p958 = pneg %p283
        %s959 = sand.u32 %s34, 1
        %s960 = scalar_lea.sflag [#allocation4], %s959
        %s961 = sand.u32 %s299, 1
        %s962 = scalar_lea.vmem [#allocation17], %s961
        %p963 = pneg %p312
        %p964 = pneg %p309
        %s965 = sand.u32 %s34, 1
        %s966 = scalar_lea.sflag [#allocation4], %s965
        %s967 = sand.u32 %s325, 1
        %s968 = scalar_lea.vmem [#allocation18], %s967
        %p969 = pneg %p338
        %p970 = pneg %p335
        %s971 = sand.u32 %s34, 1
        %s972 = scalar_lea.sflag [#allocation4], %s971
        %s973 = sand.u32 %s351, 1
        %s974 = smul.addr %s973, 64
        %s975 = scalar_lea.vmem [#allocation19], %s974
        %p976 = pneg %p364
        %p977 = pneg %p361
        %s978 = sand.u32 %s34, 1
        %s979 = scalar_lea.sflag [#allocation4], %s978
        %s980 = sand.u32 %s377, 1
        %s981 = scalar_lea.vmem [#allocation20], %s980
        %p982 = pneg %p390
        %p983 = pneg %p387
        %s984 = sand.u32 %s34, 1
        %s985 = scalar_lea.sflag [#allocation4], %s984
        %s986 = sand.u32 %s403, 1
        %s987 = smul.addr %s986, 64
        %s988 = scalar_lea.vmem [#allocation21], %s987
        %p989 = pneg %p416
        %p990 = pneg %p413
        %s991 = sand.u32 %s34, 1
        %s992 = scalar_lea.sflag [#allocation4], %s991
        %s993 = sand.u32 %s429, 1
        %s994 = scalar_lea.vmem [#allocation22], %s993
        %p995 = pneg %p442
        %p996 = pneg %p439
        %p997 = pneg %p468
        %p998 = pneg %p465
        %p999 = pneg %p494
        %p1000 = pneg %p491
        %s1001 = smul.u32 4, %s38
        %s1002 = smul.u32 4, %s38
        %s1003 = smul.u32 2, %s38
        %p1005 = scmp.eq.s32.totalorder %s39, 0
        // Predicated region
        $region149: #{vit_feature_extractor.1} parent=83 // pred_check
          %p1006 = pneg %p1005
        $region150: #{vit_feature_extractor.1} parent=83 // pred_check_branch
          %1008 = sbr.rel (%p1006) target = $region152
        $region151: #{vit_feature_extractor.1} parent=83 // pred_region
          %v1009 = vld [vmem:[#allocation3] sm:$0xff]
          %v1010 = vld [vmem:[#allocation3 + $0x8] sm:$0xff]
          %v1011 = vld [vmem:[#allocation3 + $0x10] sm:$0xff]
          %v1012 = vld [vmem:[#allocation3 + $0x18] sm:$0xff]
          %v1013 = vld [vmem:[#allocation8] sm:$0xf]
          %v1014 = vld [vmem:[#allocation8 + $0x4] sm:$0xf]
          %v1015 = vld [vmem:[#allocation8 + $0x8] sm:$0xf]
          %v1016 = vld [vmem:[#allocation8 + $0xc] sm:$0xf]
          %v1017 = vld [vmem:[#allocation8 + $0x10] sm:$0xf]
          %v1018 = vld [vmem:[#allocation8 + $0x14] sm:$0xf]
          %v1019 = vld [vmem:[#allocation8 + $0x18] sm:$0xf]
          %v1020 = vld [vmem:[#allocation8 + $0x1c] sm:$0xf]
          %v1021 = vld [vmem:[#allocation8 + $0x20] sm:$0xf]
          %v1022 = vld [vmem:[#allocation8 + $0x24] sm:$0xf]
          %v1023 = vld [vmem:[#allocation8 + $0x28] sm:$0xf]
          %v1024 = vld [vmem:[#allocation8 + $0x2c] sm:$0xf]
          %v1025 = vld [vmem:[#allocation8 + $0x30] sm:$0xf]
          %v1026 = vld [vmem:[#allocation8 + $0x34] sm:$0xf]
          %v1027 = vld [vmem:[#allocation8 + $0x38] sm:$0xf]
          %v1028 = vld [vmem:[#allocation8 + $0x3c] sm:$0xf]
          %v1029 = vpack.c.bf16 %v1010, %v1009
          %v1030 = vpack.c.bf16 %v1012, %v1011
          %v1031 = vld [vmem:[#allocation9] sm:$0x1]
          %v1033 = vlaneseq
          %v1034 = vshrl.u32 %v1033, 7
          %v1035 = vsub.s32 0, %v1034
          %v1036 = vrot.slane %v1031, %v1035
          %v1054 = vunpack.c.l.b16 %v1013
          %v1055 = vunpack.c.l.b16 %v1014
          %v1056 = vunpack.c.l.b16 %v1015
          %v1057 = vunpack.c.l.b16 %v1016
          %v1058 = vunpack.c.l.b16 %v1017
          %v1059 = vunpack.c.l.b16 %v1018
          %v1060 = vunpack.c.l.b16 %v1019
          %v1061 = vunpack.c.l.b16 %v1020
          %v1062 = vunpack.c.l.b16 %v1021
          %v1063 = vunpack.c.l.b16 %v1022
          %v1064 = vunpack.c.l.b16 %v1023
          %v1065 = vunpack.c.l.b16 %v1024
          %v1066 = vunpack.c.l.b16 %v1025
          %v1067 = vunpack.c.l.b16 %v1026
          %v1068 = vunpack.c.l.b16 %v1027
          %v1069 = vunpack.c.l.b16 %v1028
          %v1070 = vpack.c.b16 %v1055, %v1054
          %v1071 = vpack.c.b16 %v1057, %v1056
          %v1072 = vpack.c.b16 %v1059, %v1058
          %v1073 = vpack.c.b16 %v1061, %v1060
          %v1074 = vpack.c.b16 %v1063, %v1062
          %v1075 = vpack.c.b16 %v1065, %v1064
          %v1076 = vpack.c.b16 %v1067, %v1066
          %v1077 = vpack.c.b16 %v1069, %v1068
          %1086 = vmatprep.subr.bf16.mxu0 0
          %1087 = vmatpush1.bf16.msra.mxu0 %v1070
          %1088 = vmatprep.subr.bf16.mxu0 0
          %1089 = vmatpush1.bf16.msra.mxu0 %v1071
          %1090 = vmatprep.subr.bf16.mxu0 0
          %1091 = vmatpush1.bf16.msra.mxu0 %v1072
          %1092 = vmatprep.subr.bf16.mxu0 0
          %1093 = vmatpush1.bf16.msra.mxu0 %v1073
          %1094 = vmatprep.subr.bf16.mxu0 0
          %1095 = vmatpush1.bf16.msra.mxu0 %v1074
          %1096 = vmatprep.subr.bf16.mxu0 0
          %1097 = vmatpush1.bf16.msra.mxu0 %v1075
          %1098 = vmatprep.subr.bf16.mxu0 0
          %1099 = vmatpush1.bf16.msra.mxu0 %v1076
          %1100 = vmatprep.subr.bf16.mxu0 0
          %1101 = vmatpush1.bf16.msra.mxu0 %v1077
          %1102 = vmatprep.subr.bf16.mxu0 0
          %1103 = vmatpush1.bf16.msra.mxu0 0
          %1104 = vmatprep.subr.bf16.mxu0 0
          %1105 = vmatpush1.bf16.msra.mxu0 0
          %1106 = vmatprep.subr.bf16.mxu0 0
          %1107 = vmatpush1.bf16.msra.mxu0 0
          %1108 = vmatprep.subr.bf16.mxu0 0
          %1109 = vmatpush1.bf16.msra.mxu0 0
          %1110 = vmatprep.subr.bf16.mxu0 0
          %1111 = vmatpush1.bf16.msra.mxu0 0
          %1112 = vmatprep.subr.bf16.mxu0 0
          %1113 = vmatpush1.bf16.msra.mxu0 0
          %1114 = vmatprep.subr.bf16.mxu0 0
          %1115 = vmatpush1.bf16.msra.mxu0 0
          %1116 = vmatprep.subr.bf16.mxu0 0
          %1117 = vmatpush1.bf16.msra.mxu0 0
          %1118 = vmatprep.mubr.bf16.mxu0 0
          %1119 = vmatmul.mubr.bf16.gmra.mrb[0].mxu0 %v1029
          %v1120 = vpop.f32.mrb[0].mxu0
          %v1121 = vadd.f32 %v1036, %v1120
          %v1122 = vpop.f32.mrb[0].mxu0
          %v1123 = vpop.f32.mrb[0].mxu0
          %v1124 = vadd.f32 %v1036, %v1123
          %v1125 = vpop.f32.mrb[0].mxu0
          %1126 = vmatprep.mubr.bf16.mxu0 0
          %1127 = vmatmul.mubr.bf16.gmra.mrb[0].mxu0 %v1030
          %v1128 = vpop.f32.mrb[0].mxu0
          %v1129 = vadd.f32 %v1036, %v1128
          %v1130 = vpop.f32.mrb[0].mxu0
          %v1131 = vpop.f32.mrb[0].mxu0
          %v1132 = vadd.f32 %v1036, %v1131
          %v1133 = vpop.f32.mrb[0].mxu0
          %1134 = vdwg.mxu0
          %v1135 = vld [vmem:[#allocation6] sm:$0xff]
          %v1136 = vld [vmem:[#allocation6 + $0x8] sm:$0xff]
          %v1137 = vadd.f32 %v1121, %v1135
          %v1138 = vadd.f32 %v1124, %v1136
          %v1139 = vadd.f32 %v1129, %v1135
          %v1140 = vadd.f32 %v1132, %v1136
          %1141 = vst [vmem:[#allocation2] sm:$0xff] %v1137
          %1142 = vst [vmem:[#allocation2 + $0x8] sm:$0xff] %v1138
          %1143 = vst [vmem:[#allocation2 + $0x10] sm:$0xff] %v1139
          %1144 = vst [vmem:[#allocation2 + $0x18] sm:$0xff] %v1140
        $region152: #{vit_feature_extractor.1} parent=83 // pred_fallthru
          _
        %v1145 = vld [vmem:[#allocation2] sm:$0xff]
        %v1146 = vld [vmem:[#allocation2 + $0x8] sm:$0xff]
        %v1147 = vld [vmem:[#allocation2 + $0x10] sm:$0xff]
        %v1148 = vld [vmem:[#allocation2 + $0x18] sm:$0xff]
        %v1149 = vld [vmem:[%s814] sm:$0x1]
        %v1150 = vld [vmem:[%s822] sm:$0x1]
        %1151 = vadd.xlane.f32.xlu0 %v1145
        %v1152 = vpop.xlane.xlu0 %1151
        %1153 = vadd.xlane.f32.xlu0 %v1146
        %v1154 = vpop.xlane.xlu0 %1153
        %1155 = vadd.xlane.f32.xlu0 %v1147
        %v1156 = vpop.xlane.xlu0 %1155
        %1157 = vadd.xlane.f32.xlu0 %v1148
        %v1158 = vpop.xlane.xlu0 %1157
        %v1159 = vmul.f32 %v1145, %v1145
        %v1160 = vmul.f32 %v1146, %v1146
        %v1161 = vmul.f32 %v1147, %v1147
        %v1162 = vmul.f32 %v1148, %v1148
        %1163 = vadd.xlane.f32.xlu0 %v1159
        %v1164 = vpop.xlane.xlu0 %1163
        %1165 = vadd.xlane.f32.xlu0 %v1160
        %v1166 = vpop.xlane.xlu0 %1165
        %1167 = vadd.xlane.f32.xlu0 %v1161
        %v1168 = vpop.xlane.xlu0 %1167
        %1169 = vadd.xlane.f32.xlu0 %v1162
        %v1170 = vpop.xlane.xlu0 %1169
        %v1171 = vmul.f32 %v1152, 0.03125
        %v1172 = vmul.f32 %v1154, 0.03125
        %v1173 = vmul.f32 %v1156, 0.03125
        %v1174 = vmul.f32 %v1158, 0.03125
        %v1175 = vmul.f32 %v1164, 0.03125
        %v1176 = vmul.f32 %v1166, 0.03125
        %v1177 = vmul.f32 %v1168, 0.03125
        %v1178 = vmul.f32 %v1170, 0.03125
        %v1179 = vmul.f32 %v1171, %v1171
        %v1180 = vmul.f32 %v1172, %v1172
        %v1181 = vmul.f32 %v1173, %v1173
        %v1182 = vmul.f32 %v1174, %v1174
        %v1183 = vsub.f32 %v1175, %v1179
        %v1184 = vsub.f32 %v1176, %v1180
        %v1185 = vsub.f32 %v1177, %v1181
        %v1186 = vsub.f32 %v1178, %v1182
        %v1187 = vsub.f32 %v1145, %v1171
        %v1188 = vsub.f32 %v1146, %v1172
        %v1189 = vsub.f32 %v1147, %v1173
        %v1190 = vsub.f32 %v1148, %v1174
        %v1191 = vadd.f32 %v1183, 1e-05
        %v1192 = vadd.f32 %v1184, 1e-05
        %v1193 = vadd.f32 %v1185, 1e-05
        %v1194 = vadd.f32 %v1186, 1e-05
        %v1195 = vrsqrt.pop %v1191
        %v1196 = vrsqrt.pop %v1192
        %v1197 = vrsqrt.pop %v1193
        %v1198 = vrsqrt.pop %v1194
        %v1199 = vmul.f32 %v1187, %v1195
        %v1200 = vmul.f32 %v1188, %v1196
        %v1201 = vmul.f32 %v1189, %v1197
        %v1202 = vmul.f32 %v1190, %v1198
        %v1204 = vlaneseq
        %v1205 = vshrl.u32 %v1204, 7
        %v1206 = vsub.s32 0, %v1205
        %v1207 = vrot.slane %v1149, %v1206
        %v1209 = vmul.f32 %v1199, %v1207
        %v1210 = vmul.f32 %v1200, %v1207
        %v1211 = vmul.f32 %v1201, %v1207
        %v1212 = vmul.f32 %v1202, %v1207
        %v1214 = vlaneseq
        %v1215 = vshrl.u32 %v1214, 7
        %v1216 = vsub.s32 0, %v1215
        %v1217 = vrot.slane %v1150, %v1216
        %v1219 = vadd.f32 %v1209, %v1217
        %v1220 = vadd.f32 %v1210, %v1217
        %v1221 = vadd.f32 %v1211, %v1217
        %v1222 = vadd.f32 %v1212, %v1217
        %v1223 = vld [vmem:[%s831] sm:$0xff]
        %v1224 = vld [vmem:[%s831 + $0x8] sm:$0xff]
        %v1225 = vld [vmem:[%s831 + $0x10] sm:$0xff]
        %v1226 = vld [vmem:[%s831 + $0x18] sm:$0xff]
        %v1227 = vld [vmem:[%s831 + $0x20] sm:$0xff]
        %v1228 = vld [vmem:[%s831 + $0x28] sm:$0xff]
        %v1229 = vld [vmem:[%s831 + $0x30] sm:$0xff]
        %v1230 = vld [vmem:[%s831 + $0x38] sm:$0xff]
        %v1231 = vld [vmem:[%s831 + $0x40] sm:$0xff]
        %v1232 = vld [vmem:[%s831 + $0x48] sm:$0xff]
        %v1233 = vld [vmem:[%s831 + $0x50] sm:$0xff]
        %v1234 = vld [vmem:[%s831 + $0x58] sm:$0xff]
        %v1235 = vld [vmem:[%s831 + $0x60] sm:$0xff]
        %v1236 = vld [vmem:[%s831 + $0x68] sm:$0xff]
        %v1237 = vld [vmem:[%s831 + $0x70] sm:$0xff]
        %v1238 = vld [vmem:[%s831 + $0x78] sm:$0xff]
        %v1239 = vld [vmem:[%s831 + $0x80] sm:$0xff]
        %v1240 = vld [vmem:[%s831 + $0x88] sm:$0xff]
        %v1241 = vld [vmem:[%s831 + $0x90] sm:$0xff]
        %v1242 = vld [vmem:[%s831 + $0x98] sm:$0xff]
        %v1243 = vld [vmem:[%s831 + $0xa0] sm:$0xff]
        %v1244 = vld [vmem:[%s831 + $0xa8] sm:$0xff]
        %v1245 = vld [vmem:[%s831 + $0xb0] sm:$0xff]
        %v1246 = vld [vmem:[%s831 + $0xb8] sm:$0xff]
        %v1247 = vld [vmem:[%s831 + $0xc0] sm:$0xff]
        %v1248 = vld [vmem:[%s831 + $0xc8] sm:$0xff]
        %v1249 = vld [vmem:[%s831 + $0xd0] sm:$0xff]
        %v1250 = vld [vmem:[%s831 + $0xd8] sm:$0xff]
        %v1251 = vld [vmem:[%s831 + $0xe0] sm:$0xff]
        %v1252 = vld [vmem:[%s831 + $0xe8] sm:$0xff]
        %v1253 = vld [vmem:[%s831 + $0xf0] sm:$0xff]
        %v1254 = vld [vmem:[%s831 + $0xf8] sm:$0xff]
        %v1255 = vld [vmem:[%s831 + $0x100] sm:$0xff]
        %v1256 = vld [vmem:[%s831 + $0x108] sm:$0xff]
        %v1257 = vld [vmem:[%s831 + $0x110] sm:$0xff]
        %v1258 = vld [vmem:[%s831 + $0x118] sm:$0xff]
        %v1259 = vld [vmem:[%s831 + $0x120] sm:$0xff]
        %v1260 = vld [vmem:[%s831 + $0x128] sm:$0xff]
        %v1261 = vld [vmem:[%s831 + $0x130] sm:$0xff]
        %v1262 = vld [vmem:[%s831 + $0x138] sm:$0xff]
        %v1263 = vld [vmem:[%s831 + $0x140] sm:$0xff]
        %v1264 = vld [vmem:[%s831 + $0x148] sm:$0xff]
        %v1265 = vld [vmem:[%s831 + $0x150] sm:$0xff]
        %v1266 = vld [vmem:[%s831 + $0x158] sm:$0xff]
        %v1267 = vld [vmem:[%s831 + $0x160] sm:$0xff]
        %v1268 = vld [vmem:[%s831 + $0x168] sm:$0xff]
        %v1269 = vld [vmem:[%s831 + $0x170] sm:$0xff]
        %v1270 = vld [vmem:[%s831 + $0x178] sm:$0xff]
        %v1271 = vpack.c.bf16 %v1220, %v1219
        %v1272 = vpack.c.bf16 %v1222, %v1221
        %v1273 = vld [vmem:[%s840] sm:$0x3f]
        %v1275 = vlaneseq
        %v1276 = vshrl.u32 %v1275, 7
        %v1277 = vsub.s32 0, %v1276
        %v1278 = vrot.slane %v1273, %v1277
        %v1279 = vlaneseq
        %v1280 = vshrl.u32 %v1279, 7
        %v1281 = vsub.s32 1, %v1280
        %v1282 = vrot.slane %v1273, %v1281
        %v1283 = vlaneseq
        %v1284 = vshrl.u32 %v1283, 7
        %v1285 = vsub.s32 2, %v1284
        %v1286 = vrot.slane %v1273, %v1285
        %v1287 = vlaneseq
        %v1288 = vshrl.u32 %v1287, 7
        %v1289 = vsub.s32 3, %v1288
        %v1290 = vrot.slane %v1273, %v1289
        %v1291 = vlaneseq
        %v1292 = vshrl.u32 %v1291, 7
        %v1293 = vsub.s32 4, %v1292
        %v1294 = vrot.slane %v1273, %v1293
        %v1295 = vlaneseq
        %v1296 = vshrl.u32 %v1295, 7
        %v1297 = vsub.s32 5, %v1296
        %v1298 = vrot.slane %v1273, %v1297
        %v1353 = vunpack.c.l.b16 %v1223
        %v1354 = vunpack.c.h.b16 %v1223
        %v1355 = vunpack.c.l.b16 %v1224
        %v1356 = vunpack.c.h.b16 %v1224
        %v1357 = vunpack.c.l.b16 %v1225
        %v1358 = vunpack.c.h.b16 %v1225
        %v1359 = vunpack.c.l.b16 %v1226
        %v1360 = vunpack.c.h.b16 %v1226
        %v1361 = vunpack.c.l.b16 %v1227
        %v1362 = vunpack.c.h.b16 %v1227
        %v1363 = vunpack.c.l.b16 %v1228
        %v1364 = vunpack.c.h.b16 %v1228
        %v1365 = vunpack.c.l.b16 %v1229
        %v1366 = vunpack.c.h.b16 %v1229
        %v1367 = vunpack.c.l.b16 %v1230
        %v1368 = vunpack.c.h.b16 %v1230
        %v1369 = vunpack.c.l.b16 %v1231
        %v1370 = vunpack.c.h.b16 %v1231
        %v1371 = vunpack.c.l.b16 %v1232
        %v1372 = vunpack.c.h.b16 %v1232
        %v1373 = vunpack.c.l.b16 %v1233
        %v1374 = vunpack.c.h.b16 %v1233
        %v1375 = vunpack.c.l.b16 %v1234
        %v1376 = vunpack.c.h.b16 %v1234
        %v1377 = vunpack.c.l.b16 %v1235
        %v1378 = vunpack.c.h.b16 %v1235
        %v1379 = vunpack.c.l.b16 %v1236
        %v1380 = vunpack.c.h.b16 %v1236
        %v1381 = vunpack.c.l.b16 %v1237
        %v1382 = vunpack.c.h.b16 %v1237
        %v1383 = vunpack.c.l.b16 %v1238
        %v1384 = vunpack.c.h.b16 %v1238
        %v1385 = vunpack.c.l.b16 %v1239
        %v1386 = vunpack.c.h.b16 %v1239
        %v1387 = vunpack.c.l.b16 %v1240
        %v1388 = vunpack.c.h.b16 %v1240
        %v1389 = vunpack.c.l.b16 %v1241
        %v1390 = vunpack.c.h.b16 %v1241
        %v1391 = vunpack.c.l.b16 %v1242
        %v1392 = vunpack.c.h.b16 %v1242
        %v1393 = vunpack.c.l.b16 %v1243
        %v1394 = vunpack.c.h.b16 %v1243
        %v1395 = vunpack.c.l.b16 %v1244
        %v1396 = vunpack.c.h.b16 %v1244
        %v1397 = vunpack.c.l.b16 %v1245
        %v1398 = vunpack.c.h.b16 %v1245
        %v1399 = vunpack.c.l.b16 %v1246
        %v1400 = vunpack.c.h.b16 %v1246
        %v1401 = vunpack.c.l.b16 %v1247
        %v1402 = vunpack.c.h.b16 %v1247
        %v1403 = vunpack.c.l.b16 %v1248
        %v1404 = vunpack.c.h.b16 %v1248
        %v1405 = vunpack.c.l.b16 %v1249
        %v1406 = vunpack.c.h.b16 %v1249
        %v1407 = vunpack.c.l.b16 %v1250
        %v1408 = vunpack.c.h.b16 %v1250
        %v1409 = vunpack.c.l.b16 %v1251
        %v1410 = vunpack.c.h.b16 %v1251
        %v1411 = vunpack.c.l.b16 %v1252
        %v1412 = vunpack.c.h.b16 %v1252
        %v1413 = vunpack.c.l.b16 %v1253
        %v1414 = vunpack.c.h.b16 %v1253
        %v1415 = vunpack.c.l.b16 %v1254
        %v1416 = vunpack.c.h.b16 %v1254
        %v1417 = vunpack.c.l.b16 %v1255
        %v1418 = vunpack.c.h.b16 %v1255
        %v1419 = vunpack.c.l.b16 %v1256
        %v1420 = vunpack.c.h.b16 %v1256
        %v1421 = vunpack.c.l.b16 %v1257
        %v1422 = vunpack.c.h.b16 %v1257
        %v1423 = vunpack.c.l.b16 %v1258
        %v1424 = vunpack.c.h.b16 %v1258
        %v1425 = vunpack.c.l.b16 %v1259
        %v1426 = vunpack.c.h.b16 %v1259
        %v1427 = vunpack.c.l.b16 %v1260
        %v1428 = vunpack.c.h.b16 %v1260
        %v1429 = vunpack.c.l.b16 %v1261
        %v1430 = vunpack.c.h.b16 %v1261
        %v1431 = vunpack.c.l.b16 %v1262
        %v1432 = vunpack.c.h.b16 %v1262
        %v1433 = vunpack.c.l.b16 %v1263
        %v1434 = vunpack.c.h.b16 %v1263
        %v1435 = vunpack.c.l.b16 %v1264
        %v1436 = vunpack.c.h.b16 %v1264
        %v1437 = vunpack.c.l.b16 %v1265
        %v1438 = vunpack.c.h.b16 %v1265
        %v1439 = vunpack.c.l.b16 %v1266
        %v1440 = vunpack.c.h.b16 %v1266
        %v1441 = vunpack.c.l.b16 %v1267
        %v1442 = vunpack.c.h.b16 %v1267
        %v1443 = vunpack.c.l.b16 %v1268
        %v1444 = vunpack.c.h.b16 %v1268
        %v1445 = vunpack.c.l.b16 %v1269
        %v1446 = vunpack.c.h.b16 %v1269
        %v1447 = vunpack.c.l.b16 %v1270
        %v1448 = vunpack.c.h.b16 %v1270
        %v1449 = vpack.c.b16 %v1359, %v1353
        %v1450 = vpack.c.b16 %v1360, %v1354
        %v1451 = vpack.c.b16 %v1361, %v1355
        %v1452 = vpack.c.b16 %v1362, %v1356
        %v1453 = vpack.c.b16 %v1363, %v1357
        %v1454 = vpack.c.b16 %v1364, %v1358
        %v1455 = vpack.c.b16 %v1371, %v1365
        %v1456 = vpack.c.b16 %v1372, %v1366
        %v1457 = vpack.c.b16 %v1373, %v1367
        %v1458 = vpack.c.b16 %v1374, %v1368
        %v1459 = vpack.c.b16 %v1375, %v1369
        %v1460 = vpack.c.b16 %v1376, %v1370
        %v1461 = vpack.c.b16 %v1383, %v1377
        %v1462 = vpack.c.b16 %v1384, %v1378
        %v1463 = vpack.c.b16 %v1385, %v1379
        %v1464 = vpack.c.b16 %v1386, %v1380
        %v1465 = vpack.c.b16 %v1387, %v1381
        %v1466 = vpack.c.b16 %v1388, %v1382
        %v1467 = vpack.c.b16 %v1395, %v1389
        %v1468 = vpack.c.b16 %v1396, %v1390
        %v1469 = vpack.c.b16 %v1397, %v1391
        %v1470 = vpack.c.b16 %v1398, %v1392
        %v1471 = vpack.c.b16 %v1399, %v1393
        %v1472 = vpack.c.b16 %v1400, %v1394
        %v1473 = vpack.c.b16 %v1407, %v1401
        %v1474 = vpack.c.b16 %v1408, %v1402
        %v1475 = vpack.c.b16 %v1409, %v1403
        %v1476 = vpack.c.b16 %v1410, %v1404
        %v1477 = vpack.c.b16 %v1411, %v1405
        %v1478 = vpack.c.b16 %v1412, %v1406
        %v1479 = vpack.c.b16 %v1419, %v1413
        %v1480 = vpack.c.b16 %v1420, %v1414
        %v1481 = vpack.c.b16 %v1421, %v1415
        %v1482 = vpack.c.b16 %v1422, %v1416
        %v1483 = vpack.c.b16 %v1423, %v1417
        %v1484 = vpack.c.b16 %v1424, %v1418
        %v1485 = vpack.c.b16 %v1431, %v1425
        %v1486 = vpack.c.b16 %v1432, %v1426
        %v1487 = vpack.c.b16 %v1433, %v1427
        %v1488 = vpack.c.b16 %v1434, %v1428
        %v1489 = vpack.c.b16 %v1435, %v1429
        %v1490 = vpack.c.b16 %v1436, %v1430
        %v1491 = vpack.c.b16 %v1443, %v1437
        %v1492 = vpack.c.b16 %v1444, %v1438
        %v1493 = vpack.c.b16 %v1445, %v1439
        %v1494 = vpack.c.b16 %v1446, %v1440
        %v1495 = vpack.c.b16 %v1447, %v1441
        %v1496 = vpack.c.b16 %v1448, %v1442
        %1545 = vmatprep.subr.bf16.mxu0 %v1450
        %1546 = vmatpush1.bf16.msra.mxu0 %v1449
        %1547 = vmatprep.subr.bf16.mxu0 %v1456
        %1548 = vmatpush1.bf16.msra.mxu0 %v1455
        %1549 = vmatprep.subr.bf16.mxu0 %v1462
        %1550 = vmatpush1.bf16.msra.mxu0 %v1461
        %1551 = vmatprep.subr.bf16.mxu0 %v1468
        %1552 = vmatpush1.bf16.msra.mxu0 %v1467
        %1553 = vmatprep.subr.bf16.mxu0 %v1474
        %1554 = vmatpush1.bf16.msra.mxu0 %v1473
        %1555 = vmatprep.subr.bf16.mxu0 %v1480
        %1556 = vmatpush1.bf16.msra.mxu0 %v1479
        %1557 = vmatprep.subr.bf16.mxu0 %v1486
        %1558 = vmatpush1.bf16.msra.mxu0 %v1485
        %1559 = vmatprep.subr.bf16.mxu0 %v1492
        %1560 = vmatpush1.bf16.msra.mxu0 %v1491
        %1561 = vmatprep.subr.bf16.mxu0 0
        %1562 = vmatpush1.bf16.msra.mxu0 0
        %1563 = vmatprep.subr.bf16.mxu0 0
        %1564 = vmatpush1.bf16.msra.mxu0 0
        %1565 = vmatprep.subr.bf16.mxu0 0
        %1566 = vmatpush1.bf16.msra.mxu0 0
        %1567 = vmatprep.subr.bf16.mxu0 0
        %1568 = vmatpush1.bf16.msra.mxu0 0
        %1569 = vmatprep.subr.bf16.mxu0 0
        %1570 = vmatpush1.bf16.msra.mxu0 0
        %1571 = vmatprep.subr.bf16.mxu0 0
        %1572 = vmatpush1.bf16.msra.mxu0 0
        %1573 = vmatprep.subr.bf16.mxu0 0
        %1574 = vmatpush1.bf16.msra.mxu0 0
        %1575 = vmatprep.subr.bf16.mxu0 0
        %1576 = vmatpush1.bf16.msra.mxu0 0
        %1577 = vmatprep.mubr.bf16.mxu0 0
        %1578 = vmatmul.mubr.bf16.gmra.mrb[0].mxu0 %v1271
        %v1579 = vpop.f32.mrb[0].mxu0
        %v1580 = vadd.f32 %v1278, %v1579
        %v1581 = vpop.f32.mrb[0].mxu0
        %v1582 = vadd.f32 %v1282, %v1581
        %v1583 = vpop.f32.mrb[0].mxu0
        %v1584 = vadd.f32 %v1278, %v1583
        %v1585 = vpop.f32.mrb[0].mxu0
        %v1586 = vadd.f32 %v1282, %v1585
        %1587 = vmatprep.mubr.bf16.mxu0 0
        %1588 = vmatmul.mubr.bf16.gmra.mrb[0].mxu0 %v1272
        %v1589 = vpop.f32.mrb[0].mxu0
        %v1590 = vadd.f32 %v1278, %v1589
        %v1591 = vpop.f32.mrb[0].mxu0
        %v1592 = vadd.f32 %v1282, %v1591
        %v1593 = vpop.f32.mrb[0].mxu0
        %v1594 = vadd.f32 %v1278, %v1593
        %v1595 = vpop.f32.mrb[0].mxu0
        %v1596 = vadd.f32 %v1282, %v1595
        %1597 = vdwg.mxu0
        %1598 = vmatprep.subr.bf16.mxu0 %v1452
        %1599 = vmatpush1.bf16.msra.mxu0 %v1451
        %1600 = vmatprep.subr.bf16.mxu0 %v1458
        %1601 = vmatpush1.bf16.msra.mxu0 %v1457
        %1602 = vmatprep.subr.bf16.mxu0 %v1464
        %1603 = vmatpush1.bf16.msra.mxu0 %v1463
        %1604 = vmatprep.subr.bf16.mxu0 %v1470
        %1605 = vmatpush1.bf16.msra.mxu0 %v1469
        %1606 = vmatprep.subr.bf16.mxu0 %v1476
        %1607 = vmatpush1.bf16.msra.mxu0 %v1475
        %1608 = vmatprep.subr.bf16.mxu0 %v1482
        %1609 = vmatpush1.bf16.msra.mxu0 %v1481
        %1610 = vmatprep.subr.bf16.mxu0 %v1488
        %1611 = vmatpush1.bf16.msra.mxu0 %v1487
        %1612 = vmatprep.subr.bf16.mxu0 %v1494
        %1613 = vmatpush1.bf16.msra.mxu0 %v1493
        %1614 = vmatprep.subr.bf16.mxu0 0
        %1615 = vmatpush1.bf16.msra.mxu0 0
        %1616 = vmatprep.subr.bf16.mxu0 0
        %1617 = vmatpush1.bf16.msra.mxu0 0
        %1618 = vmatprep.subr.bf16.mxu0 0
        %1619 = vmatpush1.bf16.msra.mxu0 0
        %1620 = vmatprep.subr.bf16.mxu0 0
        %1621 = vmatpush1.bf16.msra.mxu0 0
        %1622 = vmatprep.subr.bf16.mxu0 0
        %1623 = vmatpush1.bf16.msra.mxu0 0
        %1624 = vmatprep.subr.bf16.mxu0 0
        %1625 = vmatpush1.bf16.msra.mxu0 0
        %1626 = vmatprep.subr.bf16.mxu0 0
        %1627 = vmatpush1.bf16.msra.mxu0 0
        %1628 = vmatprep.subr.bf16.mxu0 0
        %1629 = vmatpush1.bf16.msra.mxu0 0
        %1630 = vmatprep.mubr.bf16.mxu0 0
        %1631 = vmatmul.mubr.bf16.gmra.mrb[0].mxu0 %v1271
        %v1632 = vpop.f32.mrb[0].mxu0
        %v1633 = vadd.f32 %v1286, %v1632
        %v1634 = vpop.f32.mrb[0].mxu0
        %v1635 = vadd.f32 %v1290, %v1634
        %v1636 = vpop.f32.mrb[0].mxu0
        %v1637 = vadd.f32 %v1286, %v1636
        %v1638 = vpop.f32.mrb[0].mxu0
        %v1639 = vadd.f32 %v1290, %v1638
        %1640 = vmatprep.mubr.bf16.mxu0 0
        %1641 = vmatmul.mubr.bf16.gmra.mrb[0].mxu0 %v1272
        %v1642 = vpop.f32.mrb[0].mxu0
        %v1643 = vadd.f32 %v1286, %v1642
        %v1644 = vpop.f32.mrb[0].mxu0
        %v1645 = vadd.f32 %v1290, %v1644
        %v1646 = vpop.f32.mrb[0].mxu0
        %v1647 = vadd.f32 %v1286, %v1646
        %v1648 = vpop.f32.mrb[0].mxu0
        %v1649 = vadd.f32 %v1290, %v1648
        %1650 = vdwg.mxu0
        %1651 = vmatprep.subr.bf16.mxu0 %v1454
        %1652 = vmatpush1.bf16.msra.mxu0 %v1453
        %1653 = vmatprep.subr.bf16.mxu0 %v1460
        %1654 = vmatpush1.bf16.msra.mxu0 %v1459
        %1655 = vmatprep.subr.bf16.mxu0 %v1466
        %1656 = vmatpush1.bf16.msra.mxu0 %v1465
        %1657 = vmatprep.subr.bf16.mxu0 %v1472
        %1658 = vmatpush1.bf16.msra.mxu0 %v1471
        %1659 = vmatprep.subr.bf16.mxu0 %v1478
        %1660 = vmatpush1.bf16.msra.mxu0 %v1477
        %1661 = vmatprep.subr.bf16.mxu0 %v1484
        %1662 = vmatpush1.bf16.msra.mxu0 %v1483
        %1663 = vmatprep.subr.bf16.mxu0 %v1490
        %1664 = vmatpush1.bf16.msra.mxu0 %v1489
        %1665 = vmatprep.subr.bf16.mxu0 %v1496
        %1666 = vmatpush1.bf16.msra.mxu0 %v1495
        %1667 = vmatprep.subr.bf16.mxu0 0
        %1668 = vmatpush1.bf16.msra.mxu0 0
        %1669 = vmatprep.subr.bf16.mxu0 0
        %1670 = vmatpush1.bf16.msra.mxu0 0
        %1671 = vmatprep.subr.bf16.mxu0 0
        %1672 = vmatpush1.bf16.msra.mxu0 0
        %1673 = vmatprep.subr.bf16.mxu0 0
        %1674 = vmatpush1.bf16.msra.mxu0 0
        %1675 = vmatprep.subr.bf16.mxu0 0
        %1676 = vmatpush1.bf16.msra.mxu0 0
        %1677 = vmatprep.subr.bf16.mxu0 0
        %1678 = vmatpush1.bf16.msra.mxu0 0
        %1679 = vmatprep.subr.bf16.mxu0 0
        %1680 = vmatpush1.bf16.msra.mxu0 0
        %1681 = vmatprep.subr.bf16.mxu0 0
        %1682 = vmatpush1.bf16.msra.mxu0 0
        %1683 = vmatprep.mubr.bf16.mxu0 0
        %1684 = vmatmul.mubr.bf16.gmra.mrb[0].mxu0 %v1271
        %v1685 = vpop.f32.mrb[0].mxu0
        %v1686 = vadd.f32 %v1294, %v1685
        %v1687 = vpop.f32.mrb[0].mxu0
        %v1688 = vadd.f32 %v1298, %v1687
        %v1689 = vpop.f32.mrb[0].mxu0
        %v1690 = vadd.f32 %v1294, %v1689
        %v1691 = vpop.f32.mrb[0].mxu0
        %v1692 = vadd.f32 %v1298, %v1691
        %1693 = vmatprep.mubr.bf16.mxu0 0
        %1694 = vmatmul.mubr.bf16.gmra.mrb[0].mxu0 %v1272
        %v1695 = vpop.f32.mrb[0].mxu0
        %v1696 = vadd.f32 %v1294, %v1695
        %v1697 = vpop.f32.mrb[0].mxu0
        %v1698 = vadd.f32 %v1298, %v1697
        %v1699 = vpop.f32.mrb[0].mxu0
        %v1700 = vadd.f32 %v1294, %v1699
        %v1701 = vpop.f32.mrb[0].mxu0
        %v1702 = vadd.f32 %v1298, %v1701
        %1703 = vdwg.mxu0
        %v1704 = vld [vmem:[%s849] sm:$0xf]
        %v1705 = vld [vmem:[%s849 + $0x4] sm:$0xf]
        %v1706 = vld [vmem:[%s849 + $0x8] sm:$0xf]
        %v1707 = vld [vmem:[%s849 + $0xc] sm:$0xf]
        %v1708 = vld [vmem:[%s849 + $0x10] sm:$0xf]
        %v1709 = vld [vmem:[%s849 + $0x14] sm:$0xf]
        %v1710 = vld [vmem:[%s849 + $0x18] sm:$0xf]
        %v1711 = vld [vmem:[%s849 + $0x1c] sm:$0xf]
        %v1712 = vld [vmem:[%s849 + $0x20] sm:$0xf]
        %v1713 = vld [vmem:[%s849 + $0x24] sm:$0xf]
        %v1714 = vld [vmem:[%s849 + $0x28] sm:$0xf]
        %v1715 = vld [vmem:[%s849 + $0x2c] sm:$0xf]
        %v1716 = vld [vmem:[%s849 + $0x30] sm:$0xf]
        %v1717 = vld [vmem:[%s849 + $0x34] sm:$0xf]
        %v1718 = vld [vmem:[%s849 + $0x38] sm:$0xf]
        %v1719 = vld [vmem:[%s849 + $0x3c] sm:$0xf]
        %v1720 = vld [vmem:[%s849 + $0x40] sm:$0xf]
        %v1721 = vld [vmem:[%s849 + $0x44] sm:$0xf]
        %v1722 = vld [vmem:[%s849 + $0x48] sm:$0xf]
        %v1723 = vld [vmem:[%s849 + $0x4c] sm:$0xf]
        %v1724 = vld [vmem:[%s849 + $0x50] sm:$0xf]
        %v1725 = vld [vmem:[%s849 + $0x54] sm:$0xf]
        %v1726 = vld [vmem:[%s849 + $0x58] sm:$0xf]
        %v1727 = vld [vmem:[%s849 + $0x5c] sm:$0xf]
        %v1728 = vld [vmem:[%s849 + $0x60] sm:$0xf]
        %v1729 = vld [vmem:[%s849 + $0x64] sm:$0xf]
        %v1730 = vld [vmem:[%s849 + $0x68] sm:$0xf]
        %v1731 = vld [vmem:[%s849 + $0x6c] sm:$0xf]
        %v1732 = vld [vmem:[%s849 + $0x70] sm:$0xf]
        %v1733 = vld [vmem:[%s849 + $0x74] sm:$0xf]
        %v1734 = vld [vmem:[%s849 + $0x78] sm:$0xf]
        %v1735 = vld [vmem:[%s849 + $0x7c] sm:$0xf]
        %v1736 = vpack.c.bf16 %v1584, %v1580
        %v1737 = vpack.c.bf16 %v1594, %v1590
        %v1738 = vpack.c.bf16 %v1637, %v1633
        %v1739 = vpack.c.bf16 %v1647, %v1643
        %1740 = vmatprep.subr.bf16.mxu0 0
        %1741 = vmatpush1.bf16.xpose.msra.mxu0 %v1738
        %1742 = vmatprep.subr.bf16.mxu0 0
        %1743 = vmatpush1.bf16.xpose.msra.mxu0 0
        %1744 = vmatprep.subr.bf16.mxu0 0
        %1745 = vmatpush1.bf16.xpose.msra.mxu0 0
        %1746 = vmatprep.subr.bf16.mxu0 0
        %1747 = vmatpush1.bf16.xpose.msra.mxu0 0
        %1748 = vmatprep.subr.bf16.mxu0 0
        %1749 = vmatpush1.bf16.xpose.msra.mxu0 0
        %1750 = vmatprep.subr.bf16.mxu0 0
        %1751 = vmatpush1.bf16.xpose.msra.mxu0 0
        %1752 = vmatprep.subr.bf16.mxu0 0
        %1753 = vmatpush1.bf16.xpose.msra.mxu0 0
        %1754 = vmatprep.subr.bf16.mxu0 0
        %1755 = vmatpush1.bf16.xpose.msra.mxu0 0
        %1756 = vmatprep.subr.bf16.mxu0 0
        %1757 = vmatpush1.bf16.xpose.msra.mxu0 0
        %1758 = vmatprep.subr.bf16.mxu0 0
        %1759 = vmatpush1.bf16.xpose.msra.mxu0 0
        %1760 = vmatprep.subr.bf16.mxu0 0
        %1761 = vmatpush1.bf16.xpose.msra.mxu0 0
        %1762 = vmatprep.subr.bf16.mxu0 0
        %1763 = vmatpush1.bf16.xpose.msra.mxu0 0
        %1764 = vmatprep.subr.bf16.mxu0 0
        %1765 = vmatpush1.bf16.xpose.msra.mxu0 0
        %1766 = vmatprep.subr.bf16.mxu0 0
        %1767 = vmatpush1.bf16.xpose.msra.mxu0 0
        %1768 = vmatprep.subr.bf16.mxu0 0
        %1769 = vmatpush1.bf16.xpose.msra.mxu0 0
        %1770 = vmatprep.subr.bf16.mxu0 0
        %1771 = vmatpush1.bf16.xpose.msra.mxu0 0
        %1772 = vmatprep.mubr.bf16.mxu0 0
        %1773 = vmatmul.mubr.bf16.gmra.mrb[0].mxu0 %v1736
        %v1774 = vpop.f32.mrb[0].mxu0
        %v1775 = vadd.f32 0.0, %v1774
        %v1776 = vpop.f32.mrb[0].mxu0
        %v1777 = vpop.f32.mrb[0].mxu0
        %v1778 = vadd.f32 0.0, %v1777
        %v1779 = vpop.f32.mrb[0].mxu0
        %1780 = vdwg.mxu0
        %1781 = vmatprep.subr.bf16.mxu0 0
        %1782 = vmatpush1.bf16.xpose.msra.mxu0 %v1739
        %1783 = vmatprep.subr.bf16.mxu0 0
        %1784 = vmatpush1.bf16.xpose.msra.mxu0 0
        %1785 = vmatprep.subr.bf16.mxu0 0
        %1786 = vmatpush1.bf16.xpose.msra.mxu0 0
        %1787 = vmatprep.subr.bf16.mxu0 0
        %1788 = vmatpush1.bf16.xpose.msra.mxu0 0
        %1789 = vmatprep.subr.bf16.mxu0 0
        %1790 = vmatpush1.bf16.xpose.msra.mxu0 0
        %1791 = vmatprep.subr.bf16.mxu0 0
        %1792 = vmatpush1.bf16.xpose.msra.mxu0 0
        %1793 = vmatprep.subr.bf16.mxu0 0
        %1794 = vmatpush1.bf16.xpose.msra.mxu0 0
        %1795 = vmatprep.subr.bf16.mxu0 0
        %1796 = vmatpush1.bf16.xpose.msra.mxu0 0
        %1797 = vmatprep.subr.bf16.mxu0 0
        %1798 = vmatpush1.bf16.xpose.msra.mxu0 0
        %1799 = vmatprep.subr.bf16.mxu0 0
        %1800 = vmatpush1.bf16.xpose.msra.mxu0 0
        %1801 = vmatprep.subr.bf16.mxu0 0
        %1802 = vmatpush1.bf16.xpose.msra.mxu0 0
        %1803 = vmatprep.subr.bf16.mxu0 0
        %1804 = vmatpush1.bf16.xpose.msra.mxu0 0
        %1805 = vmatprep.subr.bf16.mxu0 0
        %1806 = vmatpush1.bf16.xpose.msra.mxu0 0
        %1807 = vmatprep.subr.bf16.mxu0 0
        %1808 = vmatpush1.bf16.xpose.msra.mxu0 0
        %1809 = vmatprep.subr.bf16.mxu0 0
        %1810 = vmatpush1.bf16.xpose.msra.mxu0 0
        %1811 = vmatprep.subr.bf16.mxu0 0
        %1812 = vmatpush1.bf16.xpose.msra.mxu0 0
        %1813 = vmatprep.mubr.bf16.mxu0 0
        %1814 = vmatmul.mubr.bf16.gmra.mrb[0].mxu0 %v1737
        %v1815 = vpop.f32.mrb[0].mxu0
        %v1816 = vadd.f32 0.0, %v1815
        %v1817 = vpop.f32.mrb[0].mxu0
        %v1818 = vpop.f32.mrb[0].mxu0
        %v1819 = vadd.f32 0.0, %v1818
        %v1820 = vpop.f32.mrb[0].mxu0
        %1821 = vdwg.mxu0
        %vm1822 = vcmask 130048
        %v1823 = vsel %vm1822, %v1775, -inf
        %1824 = vmax.xlane.f32.xlu0 %v1823
        %v1825 = vpop.xlane.xlu0 %1824
        %v1826 = vsel %vm1822, %v1778, -inf
        %1827 = vmax.xlane.f32.xlu0 %v1826
        %v1828 = vpop.xlane.xlu0 %1827
        %v1829 = vsel %vm1822, %v1816, -inf
        %1830 = vmax.xlane.f32.xlu0 %v1829
        %v1831 = vpop.xlane.xlu0 %1830
        %v1832 = vsel %vm1822, %v1819, -inf
        %1833 = vmax.xlane.f32.xlu0 %v1832
        %v1834 = vpop.xlane.xlu0 %1833
        %v1835 = vsub.f32 %v1775, %v1825
        %v1836 = vsub.f32 %v1778, %v1828
        %v1837 = vsub.f32 %v1816, %v1831
        %v1838 = vsub.f32 %v1819, %v1834
        %v1839 = vmul.f32 %v1835, 1.442695
        %v1840 = vpow.pop %v1839
        %v1841 = vmul.f32 %v1836, 1.442695
        %v1842 = vpow.pop %v1841
        %v1843 = vmul.f32 %v1837, 1.442695
        %v1844 = vpow.pop %v1843
        %v1845 = vmul.f32 %v1838, 1.442695
        %v1846 = vpow.pop %v1845
        %v1847 = vsel %vm1822, %v1840, 0.0
        %1848 = vadd.xlane.f32.xlu0 %v1847
        %v1849 = vpop.xlane.xlu0 %1848
        %v1850 = vsel %vm1822, %v1842, 0.0
        %1851 = vadd.xlane.f32.xlu0 %v1850
        %v1852 = vpop.xlane.xlu0 %1851
        %v1853 = vsel %vm1822, %v1844, 0.0
        %1854 = vadd.xlane.f32.xlu0 %v1853
        %v1855 = vpop.xlane.xlu0 %1854
        %v1856 = vsel %vm1822, %v1846, 0.0
        %1857 = vadd.xlane.f32.xlu0 %v1856
        %v1858 = vpop.xlane.xlu0 %1857
        %v1859 = vrcp.pop %v1849
        %v1860 = vrcp.pop %v1852
        %v1861 = vrcp.pop %v1855
        %v1862 = vrcp.pop %v1858
        %v1863 = vmul.f32 %v1840, %v1859
        %v1864 = vmul.f32 %v1842, %v1860
        %v1865 = vmul.f32 %v1844, %v1861
        %v1866 = vmul.f32 %v1846, %v1862
        %v1867 = vpack.c.bf16 %v1864, %v1863
        %v1868 = vpack.c.bf16 %v1866, %v1865
        %v1869 = vpack.c.bf16 %v1690, %v1686
        %v1870 = vpack.c.bf16 %v1700, %v1696
        %v1872 = vsel %vm1822, %v1867, 0
        %1874 = vmatprep.subr.bf16.mxu0 0
        %1875 = vmatpush1.bf16.msra.mxu0 %v1869
        %1876 = vmatprep.subr.bf16.mxu0 0
        %1877 = vmatpush1.bf16.msra.mxu0 0
        %1878 = vmatprep.subr.bf16.mxu0 0
        %1879 = vmatpush1.bf16.msra.mxu0 0
        %1880 = vmatprep.subr.bf16.mxu0 0
        %1881 = vmatpush1.bf16.msra.mxu0 0
        %1882 = vmatprep.subr.bf16.mxu0 0
        %1883 = vmatpush1.bf16.msra.mxu0 0
        %1884 = vmatprep.subr.bf16.mxu0 0
        %1885 = vmatpush1.bf16.msra.mxu0 0
        %1886 = vmatprep.subr.bf16.mxu0 0
        %1887 = vmatpush1.bf16.msra.mxu0 0
        %1888 = vmatprep.subr.bf16.mxu0 0
        %1889 = vmatpush1.bf16.msra.mxu0 0
        %1890 = vmatprep.subr.bf16.mxu0 0
        %1891 = vmatpush1.bf16.msra.mxu0 0
        %1892 = vmatprep.subr.bf16.mxu0 0
        %1893 = vmatpush1.bf16.msra.mxu0 0
        %1894 = vmatprep.subr.bf16.mxu0 0
        %1895 = vmatpush1.bf16.msra.mxu0 0
        %1896 = vmatprep.subr.bf16.mxu0 0
        %1897 = vmatpush1.bf16.msra.mxu0 0
        %1898 = vmatprep.subr.bf16.mxu0 0
        %1899 = vmatpush1.bf16.msra.mxu0 0
        %1900 = vmatprep.subr.bf16.mxu0 0
        %1901 = vmatpush1.bf16.msra.mxu0 0
        %1902 = vmatprep.subr.bf16.mxu0 0
        %1903 = vmatpush1.bf16.msra.mxu0 0
        %1904 = vmatprep.subr.bf16.mxu0 0
        %1905 = vmatpush1.bf16.msra.mxu0 0
        %1906 = vmatprep.mubr.bf16.mxu0 0
        %1907 = vmatmul.mubr.bf16.gmra.mrb[0].mxu0 %v1872
        %v1908 = vpop.f32.mrb[0].mxu0
        %v1909 = vadd.f32 0.0, %v1908
        %v1910 = vpop.f32.mrb[0].mxu0
        %v1911 = vpop.f32.mrb[0].mxu0
        %v1912 = vadd.f32 0.0, %v1911
        %v1913 = vpop.f32.mrb[0].mxu0
        %1914 = vdwg.mxu0
        %v1916 = vsel %vm1822, %v1868, 0
        %1918 = vmatprep.subr.bf16.mxu0 0
        %1919 = vmatpush1.bf16.msra.mxu0 %v1870
        %1920 = vmatprep.subr.bf16.mxu0 0
        %1921 = vmatpush1.bf16.msra.mxu0 0
        %1922 = vmatprep.subr.bf16.mxu0 0
        %1923 = vmatpush1.bf16.msra.mxu0 0
        %1924 = vmatprep.subr.bf16.mxu0 0
        %1925 = vmatpush1.bf16.msra.mxu0 0
        %1926 = vmatprep.subr.bf16.mxu0 0
        %1927 = vmatpush1.bf16.msra.mxu0 0
        %1928 = vmatprep.subr.bf16.mxu0 0
        %1929 = vmatpush1.bf16.msra.mxu0 0
        %1930 = vmatprep.subr.bf16.mxu0 0
        %1931 = vmatpush1.bf16.msra.mxu0 0
        %1932 = vmatprep.subr.bf16.mxu0 0
        %1933 = vmatpush1.bf16.msra.mxu0 0
        %1934 = vmatprep.subr.bf16.mxu0 0
        %1935 = vmatpush1.bf16.msra.mxu0 0
        %1936 = vmatprep.subr.bf16.mxu0 0
        %1937 = vmatpush1.bf16.msra.mxu0 0
        %1938 = vmatprep.subr.bf16.mxu0 0
        %1939 = vmatpush1.bf16.msra.mxu0 0
        %1940 = vmatprep.subr.bf16.mxu0 0
        %1941 = vmatpush1.bf16.msra.mxu0 0
        %1942 = vmatprep.subr.bf16.mxu0 0
        %1943 = vmatpush1.bf16.msra.mxu0 0
        %1944 = vmatprep.subr.bf16.mxu0 0
        %1945 = vmatpush1.bf16.msra.mxu0 0
        %1946 = vmatprep.subr.bf16.mxu0 0
        %1947 = vmatpush1.bf16.msra.mxu0 0
        %1948 = vmatprep.subr.bf16.mxu0 0
        %1949 = vmatpush1.bf16.msra.mxu0 0
        %1950 = vmatprep.mubr.bf16.mxu0 0
        %1951 = vmatmul.mubr.bf16.gmra.mrb[0].mxu0 %v1916
        %v1952 = vpop.f32.mrb[0].mxu0
        %v1953 = vadd.f32 0.0, %v1952
        %v1954 = vpop.f32.mrb[0].mxu0
        %v1955 = vpop.f32.mrb[0].mxu0
        %v1956 = vadd.f32 0.0, %v1955
        %v1957 = vpop.f32.mrb[0].mxu0
        %1958 = vdwg.mxu0
        %v1959 = vpack.c.bf16 %v1912, %v1909
        %v1960 = vpack.c.bf16 %v1956, %v1953
        %v1961 = vsel %vm1822, %v1863, 0.0
        %v1962 = vsel %vm1822, %v1864, 0.0
        %v1963 = vadd.f32 %v1961, %v1962
        %v1964 = vrot.slane %v1963, 4
        %v1965 = vadd.f32 %v1963, %v1964
        %v1966 = vrot.slane %v1965, 2
        %v1967 = vadd.f32 %v1965, %v1966
        %v1968 = vrot.slane %v1967, 1
        %v1969 = vadd.f32 %v1967, %v1968
        %v1970 = vsel %vm1822, %v1865, 0.0
        %v1971 = vsel %vm1822, %v1866, 0.0
        %v1972 = vadd.f32 %v1970, %v1971
        %v1973 = vrot.slane %v1972, 4
        %v1974 = vadd.f32 %v1972, %v1973
        %v1975 = vrot.slane %v1974, 2
        %v1976 = vadd.f32 %v1974, %v1975
        %v1977 = vrot.slane %v1976, 1
        %v1978 = vadd.f32 %v1976, %v1977
        %v1979 = vpack.c.bf16 %v1586, %v1582
        %v1980 = vpack.c.bf16 %v1596, %v1592
        %v1981 = vpack.c.bf16 %v1639, %v1635
        %v1982 = vpack.c.bf16 %v1649, %v1645
        %1983 = vmatprep.subr.bf16.mxu0 0
        %1984 = vmatpush1.bf16.xpose.msra.mxu0 %v1981
        %1985 = vmatprep.subr.bf16.mxu0 0
        %1986 = vmatpush1.bf16.xpose.msra.mxu0 0
        %1987 = vmatprep.subr.bf16.mxu0 0
        %1988 = vmatpush1.bf16.xpose.msra.mxu0 0
        %1989 = vmatprep.subr.bf16.mxu0 0
        %1990 = vmatpush1.bf16.xpose.msra.mxu0 0
        %1991 = vmatprep.subr.bf16.mxu0 0
        %1992 = vmatpush1.bf16.xpose.msra.mxu0 0
        %1993 = vmatprep.subr.bf16.mxu0 0
        %1994 = vmatpush1.bf16.xpose.msra.mxu0 0
        %1995 = vmatprep.subr.bf16.mxu0 0
        %1996 = vmatpush1.bf16.xpose.msra.mxu0 0
        %1997 = vmatprep.subr.bf16.mxu0 0
        %1998 = vmatpush1.bf16.xpose.msra.mxu0 0
        %1999 = vmatprep.subr.bf16.mxu0 0
        %2000 = vmatpush1.bf16.xpose.msra.mxu0 0
        %2001 = vmatprep.subr.bf16.mxu0 0
        %2002 = vmatpush1.bf16.xpose.msra.mxu0 0
        %2003 = vmatprep.subr.bf16.mxu0 0
        %2004 = vmatpush1.bf16.xpose.msra.mxu0 0
        %2005 = vmatprep.subr.bf16.mxu0 0
        %2006 = vmatpush1.bf16.xpose.msra.mxu0 0
        %2007 = vmatprep.subr.bf16.mxu0 0
        %2008 = vmatpush1.bf16.xpose.msra.mxu0 0
        %2009 = vmatprep.subr.bf16.mxu0 0
        %2010 = vmatpush1.bf16.xpose.msra.mxu0 0
        %2011 = vmatprep.subr.bf16.mxu0 0
        %2012 = vmatpush1.bf16.xpose.msra.mxu0 0
        %2013 = vmatprep.subr.bf16.mxu0 0
        %2014 = vmatpush1.bf16.xpose.msra.mxu0 0
        %2015 = vmatprep.mubr.bf16.mxu0 0
        %2016 = vmatmul.mubr.bf16.gmra.mrb[0].mxu0 %v1979
        %v2017 = vpop.f32.mrb[0].mxu0
        %v2018 = vadd.f32 0.0, %v2017
        %v2019 = vpop.f32.mrb[0].mxu0
        %v2020 = vpop.f32.mrb[0].mxu0
        %v2021 = vadd.f32 0.0, %v2020
        %v2022 = vpop.f32.mrb[0].mxu0
        %2023 = vdwg.mxu0
        %2024 = vmatprep.subr.bf16.mxu0 0
        %2025 = vmatpush1.bf16.xpose.msra.mxu0 %v1982
        %2026 = vmatprep.subr.bf16.mxu0 0
        %2027 = vmatpush1.bf16.xpose.msra.mxu0 0
        %2028 = vmatprep.subr.bf16.mxu0 0
        %2029 = vmatpush1.bf16.xpose.msra.mxu0 0
        %2030 = vmatprep.subr.bf16.mxu0 0
        %2031 = vmatpush1.bf16.xpose.msra.mxu0 0
        %2032 = vmatprep.subr.bf16.mxu0 0
        %2033 = vmatpush1.bf16.xpose.msra.mxu0 0
        %2034 = vmatprep.subr.bf16.mxu0 0
        %2035 = vmatpush1.bf16.xpose.msra.mxu0 0
        %2036 = vmatprep.subr.bf16.mxu0 0
        %2037 = vmatpush1.bf16.xpose.msra.mxu0 0
        %2038 = vmatprep.subr.bf16.mxu0 0
        %2039 = vmatpush1.bf16.xpose.msra.mxu0 0
        %2040 = vmatprep.subr.bf16.mxu0 0
        %2041 = vmatpush1.bf16.xpose.msra.mxu0 0
        %2042 = vmatprep.subr.bf16.mxu0 0
        %2043 = vmatpush1.bf16.xpose.msra.mxu0 0
        %2044 = vmatprep.subr.bf16.mxu0 0
        %2045 = vmatpush1.bf16.xpose.msra.mxu0 0
        %2046 = vmatprep.subr.bf16.mxu0 0
        %2047 = vmatpush1.bf16.xpose.msra.mxu0 0
        %2048 = vmatprep.subr.bf16.mxu0 0
        %2049 = vmatpush1.bf16.xpose.msra.mxu0 0
        %2050 = vmatprep.subr.bf16.mxu0 0
        %2051 = vmatpush1.bf16.xpose.msra.mxu0 0
        %2052 = vmatprep.subr.bf16.mxu0 0
        %2053 = vmatpush1.bf16.xpose.msra.mxu0 0
        %2054 = vmatprep.subr.bf16.mxu0 0
        %2055 = vmatpush1.bf16.xpose.msra.mxu0 0
        %2056 = vmatprep.mubr.bf16.mxu0 0
        %2057 = vmatmul.mubr.bf16.gmra.mrb[0].mxu0 %v1980
        %v2058 = vpop.f32.mrb[0].mxu0
        %v2059 = vadd.f32 0.0, %v2058
        %v2060 = vpop.f32.mrb[0].mxu0
        %v2061 = vpop.f32.mrb[0].mxu0
        %v2062 = vadd.f32 0.0, %v2061
        %v2063 = vpop.f32.mrb[0].mxu0
        %2064 = vdwg.mxu0
        %v2065 = vsel %vm1822, %v2018, -inf
        %2066 = vmax.xlane.f32.xlu0 %v2065
        %v2067 = vpop.xlane.xlu0 %2066
        %v2068 = vsel %vm1822, %v2021, -inf
        %2069 = vmax.xlane.f32.xlu0 %v2068
        %v2070 = vpop.xlane.xlu0 %2069
        %v2071 = vsel %vm1822, %v2059, -inf
        %2072 = vmax.xlane.f32.xlu0 %v2071
        %v2073 = vpop.xlane.xlu0 %2072
        %v2074 = vsel %vm1822, %v2062, -inf
        %2075 = vmax.xlane.f32.xlu0 %v2074
        %v2076 = vpop.xlane.xlu0 %2075
        %v2077 = vsub.f32 %v2018, %v2067
        %v2078 = vsub.f32 %v2021, %v2070
        %v2079 = vsub.f32 %v2059, %v2073
        %v2080 = vsub.f32 %v2062, %v2076
        %v2081 = vmul.f32 %v2077, 1.442695
        %v2082 = vpow.pop %v2081
        %v2083 = vmul.f32 %v2078, 1.442695
        %v2084 = vpow.pop %v2083
        %v2085 = vmul.f32 %v2079, 1.442695
        %v2086 = vpow.pop %v2085
        %v2087 = vmul.f32 %v2080, 1.442695
        %v2088 = vpow.pop %v2087
        %v2089 = vsel %vm1822, %v2082, 0.0
        %2090 = vadd.xlane.f32.xlu0 %v2089
        %v2091 = vpop.xlane.xlu0 %2090
        %v2092 = vsel %vm1822, %v2084, 0.0
        %2093 = vadd.xlane.f32.xlu0 %v2092
        %v2094 = vpop.xlane.xlu0 %2093
        %v2095 = vsel %vm1822, %v2086, 0.0
        %2096 = vadd.xlane.f32.xlu0 %v2095
        %v2097 = vpop.xlane.xlu0 %2096
        %v2098 = vsel %vm1822, %v2088, 0.0
        %2099 = vadd.xlane.f32.xlu0 %v2098
        %v2100 = vpop.xlane.xlu0 %2099
        %v2101 = vrcp.pop %v2091
        %v2102 = vrcp.pop %v2094
        %v2103 = vrcp.pop %v2097
        %v2104 = vrcp.pop %v2100
        %v2105 = vmul.f32 %v2082, %v2101
        %v2106 = vmul.f32 %v2084, %v2102
        %v2107 = vmul.f32 %v2086, %v2103
        %v2108 = vmul.f32 %v2088, %v2104
        %v2109 = vpack.c.bf16 %v2106, %v2105
        %v2110 = vpack.c.bf16 %v2108, %v2107
        %v2111 = vpack.c.bf16 %v1692, %v1688
        %v2112 = vpack.c.bf16 %v1702, %v1698
        %v2114 = vsel %vm1822, %v2109, 0
        %2116 = vmatprep.subr.bf16.mxu0 0
        %2117 = vmatpush1.bf16.msra.mxu0 %v2111
        %2118 = vmatprep.subr.bf16.mxu0 0
        %2119 = vmatpush1.bf16.msra.mxu0 0
        %2120 = vmatprep.subr.bf16.mxu0 0
        %2121 = vmatpush1.bf16.msra.mxu0 0
        %2122 = vmatprep.subr.bf16.mxu0 0
        %2123 = vmatpush1.bf16.msra.mxu0 0
        %2124 = vmatprep.subr.bf16.mxu0 0
        %2125 = vmatpush1.bf16.msra.mxu0 0
        %2126 = vmatprep.subr.bf16.mxu0 0
        %2127 = vmatpush1.bf16.msra.mxu0 0
        %2128 = vmatprep.subr.bf16.mxu0 0
        %2129 = vmatpush1.bf16.msra.mxu0 0
        %2130 = vmatprep.subr.bf16.mxu0 0
        %2131 = vmatpush1.bf16.msra.mxu0 0
        %2132 = vmatprep.subr.bf16.mxu0 0
        %2133 = vmatpush1.bf16.msra.mxu0 0
        %2134 = vmatprep.subr.bf16.mxu0 0
        %2135 = vmatpush1.bf16.msra.mxu0 0
        %2136 = vmatprep.subr.bf16.mxu0 0
        %2137 = vmatpush1.bf16.msra.mxu0 0
        %2138 = vmatprep.subr.bf16.mxu0 0
        %2139 = vmatpush1.bf16.msra.mxu0 0
        %2140 = vmatprep.subr.bf16.mxu0 0
        %2141 = vmatpush1.bf16.msra.mxu0 0
        %2142 = vmatprep.subr.bf16.mxu0 0
        %2143 = vmatpush1.bf16.msra.mxu0 0
        %2144 = vmatprep.subr.bf16.mxu0 0
        %2145 = vmatpush1.bf16.msra.mxu0 0
        %2146 = vmatprep.subr.bf16.mxu0 0
        %2147 = vmatpush1.bf16.msra.mxu0 0
        %2148 = vmatprep.mubr.bf16.mxu0 0
        %2149 = vmatmul.mubr.bf16.gmra.mrb[0].mxu0 %v2114
        %v2150 = vpop.f32.mrb[0].mxu0
        %v2151 = vadd.f32 0.0, %v2150
        %v2152 = vpop.f32.mrb[0].mxu0
        %v2153 = vpop.f32.mrb[0].mxu0
        %v2154 = vadd.f32 0.0, %v2153
        %v2155 = vpop.f32.mrb[0].mxu0
        %2156 = vdwg.mxu0
        %v2158 = vsel %vm1822, %v2110, 0
        %2160 = vmatprep.subr.bf16.mxu0 0
        %2161 = vmatpush1.bf16.msra.mxu0 %v2112
        %2162 = vmatprep.subr.bf16.mxu0 0
        %2163 = vmatpush1.bf16.msra.mxu0 0
        %2164 = vmatprep.subr.bf16.mxu0 0
        %2165 = vmatpush1.bf16.msra.mxu0 0
        %2166 = vmatprep.subr.bf16.mxu0 0
        %2167 = vmatpush1.bf16.msra.mxu0 0
        %2168 = vmatprep.subr.bf16.mxu0 0
        %2169 = vmatpush1.bf16.msra.mxu0 0
        %2170 = vmatprep.subr.bf16.mxu0 0
        %2171 = vmatpush1.bf16.msra.mxu0 0
        %2172 = vmatprep.subr.bf16.mxu0 0
        %2173 = vmatpush1.bf16.msra.mxu0 0
        %2174 = vmatprep.subr.bf16.mxu0 0
        %2175 = vmatpush1.bf16.msra.mxu0 0
        %2176 = vmatprep.subr.bf16.mxu0 0
        %2177 = vmatpush1.bf16.msra.mxu0 0
        %2178 = vmatprep.subr.bf16.mxu0 0
        %2179 = vmatpush1.bf16.msra.mxu0 0
        %2180 = vmatprep.subr.bf16.mxu0 0
        %2181 = vmatpush1.bf16.msra.mxu0 0
        %2182 = vmatprep.subr.bf16.mxu0 0
        %2183 = vmatpush1.bf16.msra.mxu0 0
        %2184 = vmatprep.subr.bf16.mxu0 0
        %2185 = vmatpush1.bf16.msra.mxu0 0
        %2186 = vmatprep.subr.bf16.mxu0 0
        %2187 = vmatpush1.bf16.msra.mxu0 0
        %2188 = vmatprep.subr.bf16.mxu0 0
        %2189 = vmatpush1.bf16.msra.mxu0 0
        %2190 = vmatprep.subr.bf16.mxu0 0
        %2191 = vmatpush1.bf16.msra.mxu0 0
        %2192 = vmatprep.mubr.bf16.mxu0 0
        %2193 = vmatmul.mubr.bf16.gmra.mrb[0].mxu0 %v2158
        %v2194 = vpop.f32.mrb[0].mxu0
        %v2195 = vadd.f32 0.0, %v2194
        %v2196 = vpop.f32.mrb[0].mxu0
        %v2197 = vpop.f32.mrb[0].mxu0
        %v2198 = vadd.f32 0.0, %v2197
        %v2199 = vpop.f32.mrb[0].mxu0
        %2200 = vdwg.mxu0
        %v2201 = vpack.c.bf16 %v2154, %v2151
        %v2202 = vpack.c.bf16 %v2198, %v2195
        %v2219 = vunpack.c.l.b16 %v1720
        %v2220 = vunpack.c.l.b16 %v1721
        %v2221 = vunpack.c.l.b16 %v1722
        %v2222 = vunpack.c.l.b16 %v1723
        %v2223 = vunpack.c.l.b16 %v1724
        %v2224 = vunpack.c.l.b16 %v1725
        %v2225 = vunpack.c.l.b16 %v1726
        %v2226 = vunpack.c.l.b16 %v1727
        %v2227 = vunpack.c.l.b16 %v1728
        %v2228 = vunpack.c.l.b16 %v1729
        %v2229 = vunpack.c.l.b16 %v1730
        %v2230 = vunpack.c.l.b16 %v1731
        %v2231 = vunpack.c.l.b16 %v1732
        %v2232 = vunpack.c.l.b16 %v1733
        %v2233 = vunpack.c.l.b16 %v1734
        %v2234 = vunpack.c.l.b16 %v1735
        %v2235 = vpack.c.b16 %v2220, %v2219
        %v2236 = vpack.c.b16 %v2222, %v2221
        %v2237 = vpack.c.b16 %v2224, %v2223
        %v2238 = vpack.c.b16 %v2226, %v2225
        %v2239 = vpack.c.b16 %v2228, %v2227
        %v2240 = vpack.c.b16 %v2230, %v2229
        %v2241 = vpack.c.b16 %v2232, %v2231
        %v2242 = vpack.c.b16 %v2234, %v2233
        %2251 = vmatprep.subr.bf16.mxu0 0
        %2252 = vmatpush1.bf16.msra.mxu0 %v2235
        %2253 = vmatprep.subr.bf16.mxu0 0
        %2254 = vmatpush1.bf16.msra.mxu0 %v2236
        %2255 = vmatprep.subr.bf16.mxu0 0
        %2256 = vmatpush1.bf16.msra.mxu0 %v2237
        %2257 = vmatprep.subr.bf16.mxu0 0
        %2258 = vmatpush1.bf16.msra.mxu0 %v2238
        %2259 = vmatprep.subr.bf16.mxu0 0
        %2260 = vmatpush1.bf16.msra.mxu0 %v2239
        %2261 = vmatprep.subr.bf16.mxu0 0
        %2262 = vmatpush1.bf16.msra.mxu0 %v2240
        %2263 = vmatprep.subr.bf16.mxu0 0
        %2264 = vmatpush1.bf16.msra.mxu0 %v2241
        %2265 = vmatprep.subr.bf16.mxu0 0
        %2266 = vmatpush1.bf16.msra.mxu0 %v2242
        %2267 = vmatprep.subr.bf16.mxu0 0
        %2268 = vmatpush1.bf16.msra.mxu0 0
        %2269 = vmatprep.subr.bf16.mxu0 0
        %2270 = vmatpush1.bf16.msra.mxu0 0
        %2271 = vmatprep.subr.bf16.mxu0 0
        %2272 = vmatpush1.bf16.msra.mxu0 0
        %2273 = vmatprep.subr.bf16.mxu0 0
        %2274 = vmatpush1.bf16.msra.mxu0 0
        %2275 = vmatprep.subr.bf16.mxu0 0
        %2276 = vmatpush1.bf16.msra.mxu0 0
        %2277 = vmatprep.subr.bf16.mxu0 0
        %2278 = vmatpush1.bf16.msra.mxu0 0
        %2279 = vmatprep.subr.bf16.mxu0 0
        %2280 = vmatpush1.bf16.msra.mxu0 0
        %2281 = vmatprep.subr.bf16.mxu0 0
        %2282 = vmatpush1.bf16.msra.mxu0 0
        %2283 = vmatprep.mubr.bf16.mxu0 0
        %2284 = vmatmul.mubr.bf16.gmra.mrb[0].mxu0 %v2201
        %v2285 = vpop.f32.mrb[0].mxu0
        %v2286 = vadd.f32 0.0, %v2285
        %v2287 = vpop.f32.mrb[0].mxu0
        %v2288 = vpop.f32.mrb[0].mxu0
        %v2289 = vadd.f32 0.0, %v2288
        %v2290 = vpop.f32.mrb[0].mxu0
        %2291 = vmatprep.mubr.bf16.mxu0 0
        %2292 = vmatmul.mubr.bf16.gmra.mrb[0].mxu0 %v2202
        %v2293 = vpop.f32.mrb[0].mxu0
        %v2294 = vadd.f32 0.0, %v2293
        %v2295 = vpop.f32.mrb[0].mxu0
        %v2296 = vpop.f32.mrb[0].mxu0
        %v2297 = vadd.f32 0.0, %v2296
        %v2298 = vpop.f32.mrb[0].mxu0
        %2299 = vdwg.mxu0
        %v2316 = vunpack.c.l.b16 %v1704
        %v2317 = vunpack.c.l.b16 %v1705
        %v2318 = vunpack.c.l.b16 %v1706
        %v2319 = vunpack.c.l.b16 %v1707
        %v2320 = vunpack.c.l.b16 %v1708
        %v2321 = vunpack.c.l.b16 %v1709
        %v2322 = vunpack.c.l.b16 %v1710
        %v2323 = vunpack.c.l.b16 %v1711
        %v2324 = vunpack.c.l.b16 %v1712
        %v2325 = vunpack.c.l.b16 %v1713
        %v2326 = vunpack.c.l.b16 %v1714
        %v2327 = vunpack.c.l.b16 %v1715
        %v2328 = vunpack.c.l.b16 %v1716
        %v2329 = vunpack.c.l.b16 %v1717
        %v2330 = vunpack.c.l.b16 %v1718
        %v2331 = vunpack.c.l.b16 %v1719
        %v2332 = vpack.c.b16 %v2317, %v2316
        %v2333 = vpack.c.b16 %v2319, %v2318
        %v2334 = vpack.c.b16 %v2321, %v2320
        %v2335 = vpack.c.b16 %v2323, %v2322
        %v2336 = vpack.c.b16 %v2325, %v2324
        %v2337 = vpack.c.b16 %v2327, %v2326
        %v2338 = vpack.c.b16 %v2329, %v2328
        %v2339 = vpack.c.b16 %v2331, %v2330
        %2348 = vmatprep.subr.bf16.mxu0 0
        %2349 = vmatpush1.bf16.msra.mxu0 %v2332
        %2350 = vmatprep.subr.bf16.mxu0 0
        %2351 = vmatpush1.bf16.msra.mxu0 %v2333
        %2352 = vmatprep.subr.bf16.mxu0 0
        %2353 = vmatpush1.bf16.msra.mxu0 %v2334
        %2354 = vmatprep.subr.bf16.mxu0 0
        %2355 = vmatpush1.bf16.msra.mxu0 %v2335
        %2356 = vmatprep.subr.bf16.mxu0 0
        %2357 = vmatpush1.bf16.msra.mxu0 %v2336
        %2358 = vmatprep.subr.bf16.mxu0 0
        %2359 = vmatpush1.bf16.msra.mxu0 %v2337
        %2360 = vmatprep.subr.bf16.mxu0 0
        %2361 = vmatpush1.bf16.msra.mxu0 %v2338
        %2362 = vmatprep.subr.bf16.mxu0 0
        %2363 = vmatpush1.bf16.msra.mxu0 %v2339
        %2364 = vmatprep.subr.bf16.mxu0 0
        %2365 = vmatpush1.bf16.msra.mxu0 0
        %2366 = vmatprep.subr.bf16.mxu0 0
        %2367 = vmatpush1.bf16.msra.mxu0 0
        %2368 = vmatprep.subr.bf16.mxu0 0
        %2369 = vmatpush1.bf16.msra.mxu0 0
        %2370 = vmatprep.subr.bf16.mxu0 0
        %2371 = vmatpush1.bf16.msra.mxu0 0
        %2372 = vmatprep.subr.bf16.mxu0 0
        %2373 = vmatpush1.bf16.msra.mxu0 0
        %2374 = vmatprep.subr.bf16.mxu0 0
        %2375 = vmatpush1.bf16.msra.mxu0 0
        %2376 = vmatprep.subr.bf16.mxu0 0
        %2377 = vmatpush1.bf16.msra.mxu0 0
        %2378 = vmatprep.subr.bf16.mxu0 0
        %2379 = vmatpush1.bf16.msra.mxu0 0
        %2380 = vmatprep.mubr.bf16.mxu0 0
        %2381 = vmatmul.mubr.bf16.gmra.mrb[0].mxu0 %v1959
        %v2382 = vpop.f32.mrb[0].mxu0
        %v2383 = vadd.f32 %v2286, %v2382
        %v2384 = vpop.f32.mrb[0].mxu0
        %v2385 = vpop.f32.mrb[0].mxu0
        %v2386 = vadd.f32 %v2289, %v2385
        %v2387 = vpop.f32.mrb[0].mxu0
        %2388 = vmatprep.mubr.bf16.mxu0 0
        %2389 = vmatmul.mubr.bf16.gmra.mrb[0].mxu0 %v1960
        %v2390 = vpop.f32.mrb[0].mxu0
        %v2391 = vadd.f32 %v2294, %v2390
        %v2392 = vpop.f32.mrb[0].mxu0
        %v2393 = vpop.f32.mrb[0].mxu0
        %v2394 = vadd.f32 %v2297, %v2393
        %v2395 = vpop.f32.mrb[0].mxu0
        %2396 = vdwg.mxu0
        %v2397 = vsel %vm1822, %v2105, 0.0
        %v2398 = vsel %vm1822, %v2106, 0.0
        %v2399 = vadd.f32 %v2397, %v2398
        %v2400 = vrot.slane %v2399, 4
        %v2401 = vadd.f32 %v2399, %v2400
        %v2402 = vrot.slane %v2401, 2
        %v2403 = vadd.f32 %v2401, %v2402
        %v2404 = vrot.slane %v2403, 1
        %v2405 = vadd.f32 %v2403, %v2404
        %v2406 = vsel %vm1822, %v2107, 0.0
        %v2407 = vsel %vm1822, %v2108, 0.0
        %v2408 = vadd.f32 %v2406, %v2407
        %v2409 = vrot.slane %v2408, 4
        %v2410 = vadd.f32 %v2408, %v2409
        %v2411 = vrot.slane %v2410, 2
        %v2412 = vadd.f32 %v2410, %v2411
        %v2413 = vrot.slane %v2412, 1
        %v2414 = vadd.f32 %v2412, %v2413
        %v2415 = vadd.f32 %v1969, %v2405
        %v2416 = vadd.f32 %v1978, %v2414
        %v2417 = vadd.f32 %v1145, %v2383
        %v2418 = vadd.f32 %v1146, %v2386
        %v2419 = vadd.f32 %v1147, %v2391
        %v2420 = vadd.f32 %v1148, %v2394
        %v2421 = vld [vmem:[%s857] sm:$0x1]
        %v2423 = vlaneseq
        %v2424 = vshrl.u32 %v2423, 7
        %v2425 = vsub.s32 0, %v2424
        %v2426 = vrot.slane %v2421, %v2425
        %v2428 = vadd.f32 %v2417, %v2426
        %v2429 = vadd.f32 %v2418, %v2426
        %v2430 = vadd.f32 %v2419, %v2426
        %v2431 = vadd.f32 %v2420, %v2426
        %v2432 = vld [vmem:[%s865] sm:$0x1]
        %v2433 = vld [vmem:[%s873] sm:$0x1]
        %2434 = vadd.xlane.f32.xlu0 %v2428
        %v2435 = vpop.xlane.xlu0 %2434
        %2436 = vadd.xlane.f32.xlu0 %v2429
        %v2437 = vpop.xlane.xlu0 %2436
        %2438 = vadd.xlane.f32.xlu0 %v2430
        %v2439 = vpop.xlane.xlu0 %2438
        %2440 = vadd.xlane.f32.xlu0 %v2431
        %v2441 = vpop.xlane.xlu0 %2440
        %v2442 = vmul.f32 %v2428, %v2428
        %v2443 = vmul.f32 %v2429, %v2429
        %v2444 = vmul.f32 %v2430, %v2430
        %v2445 = vmul.f32 %v2431, %v2431
        %2446 = vadd.xlane.f32.xlu0 %v2442
        %v2447 = vpop.xlane.xlu0 %2446
        %2448 = vadd.xlane.f32.xlu0 %v2443
        %v2449 = vpop.xlane.xlu0 %2448
        %2450 = vadd.xlane.f32.xlu0 %v2444
        %v2451 = vpop.xlane.xlu0 %2450
        %2452 = vadd.xlane.f32.xlu0 %v2445
        %v2453 = vpop.xlane.xlu0 %2452
        %v2454 = vmul.f32 %v2435, 0.03125
        %v2455 = vmul.f32 %v2437, 0.03125
        %v2456 = vmul.f32 %v2439, 0.03125
        %v2457 = vmul.f32 %v2441, 0.03125
        %v2458 = vmul.f32 %v2447, 0.03125
        %v2459 = vmul.f32 %v2449, 0.03125
        %v2460 = vmul.f32 %v2451, 0.03125
        %v2461 = vmul.f32 %v2453, 0.03125
        %v2462 = vmul.f32 %v2454, %v2454
        %v2463 = vmul.f32 %v2455, %v2455
        %v2464 = vmul.f32 %v2456, %v2456
        %v2465 = vmul.f32 %v2457, %v2457
        %v2466 = vsub.f32 %v2458, %v2462
        %v2467 = vsub.f32 %v2459, %v2463
        %v2468 = vsub.f32 %v2460, %v2464
        %v2469 = vsub.f32 %v2461, %v2465
        %v2470 = vsub.f32 %v2428, %v2454
        %v2471 = vsub.f32 %v2429, %v2455
        %v2472 = vsub.f32 %v2430, %v2456
        %v2473 = vsub.f32 %v2431, %v2457
        %v2474 = vadd.f32 %v2466, 1e-05
        %v2475 = vadd.f32 %v2467, 1e-05
        %v2476 = vadd.f32 %v2468, 1e-05
        %v2477 = vadd.f32 %v2469, 1e-05
        %v2478 = vrsqrt.pop %v2474
        %v2479 = vrsqrt.pop %v2475
        %v2480 = vrsqrt.pop %v2476
        %v2481 = vrsqrt.pop %v2477
        %v2482 = vmul.f32 %v2470, %v2478
        %v2483 = vmul.f32 %v2471, %v2479
        %v2484 = vmul.f32 %v2472, %v2480
        %v2485 = vmul.f32 %v2473, %v2481
        %v2487 = vlaneseq
        %v2488 = vshrl.u32 %v2487, 7
        %v2489 = vsub.s32 0, %v2488
        %v2490 = vrot.slane %v2432, %v2489
        %v2492 = vmul.f32 %v2482, %v2490
        %v2493 = vmul.f32 %v2483, %v2490
        %v2494 = vmul.f32 %v2484, %v2490
        %v2495 = vmul.f32 %v2485, %v2490
        %v2497 = vlaneseq
        %v2498 = vshrl.u32 %v2497, 7
        %v2499 = vsub.s32 0, %v2498
        %v2500 = vrot.slane %v2433, %v2499
        %v2502 = vadd.f32 %v2492, %v2500
        %v2503 = vadd.f32 %v2493, %v2500
        %v2504 = vadd.f32 %v2494, %v2500
        %v2505 = vadd.f32 %v2495, %v2500
        %v2506 = vld [vmem:[%s882] sm:$0xf]
        %v2507 = vld [vmem:[%s882 + $0x4] sm:$0xf]
        %v2508 = vld [vmem:[%s882 + $0x8] sm:$0xf]
        %v2509 = vld [vmem:[%s882 + $0xc] sm:$0xf]
        %v2510 = vld [vmem:[%s882 + $0x10] sm:$0xf]
        %v2511 = vld [vmem:[%s882 + $0x14] sm:$0xf]
        %v2512 = vld [vmem:[%s882 + $0x18] sm:$0xf]
        %v2513 = vld [vmem:[%s882 + $0x1c] sm:$0xf]
        %v2514 = vld [vmem:[%s882 + $0x20] sm:$0xf]
        %v2515 = vld [vmem:[%s882 + $0x24] sm:$0xf]
        %v2516 = vld [vmem:[%s882 + $0x28] sm:$0xf]
        %v2517 = vld [vmem:[%s882 + $0x2c] sm:$0xf]
        %v2518 = vld [vmem:[%s882 + $0x30] sm:$0xf]
        %v2519 = vld [vmem:[%s882 + $0x34] sm:$0xf]
        %v2520 = vld [vmem:[%s882 + $0x38] sm:$0xf]
        %v2521 = vld [vmem:[%s882 + $0x3c] sm:$0xf]
        %v2522 = vpack.c.bf16 %v2503, %v2502
        %v2523 = vpack.c.bf16 %v2505, %v2504
        %v2524 = vld [vmem:[%s890] sm:$0x1]
        %v2526 = vlaneseq
        %v2527 = vshrl.u32 %v2526, 7
        %v2528 = vsub.s32 0, %v2527
        %v2529 = vrot.slane %v2524, %v2528
        %v2547 = vunpack.c.l.b16 %v2506
        %v2548 = vunpack.c.l.b16 %v2507
        %v2549 = vunpack.c.l.b16 %v2508
        %v2550 = vunpack.c.l.b16 %v2509
        %v2551 = vunpack.c.l.b16 %v2510
        %v2552 = vunpack.c.l.b16 %v2511
        %v2553 = vunpack.c.l.b16 %v2512
        %v2554 = vunpack.c.l.b16 %v2513
        %v2555 = vunpack.c.l.b16 %v2514
        %v2556 = vunpack.c.l.b16 %v2515
        %v2557 = vunpack.c.l.b16 %v2516
        %v2558 = vunpack.c.l.b16 %v2517
        %v2559 = vunpack.c.l.b16 %v2518
        %v2560 = vunpack.c.l.b16 %v2519
        %v2561 = vunpack.c.l.b16 %v2520
        %v2562 = vunpack.c.l.b16 %v2521
        %v2563 = vpack.c.b16 %v2548, %v2547
        %v2564 = vpack.c.b16 %v2550, %v2549
        %v2565 = vpack.c.b16 %v2552, %v2551
        %v2566 = vpack.c.b16 %v2554, %v2553
        %v2567 = vpack.c.b16 %v2556, %v2555
        %v2568 = vpack.c.b16 %v2558, %v2557
        %v2569 = vpack.c.b16 %v2560, %v2559
        %v2570 = vpack.c.b16 %v2562, %v2561
        %2579 = vmatprep.subr.bf16.mxu0 0
        %2580 = vmatpush1.bf16.msra.mxu0 %v2563
        %2581 = vmatprep.subr.bf16.mxu0 0
        %2582 = vmatpush1.bf16.msra.mxu0 %v2564
        %2583 = vmatprep.subr.bf16.mxu0 0
        %2584 = vmatpush1.bf16.msra.mxu0 %v2565
        %2585 = vmatprep.subr.bf16.mxu0 0
        %2586 = vmatpush1.bf16.msra.mxu0 %v2566
        %2587 = vmatprep.subr.bf16.mxu0 0
        %2588 = vmatpush1.bf16.msra.mxu0 %v2567
        %2589 = vmatprep.subr.bf16.mxu0 0
        %2590 = vmatpush1.bf16.msra.mxu0 %v2568
        %2591 = vmatprep.subr.bf16.mxu0 0
        %2592 = vmatpush1.bf16.msra.mxu0 %v2569
        %2593 = vmatprep.subr.bf16.mxu0 0
        %2594 = vmatpush1.bf16.msra.mxu0 %v2570
        %2595 = vmatprep.subr.bf16.mxu0 0
        %2596 = vmatpush1.bf16.msra.mxu0 0
        %2597 = vmatprep.subr.bf16.mxu0 0
        %2598 = vmatpush1.bf16.msra.mxu0 0
        %2599 = vmatprep.subr.bf16.mxu0 0
        %2600 = vmatpush1.bf16.msra.mxu0 0
        %2601 = vmatprep.subr.bf16.mxu0 0
        %2602 = vmatpush1.bf16.msra.mxu0 0
        %2603 = vmatprep.subr.bf16.mxu0 0
        %2604 = vmatpush1.bf16.msra.mxu0 0
        %2605 = vmatprep.subr.bf16.mxu0 0
        %2606 = vmatpush1.bf16.msra.mxu0 0
        %2607 = vmatprep.subr.bf16.mxu0 0
        %2608 = vmatpush1.bf16.msra.mxu0 0
        %2609 = vmatprep.subr.bf16.mxu0 0
        %2610 = vmatpush1.bf16.msra.mxu0 0
        %2611 = vmatprep.mubr.bf16.mxu0 0
        %2612 = vmatmul.mubr.bf16.gmra.mrb[0].mxu0 %v2522
        %v2613 = vpop.f32.mrb[0].mxu0
        %v2614 = vadd.f32 %v2529, %v2613
        %v2615 = vpop.f32.mrb[0].mxu0
        %v2616 = vpop.f32.mrb[0].mxu0
        %v2617 = vadd.f32 %v2529, %v2616
        %v2618 = vpop.f32.mrb[0].mxu0
        %2619 = vmatprep.mubr.bf16.mxu0 0
        %2620 = vmatmul.mubr.bf16.gmra.mrb[0].mxu0 %v2523
        %v2621 = vpop.f32.mrb[0].mxu0
        %v2622 = vadd.f32 %v2529, %v2621
        %v2623 = vpop.f32.mrb[0].mxu0
        %v2624 = vpop.f32.mrb[0].mxu0
        %v2625 = vadd.f32 %v2529, %v2624
        %v2626 = vpop.f32.mrb[0].mxu0
        %2627 = vdwg.mxu0
        %v2628 = vmul.f32 %v2614, 0.5
        %v2629 = vmul.f32 %v2617, 0.5
        %v2630 = vmul.f32 %v2622, 0.5
        %v2631 = vmul.f32 %v2625, 0.5
        %v2632 = vmul.f32 %v2614, 0.044715
        %v2633 = vmul.f32 %v2617, 0.044715
        %v2634 = vmul.f32 %v2622, 0.044715
        %v2635 = vmul.f32 %v2625, 0.044715
        %v2636 = vmul.f32 %v2632, %v2614
        %v2637 = vmul.f32 %v2633, %v2617
        %v2638 = vmul.f32 %v2634, %v2622
        %v2639 = vmul.f32 %v2635, %v2625
        %v2640 = vmul.f32 %v2636, %v2614
        %v2641 = vmul.f32 %v2637, %v2617
        %v2642 = vmul.f32 %v2638, %v2622
        %v2643 = vmul.f32 %v2639, %v2625
        %v2644 = vadd.f32 %v2614, %v2640
        %v2645 = vadd.f32 %v2617, %v2641
        %v2646 = vadd.f32 %v2622, %v2642
        %v2647 = vadd.f32 %v2625, %v2643
        %v2648 = vmul.f32 %v2644, 0.7978846
        %v2649 = vmul.f32 %v2645, 0.7978846
        %v2650 = vmul.f32 %v2646, 0.7978846
        %v2651 = vmul.f32 %v2647, 0.7978846
        %v2652 = vtanh.pop %v2648
        %v2653 = vtanh.pop %v2649
        %v2654 = vtanh.pop %v2650
        %v2655 = vtanh.pop %v2651
        %v2656 = vadd.f32 %v2652, 1.0
        %v2657 = vadd.f32 %v2653, 1.0
        %v2658 = vadd.f32 %v2654, 1.0
        %v2659 = vadd.f32 %v2655, 1.0
        %v2660 = vmul.f32 %v2628, %v2656
        %v2661 = vmul.f32 %v2629, %v2657
        %v2662 = vmul.f32 %v2630, %v2658
        %v2663 = vmul.f32 %v2631, %v2659
        %v2664 = vld [vmem:[%s899] sm:$0xf]
        %v2665 = vld [vmem:[%s899 + $0x4] sm:$0xf]
        %v2666 = vld [vmem:[%s899 + $0x8] sm:$0xf]
        %v2667 = vld [vmem:[%s899 + $0xc] sm:$0xf]
        %v2668 = vld [vmem:[%s899 + $0x10] sm:$0xf]
        %v2669 = vld [vmem:[%s899 + $0x14] sm:$0xf]
        %v2670 = vld [vmem:[%s899 + $0x18] sm:$0xf]
        %v2671 = vld [vmem:[%s899 + $0x1c] sm:$0xf]
        %v2672 = vld [vmem:[%s899 + $0x20] sm:$0xf]
        %v2673 = vld [vmem:[%s899 + $0x24] sm:$0xf]
        %v2674 = vld [vmem:[%s899 + $0x28] sm:$0xf]
        %v2675 = vld [vmem:[%s899 + $0x2c] sm:$0xf]
        %v2676 = vld [vmem:[%s899 + $0x30] sm:$0xf]
        %v2677 = vld [vmem:[%s899 + $0x34] sm:$0xf]
        %v2678 = vld [vmem:[%s899 + $0x38] sm:$0xf]
        %v2679 = vld [vmem:[%s899 + $0x3c] sm:$0xf]
        %v2680 = vpack.c.bf16 %v2661, %v2660
        %v2681 = vpack.c.bf16 %v2663, %v2662
        %v2698 = vunpack.c.l.b16 %v2664
        %v2699 = vunpack.c.l.b16 %v2665
        %v2700 = vunpack.c.l.b16 %v2666
        %v2701 = vunpack.c.l.b16 %v2667
        %v2702 = vunpack.c.l.b16 %v2668
        %v2703 = vunpack.c.l.b16 %v2669
        %v2704 = vunpack.c.l.b16 %v2670
        %v2705 = vunpack.c.l.b16 %v2671
        %v2706 = vunpack.c.l.b16 %v2672
        %v2707 = vunpack.c.l.b16 %v2673
        %v2708 = vunpack.c.l.b16 %v2674
        %v2709 = vunpack.c.l.b16 %v2675
        %v2710 = vunpack.c.l.b16 %v2676
        %v2711 = vunpack.c.l.b16 %v2677
        %v2712 = vunpack.c.l.b16 %v2678
        %v2713 = vunpack.c.l.b16 %v2679
        %v2714 = vpack.c.b16 %v2699, %v2698
        %v2715 = vpack.c.b16 %v2701, %v2700
        %v2716 = vpack.c.b16 %v2703, %v2702
        %v2717 = vpack.c.b16 %v2705, %v2704
        %v2718 = vpack.c.b16 %v2707, %v2706
        %v2719 = vpack.c.b16 %v2709, %v2708
        %v2720 = vpack.c.b16 %v2711, %v2710
        %v2721 = vpack.c.b16 %v2713, %v2712
        %2730 = vmatprep.subr.bf16.mxu0 0
        %2731 = vmatpush1.bf16.msra.mxu0 %v2714
        %2732 = vmatprep.subr.bf16.mxu0 0
        %2733 = vmatpush1.bf16.msra.mxu0 %v2715
        %2734 = vmatprep.subr.bf16.mxu0 0
        %2735 = vmatpush1.bf16.msra.mxu0 %v2716
        %2736 = vmatprep.subr.bf16.mxu0 0
        %2737 = vmatpush1.bf16.msra.mxu0 %v2717
        %2738 = vmatprep.subr.bf16.mxu0 0
        %2739 = vmatpush1.bf16.msra.mxu0 %v2718
        %2740 = vmatprep.subr.bf16.mxu0 0
        %2741 = vmatpush1.bf16.msra.mxu0 %v2719
        %2742 = vmatprep.subr.bf16.mxu0 0
        %2743 = vmatpush1.bf16.msra.mxu0 %v2720
        %2744 = vmatprep.subr.bf16.mxu0 0
        %2745 = vmatpush1.bf16.msra.mxu0 %v2721
        %2746 = vmatprep.subr.bf16.mxu0 0
        %2747 = vmatpush1.bf16.msra.mxu0 0
        %2748 = vmatprep.subr.bf16.mxu0 0
        %2749 = vmatpush1.bf16.msra.mxu0 0
        %2750 = vmatprep.subr.bf16.mxu0 0
        %2751 = vmatpush1.bf16.msra.mxu0 0
        %2752 = vmatprep.subr.bf16.mxu0 0
        %2753 = vmatpush1.bf16.msra.mxu0 0
        %2754 = vmatprep.subr.bf16.mxu0 0
        %2755 = vmatpush1.bf16.msra.mxu0 0
        %2756 = vmatprep.subr.bf16.mxu0 0
        %2757 = vmatpush1.bf16.msra.mxu0 0
        %2758 = vmatprep.subr.bf16.mxu0 0
        %2759 = vmatpush1.bf16.msra.mxu0 0
        %2760 = vmatprep.subr.bf16.mxu0 0
        %2761 = vmatpush1.bf16.msra.mxu0 0
        %2762 = vmatprep.mubr.bf16.mxu0 0
        %2763 = vmatmul.mubr.bf16.gmra.mrb[0].mxu0 %v2680
        %v2764 = vpop.f32.mrb[0].mxu0
        %v2765 = vadd.f32 0.0, %v2764
        %v2766 = vpop.f32.mrb[0].mxu0
        %v2767 = vpop.f32.mrb[0].mxu0
        %v2768 = vadd.f32 0.0, %v2767
        %v2769 = vpop.f32.mrb[0].mxu0
        %2770 = vmatprep.mubr.bf16.mxu0 0
        %2771 = vmatmul.mubr.bf16.gmra.mrb[0].mxu0 %v2681
        %v2772 = vpop.f32.mrb[0].mxu0
        %v2773 = vadd.f32 0.0, %v2772
        %v2774 = vpop.f32.mrb[0].mxu0
        %v2775 = vpop.f32.mrb[0].mxu0
        %v2776 = vadd.f32 0.0, %v2775
        %v2777 = vpop.f32.mrb[0].mxu0
        %2778 = vdwg.mxu0
        %v2779 = vadd.f32 %v2428, %v2765
        %v2780 = vadd.f32 %v2429, %v2768
        %v2781 = vadd.f32 %v2430, %v2773
        %v2782 = vadd.f32 %v2431, %v2776
        %v2783 = vld [vmem:[%s907] sm:$0x1]
        %v2785 = vlaneseq
        %v2786 = vshrl.u32 %v2785, 7
        %v2787 = vsub.s32 0, %v2786
        %v2788 = vrot.slane %v2783, %v2787
        %v2790 = vadd.f32 %v2779, %v2788
        %v2791 = vadd.f32 %v2780, %v2788
        %v2792 = vadd.f32 %v2781, %v2788
        %v2793 = vadd.f32 %v2782, %v2788
        %2794 = vst [vmem:[#allocation2] sm:$0xff] %v2790
        %2795 = vst [vmem:[#allocation2 + $0x8] sm:$0xff] %v2791
        %2796 = vst [vmem:[#allocation2 + $0x10] sm:$0xff] %v2792
        %2797 = vst [vmem:[#allocation2 + $0x18] sm:$0xff] %v2793
        %p2798 = scmp.eq.s32.totalorder %s39, 1
        // Predicated region
        $region153: #{vit_feature_extractor.1} parent=83 // pred_check
          %p2799 = pneg %p2798
        $region154: #{vit_feature_extractor.1} parent=83 // pred_check_branch
          %2801 = sbr.rel (%p2799) target = $region156
        $region155: #{vit_feature_extractor.1} parent=83 // pred_region
          %v2802 = vpack.c.bf16 %v2791, %v2790
          %v2803 = vpack.c.bf16 %v2793, %v2792
          %v2806 = vunpack.c.l.b16 %v2802
          %v2807 = vunpack.c.h.b16 %v2802
          %v2808 = vunpack.c.l.b16 %v2803
          %v2809 = vunpack.c.h.b16 %v2803
          %v2810 = vpack.c.b16 %v2806, %v2806
          %v2811 = vpack.c.b16 %v2807, %v2807
          %v2812 = vpack.c.b16 %v2808, %v2808
          %v2813 = vpack.c.b16 %v2809, %v2809
          %2818 = vst [vmem:[#allocation23] sm:$0xf] %v2810
          %2819 = vst [vmem:[#allocation23 + $0x4] sm:$0xf] %v2811
          %2820 = vst [vmem:[#allocation23 + $0x8] sm:$0xf] %v2812
          %2821 = vst [vmem:[#allocation23 + $0xc] sm:$0xf] %v2813
          %v2822 = vmul.f32 %v2415, 0.03125
          %v2823 = vmul.f32 %v2416, 0.03125
          %vm2824 = vcmask 122880
          %2825 = vst.msk [vmem:[#allocation24] sm:$0x1] %vm2824, %v2822
          %2826 = vst.msk [vmem:[#allocation24 + $0x1] sm:$0x1] %vm2824, %v2823
        $region156: #{vit_feature_extractor.1} parent=83 // pred_fallthru
          _
        // Predicated region
        $region157: #{vit_feature_extractor.1} parent=83 // pred_check
          %p2827 = pneg %p465
        $region158: #{vit_feature_extractor.1} parent=83 // pred_check_branch
          %2829 = sbr.rel (%p2827) target = $region160
        $region159: #{vit_feature_extractor.1} parent=83 // pred_region
          %s2830 = smul.u32 4, %s38
          %s2832 = ssub.s32 256, 256
          %2833 = vsyncadd [#allocation5], %s2832
          %s2834 = smul.addr %s2830, 64
          %s2835 = scalar_lea.hbm %s16, %s2834
          %s2836 = sshll.u32 [#allocation23], 4
          %s2837 = int_to_ptr.vmem [resolvable:$true] %s2836
          %2842 = dma.vmem_to_hbm [thread:$0]  %s2837, 256, %s2835, [#allocation5], 64, 64, 4
        $region160: #{vit_feature_extractor.1} parent=83 // pred_fallthru
          _
        // Predicated region
        $region161: #{vit_feature_extractor.1} parent=83 // pred_check
          %p2843 = pneg %p491
        $region162: #{vit_feature_extractor.1} parent=83 // pred_check_branch
          %2845 = sbr.rel (%p2843) target = $region164
        $region163: #{vit_feature_extractor.1} parent=83 // pred_region
          %s2846 = smul.u32 2, %s38
          %s2848 = ssub.s32 32, 32
          %2849 = vsyncadd [#allocation25], %s2848
          %s2850 = smul.addr %s2846, 16
          %s2851 = scalar_lea.hbm %s17, %s2850
          %s2852 = sshll.u32 [#allocation24], 4
          %s2853 = int_to_ptr.vmem [resolvable:$true] %s2852
          %2858 = dma.vmem_to_hbm [thread:$0]  %s2853, 32, %s2851, [#allocation25], 16, 16, 1
        $region164: #{vit_feature_extractor.1} parent=83 // pred_fallthru
          _
        // Predicated region
        $region165: #{vit_feature_extractor.1} parent=83 // pred_check
          %p2859 = pneg %p465
        $region166: #{vit_feature_extractor.1} parent=83 // pred_check_branch
          %2861 = sbr.rel (%p2859) target = $region168
        $region167: #{vit_feature_extractor.1} parent=83 // pred_region
          %2862 = dma.done [#allocation5], 256
        $region168: #{vit_feature_extractor.1} parent=83 // pred_fallthru
          _
        // Predicated region
        $region169: #{vit_feature_extractor.1} parent=83 // pred_check
          %p2863 = pneg %p491
        $region170: #{vit_feature_extractor.1} parent=83 // pred_check_branch
          %2865 = sbr.rel (%p2863) target = $region172
        $region171: #{vit_feature_extractor.1} parent=83 // pred_region
          %2866 = dma.done [#allocation25], 32
        $region172: #{vit_feature_extractor.1} parent=83 // pred_fallthru
          _
      $region84: #{vit_feature_extractor.1} parent=5 // pred_fallthru
        _
      %p2867 = scmp.le.s32.totalorder 2, %s29
      // Predicated region
      $region173: #{vit_feature_extractor.1} parent=5 // pred_check
        %p2868 = pneg %p2867
      $region174: #{vit_feature_extractor.1} parent=5 // pred_check_branch
        %2870 = sbr.rel (%p2868) target = $region176
      $region175: #{vit_feature_extractor.1} parent=5 // pred_region
        %s2871 = ssub.s32 %s29, 2
      $region176: #{vit_feature_extractor.1} parent=5 // pred_fallthru
        _
    $region6: #{vit_feature_extractor.1} parent=1 // loop_footer
      %s33 = sadd.s32 1, %s29
    $region7: #{vit_feature_extractor.1} parent=1 // loop_footer_branch
      %28 = sbr.rel target = $region3
    $region8: #{vit_feature_extractor.1} parent=1 // loop_exit
      _
    %2872 = vsyncpa [#allocation4], 1
    %s2873 = scalar_lea.sflag [#allocation4], 1
    %2874 = vsyncpa %s2873, 1
    %2875 = vsyncpa [#allocation7], 1
    %2876 = vsyncpa [#allocation10], 1
    %2877 = vsyncpa [#allocation5], 1
    %s2878 = scalar_lea.sflag [#allocation5], 1
    %2879 = vsyncpa %s2878, 1
    %2880 = vsyncpa [#allocation25], 1

</llo_original>
